<compile_context>
chip_gen: v6e
topology: v6e:2x2x1
jax: 0.10.0
libtpu: 0.0.40
codegen_flags: <defaults>
</compile_context>

<pallas_src>
import functools

import jax
import jax.numpy as jnp
from jax.experimental import pallas as pl
from jax.experimental.pallas import tpu as pltpu


def _finder_kernel(x_ref, w1_ref, b1_ref, w2_ref, b2_ref, w3_ref, b3_ref, o_ref,
                   *, nb, fast_epilogue):
    # x_ref : (NB, C_in, TN)            activations (f32 or bf16), channels-major
    # w1/w2 : (C_mid, C_in/C_mid) bf16  PyTorch Conv2d (out, in) layout
    # b1/b2 : (C_mid, 1)                f32 (slow path) / bf16 (fast path)
    # w3    : fast: (8, C_mid) bf16     256->1 head, row 0 real, rows 1..7 zero (MXU-aligned)
    #         slow: (C_mid, 1) f32      256->1 head as a VPU column
    # b3    : (1, 1) f32
    # o_ref : (NB, 1, TN) f32
    w1 = w1_ref[...]
    w2 = w2_ref[...]
    w3 = w3_ref[...]
    for b in range(nb):                                            # static unroll, NB <= 8
        y = jnp.maximum(x_ref[b], 0).astype(jnp.bfloat16)          # ReLU (pre) + MXU dtype
        y = jnp.dot(w1, y, preferred_element_type=jnp.float32)     # conv1 on MXU
        if fast_epilogue:
            # v6e/v7x: bf16 VALU/EUP exist -> halve elementwise width; head on the MXU.
            y = jnp.maximum(y.astype(jnp.bfloat16) + b1_ref[...], 0)    # bias + ReLU (bf16)
            y = jnp.dot(w2, y, preferred_element_type=jnp.float32)      # conv2 on MXU
            y = jnp.maximum(y.astype(jnp.bfloat16) + b2_ref[...], 0)    # bias + ReLU (bf16)
            y = 1.0 / (1.0 + jnp.exp(-y))                               # Sigmoid (pre), bf16 EUP
            yh = jnp.dot(w3, y, preferred_element_type=jnp.float32)     # conv3 on MXU, (8, TN)
            y3 = yh[0:1, :] + b3_ref[...]                               # rows 1..7 are zero
        else:
            # v5e and older: MXU-bound, no bf16 VPU/EUP -> f32 epilogue + VPU head.
            y = jnp.maximum(y + b1_ref[...], 0.0)                       # bias + ReLU (f32)
            y = jnp.dot(w2, y.astype(jnp.bfloat16),
                        preferred_element_type=jnp.float32)             # conv2 on MXU
            y = jnp.maximum(y + b2_ref[...], 0.0)                       # bias + ReLU (f32)
            y = pl.reciprocal(1.0 + jnp.exp(-y), approx=True)           # Sigmoid (pre), EUP recip
            y3 = jnp.sum(y * w3, axis=0, keepdims=True) + b3_ref[...]   # conv3 as VPU reduce
        o_ref[b] = jax.nn.sigmoid(y3)                                   # Sigmoid (post), exact f32


def _plan_pixel_tiling(hw):
    """Pick (tn, hw_pad): lane-tile width and (possibly zero-padded) pixel count."""
    for tn in (2048, 1024, 512, 256, 128):
        if hw % tn == 0:
            return tn, hw                       # already tile-aligned, no padding
    # Pad to the largest tile whose padding waste stays <= ~12.5% (or 128 pixels).
    for tn in (2048, 1024, 512, 256, 128):
        hw_pad = -(-hw // tn) * tn
        if hw_pad - hw <= max(hw // 8, 128):
            return tn, hw_pad
    return 128, -(-hw // 128) * 128


def _plan_batch_blocking(n, num_pixel_tiles, tn):
    """Images folded into one grid step (amortize ~0.35us/step on small maps)."""
    candidates = [c for c in (8, 4, 2) if n % c == 0 and c * tn <= 2048]
    for c in candidates:                         # prefer >=2 grid steps (v7x has 2 TCs)
        if (n // c) * num_pixel_tiles >= 2:
            return c
    return candidates[0] if candidates else 1


def _use_fast_epilogue():
    """bf16 epilogue + MXU head on v6e/v7x; f32 epilogue + VPU head on <= v5."""
    try:
        kind = jax.devices()[0].device_kind.lower()
    except Exception:
        return True
    return not any(tag in kind for tag in ("v2", "v3", "v4", "v5"))


@jax.jit
def object_finder_forward(x_nchw, params):
    """x_nchw: (N, C_in, H, W) float32 or bfloat16. Returns (N, 1, H, W) float32.

    Passing bf16 activations straight from the producer halves the dominant HBM
    input stream (the kernel is HBM-input-bound on v6e with f32 input); no
    standalone pre-cast op is inserted when the input is f32.
    """
    w1t, b1, w2t, b2, w3c, b3 = params
    n, c_in, h, w = x_nchw.shape
    c_mid = w1t.shape[0]
    hw = h * w

    tn, hw_pad = _plan_pixel_tiling(hw)
    nb = _plan_batch_blocking(n, hw_pad // tn, tn)
    fast_epilogue = _use_fast_epilogue()

    # Channels-as-contraction view: pure reshape, no HBM transpose. Zero-pad the
    # pixel axis only when H*W is not tile-aligned (keeps stores lane-dense).
    x_flat = x_nchw.reshape(n, c_in, hw)
    if hw_pad != hw:
        x_flat = jnp.pad(x_flat, ((0, 0), (0, 0), (0, hw_pad - hw)))

    # bf16 operands for the MXU; accumulation stays f32 inside the kernel.
    w1_k = w1t.astype(jnp.bfloat16)
    w2_k = w2t.astype(jnp.bfloat16)
    if fast_epilogue:
        b1_k = b1.astype(jnp.bfloat16)
        b2_k = b2.astype(jnp.bfloat16)
        # 256->1 head as an MXU operand: real weights in row 0, rows 1..7 zero so
        # the matmul stays sublane-aligned (cost is identical, no masked path).
        w3_k = jnp.zeros((8, c_mid), jnp.bfloat16).at[0].set(
            w3c[:, 0].astype(jnp.bfloat16))
        w3_spec = pl.BlockSpec((8, c_mid), lambda i, j: (0, 0))
    else:
        b1_k, b2_k = b1, b2
        w3_k = w3c                                   # VPU column for the 256->1 head
        w3_spec = pl.BlockSpec((c_mid, 1), lambda i, j: (0, 0))

    m_pixels = n * hw_pad
    cost = pl.CostEstimate(
        flops=2 * m_pixels * (c_in * c_mid + c_mid * c_mid + c_mid),
        transcendentals=m_pixels * (c_mid + 1),
        bytes_accessed=(m_pixels * c_in * x_flat.dtype.itemsize + m_pixels * 4
                        + (c_mid * c_in + c_mid * c_mid) * 2 + (3 * c_mid + 2) * 4),
    )

    kernel = functools.partial(_finder_kernel, nb=nb, fast_epilogue=fast_epilogue)

    out_flat = pl.pallas_call(
        kernel,
        out_shape=jax.ShapeDtypeStruct((n, 1, hw_pad), jnp.float32),
        grid_spec=pltpu.PrefetchScalarGridSpec(
            num_scalar_prefetch=0,
            grid=(n // nb, hw_pad // tn),
            in_specs=[
                pl.BlockSpec((nb, c_in, tn), lambda i, j: (i, 0, j)),   # x tile(s)
                pl.BlockSpec((c_mid, c_in), lambda i, j: (0, 0)),       # W1 (out, in) bf16
                pl.BlockSpec((c_mid, 1), lambda i, j: (0, 0)),          # b1
                pl.BlockSpec((c_mid, c_mid), lambda i, j: (0, 0)),      # W2 (out, in) bf16
                pl.BlockSpec((c_mid, 1), lambda i, j: (0, 0)),          # b2
                w3_spec,                                                # W3 head
                pl.BlockSpec((1, 1), lambda i, j: (0, 0)),              # b3
            ],
            out_specs=pl.BlockSpec((nb, 1, tn), lambda i, j: (i, 0, j)),
        ),
        compiler_params=pltpu.CompilerParams(
            dimension_semantics=("parallel", "parallel"),
            vmem_limit_bytes=48 * 1024 * 1024,
        ),
        cost_estimate=cost,
    )(x_flat, w1_k, b1_k, w2_k, b2_k, w3_k, b3)

    # (N, 1, HW_pad) -> drop pad tail -> (N, 1, H, W): free reshape, no transpose.
    return out_flat[:, :, :hw].reshape(n, 1, h, w)


def init_params(key, pyramid_feature_size=256, feature_size=256):
    """Deterministic synthetic weights in PyTorch Conv2d (out, in) layout; biases as columns."""
    k1, k2, k3, k4, k5, k6 = jax.random.split(key, 6)
    s1 = 1.0 / jnp.sqrt(pyramid_feature_size)
    s2 = 1.0 / jnp.sqrt(feature_size)
    w1t = jax.random.uniform(k1, (feature_size, pyramid_feature_size), jnp.float32, -s1, s1)
    b1 = jax.random.uniform(k2, (feature_size, 1), jnp.float32, -s1, s1)
    w2t = jax.random.uniform(k3, (feature_size, feature_size), jnp.float32, -s2, s2)
    b2 = jax.random.uniform(k4, (feature_size, 1), jnp.float32, -s2, s2)
    w3c = jax.random.uniform(k5, (feature_size, 1), jnp.float32, -s2, s2)
    b3 = jax.random.uniform(k6, (1, 1), jnp.float32, -s2, s2)
    return (w1t, b1, w2t, b2, w3c, b3)


def reference_forward(x_nchw, params):
    """Plain-JAX f32 reference matching the PyTorch Sequential semantics."""
    w1t, b1, w2t, b2, w3c, b3 = params
    n, c, h, w = x_nchw.shape
    hp = jax.lax.Precision.HIGHEST
    y = jnp.maximum(x_nchw.reshape(n, c, h * w).astype(jnp.float32), 0.0)
    y = jnp.maximum(jnp.einsum("oi,nip->nop", w1t, y, precision=hp) + b1[None], 0.0)
    y = jnp.maximum(y, 0.0)
    y = jnp.maximum(jnp.einsum("oi,nip->nop", w2t, y, precision=hp) + b2[None], 0.0)
    y = jax.nn.sigmoid(y)
    y = jax.nn.sigmoid(jnp.einsum("oi,nip->nop", w3c.T, y, precision=hp) + b3[None])
    return y.reshape(n, 1, h, w)


if __name__ == "__main__":
    key = jax.random.PRNGKey(0)
    kx, kx2, kp = jax.random.split(key, 3)

    C = 256  # module default pyramid_feature_size / feature_size
    params = init_params(kp, pyramid_feature_size=C, feature_size=256)

    # Run A: small, lane-aligned spatial map with f32 activations.
    # Exercises the batch-blocking path (NB=2, one grid step of 2 images).
    N, H, W = 2, 16, 16
    x = jax.random.normal(kx, (N, C, H, W), dtype=jnp.float32)
    out = jax.block_until_ready(object_finder_forward(x, params))
    assert out.shape == (N, 1, H, W), out.shape
    ref = reference_forward(x, params)
    err_a = float(jnp.max(jnp.abs(out - ref)))
    # bf16 MXU operands (+ bf16 epilogue on v6e/v7x) vs f32 reference.
    assert err_a < 2e-2, err_a

    # Run B: bf16 activations straight from the "producer" (halves HBM input
    # traffic) and a non-128-multiple spatial map (25x25 -> padded to 640 px),
    # exercising the padding/tail-drop path with lane-dense 128-wide tiles.
    N2, H2, W2 = 1, 25, 25
    x2 = jax.random.normal(kx2, (N2, C, H2, W2), dtype=jnp.float32).astype(jnp.bfloat16)
    out2 = jax.block_until_ready(object_finder_forward(x2, params))
    assert out2.shape == (N2, 1, H2, W2), out2.shape
    ref2 = reference_forward(x2, params)
    err_b = float(jnp.max(jnp.abs(out2 - ref2)))
    assert err_b < 6e-2, err_b  # extra bf16 input quantization

    print("KERNEL_OK")
</pallas_src>

<mosaic_0001>
module attributes {stable_mosaic.version = 11 : i64} {
  func.func @_finder_kernel(%arg0: i32, %arg1: i32, %arg2: memref<2x256x256xf32, #tpu.memory_space<vmem>>, %arg3: memref<256x256xbf16, #tpu.memory_space<vmem>>, %arg4: memref<256x1xbf16, #tpu.memory_space<vmem>>, %arg5: memref<256x256xbf16, #tpu.memory_space<vmem>>, %arg6: memref<256x1xbf16, #tpu.memory_space<vmem>>, %arg7: memref<8x256xbf16, #tpu.memory_space<vmem>>, %arg8: memref<1x1xf32, #tpu.memory_space<vmem>>, %arg9: memref<2x1x256xf32, #tpu.memory_space<vmem>>) attributes {dimension_semantics = [#tpu.dimension_semantics<parallel>, #tpu.dimension_semantics<parallel>], iteration_bounds = array<i64: 1, 1>, scalar_prefetch = 0 : i64, scratch_operands = 0 : i64, tpu.core_type = #tpu.core_type<tc>, window_params = [{transform_indices = @transform_0, window_bounds = array<i64: 2, 256, 256>}, {pipeline_mode = #tpu.pipeline_mode<synchronous>, transform_indices = @transform_1, window_bounds = array<i64: 256, 256>}, {pipeline_mode = #tpu.pipeline_mode<synchronous>, transform_indices = @transform_2, window_bounds = array<i64: 256, 1>}, {pipeline_mode = #tpu.pipeline_mode<synchronous>, transform_indices = @transform_3, window_bounds = array<i64: 256, 256>}, {pipeline_mode = #tpu.pipeline_mode<synchronous>, transform_indices = @transform_4, window_bounds = array<i64: 256, 1>}, {pipeline_mode = #tpu.pipeline_mode<synchronous>, transform_indices = @transform_5, window_bounds = array<i64: 8, 256>}, {pipeline_mode = #tpu.pipeline_mode<synchronous>, transform_indices = @transform_6, window_bounds = array<i64: 1, 1>}, {transform_indices = @transform_7, window_bounds = array<i64: 2, 1, 256>}]} {
    %c0 = arith.constant 0 : index
    %c0_0 = arith.constant 0 : index
    %0 = vector.load %arg3[%c0, %c0_0] : memref<256x256xbf16, #tpu.memory_space<vmem>>, vector<256x256xbf16>
    %c0_1 = arith.constant 0 : index
    %c0_2 = arith.constant 0 : index
    %1 = vector.load %arg5[%c0_1, %c0_2] : memref<256x256xbf16, #tpu.memory_space<vmem>>, vector<256x256xbf16>
    %c0_3 = arith.constant 0 : index
    %c0_4 = arith.constant 0 : index
    %2 = vector.load %arg7[%c0_3, %c0_4] : memref<8x256xbf16, #tpu.memory_space<vmem>>, vector<8x256xbf16>
    %c0_5 = arith.constant 0 : index
    %c0_6 = arith.constant 0 : index
    %c0_7 = arith.constant 0 : index
    %3 = vector.load %arg2[%c0_5, %c0_6, %c0_7] : memref<2x256x256xf32, #tpu.memory_space<vmem>>, vector<1x256x256xf32>
    %4 = vector.shape_cast %3 : vector<1x256x256xf32> to vector<256x256xf32>
    %cst = arith.constant 0.000000e+00 : f32
    %5 = vector.broadcast %cst : f32 to vector<256x256xf32>
    %6 = arith.maximumf %4, %5 : vector<256x256xf32>
    %7 = arith.truncf %6 : vector<256x256xf32> to vector<256x256xbf16>
    %cst_8 = arith.constant dense<0.000000e+00> : vector<256x256xf32>
    %8 = tpu.matmul %0, %7, %cst_8 {dimension_numbers = #tpu.dot_dimension_numbers<[1], [0], [0], [1], [0, 0, 1, 1], [], []>} : vector<256x256xbf16>, vector<256x256xbf16>, vector<256x256xf32> -> vector<256x256xf32>
    %9 = arith.truncf %8 : vector<256x256xf32> to vector<256x256xbf16>
    %c0_9 = arith.constant 0 : index
    %c0_10 = arith.constant 0 : index
    %10 = vector.load %arg4[%c0_9, %c0_10] : memref<256x1xbf16, #tpu.memory_space<vmem>>, vector<256x1xbf16>
    %11 = vector.broadcast %10 : vector<256x1xbf16> to vector<256x256xbf16>
    %12 = arith.addf %9, %11 : vector<256x256xbf16>
    %cst_11 = arith.constant 0.000000e+00 : bf16
    %13 = vector.broadcast %cst_11 : bf16 to vector<256x256xbf16>
    %14 = arith.maximumf %12, %13 : vector<256x256xbf16>
    %cst_12 = arith.constant dense<0.000000e+00> : vector<256x256xf32>
    %15 = tpu.matmul %1, %14, %cst_12 {dimension_numbers = #tpu.dot_dimension_numbers<[1], [0], [0], [1], [0, 0, 1, 1], [], []>} : vector<256x256xbf16>, vector<256x256xbf16>, vector<256x256xf32> -> vector<256x256xf32>
    %16 = arith.truncf %15 : vector<256x256xf32> to vector<256x256xbf16>
    %c0_13 = arith.constant 0 : index
    %c0_14 = arith.constant 0 : index
    %17 = vector.load %arg6[%c0_13, %c0_14] : memref<256x1xbf16, #tpu.memory_space<vmem>>, vector<256x1xbf16>
    %18 = vector.broadcast %17 : vector<256x1xbf16> to vector<256x256xbf16>
    %19 = arith.addf %16, %18 : vector<256x256xbf16>
    %cst_15 = arith.constant 0.000000e+00 : bf16
    %20 = vector.broadcast %cst_15 : bf16 to vector<256x256xbf16>
    %21 = arith.maximumf %19, %20 : vector<256x256xbf16>
    %cst_16 = arith.constant 0.000000e+00 : bf16
    %22 = vector.broadcast %cst_16 : bf16 to vector<256x256xbf16>
    %23 = arith.subf %22, %21 : vector<256x256xbf16>
    %24 = math.exp %23 : vector<256x256xbf16>
    %cst_17 = arith.constant 1.000000e+00 : bf16
    %25 = vector.broadcast %cst_17 : bf16 to vector<256x256xbf16>
    %26 = arith.addf %25, %24 : vector<256x256xbf16>
    %cst_18 = arith.constant 1.000000e+00 : bf16
    %27 = vector.broadcast %cst_18 : bf16 to vector<256x256xbf16>
    %28 = arith.divf %27, %26 : vector<256x256xbf16>
    %cst_19 = arith.constant dense<0.000000e+00> : vector<8x256xf32>
    %29 = tpu.matmul %2, %28, %cst_19 {dimension_numbers = #tpu.dot_dimension_numbers<[1], [0], [0], [1], [0, 0, 1, 1], [], []>} : vector<8x256xbf16>, vector<256x256xbf16>, vector<8x256xf32> -> vector<8x256xf32>
    %30 = vector.extract_strided_slice %29 {offsets = [0, 0], sizes = [1, 256], strides = [1, 1]} : vector<8x256xf32> to vector<1x256xf32>
    %c0_20 = arith.constant 0 : index
    %c0_21 = arith.constant 0 : index
    %31 = vector.load %arg8[%c0_20, %c0_21] : memref<1x1xf32, #tpu.memory_space<vmem>>, vector<1x1xf32>
    %32 = vector.broadcast %31 : vector<1x1xf32> to vector<1x256xf32>
    %33 = arith.addf %30, %32 : vector<1x256xf32>
    %34 = arith.negf %33 : vector<1x256xf32>
    %35 = math.exp %34 : vector<1x256xf32>
    %cst_22 = arith.constant 1.000000e+00 : f32
    %36 = vector.broadcast %cst_22 : f32 to vector<1x256xf32>
    %37 = arith.addf %36, %35 : vector<1x256xf32>
    %38 = arith.divf %36, %37 : vector<1x256xf32>
    %c0_23 = arith.constant 0 : index
    %c0_24 = arith.constant 0 : index
    %c0_25 = arith.constant 0 : index
    %39 = vector.load %arg9[%c0_23, %c0_24, %c0_25] : memref<2x1x256xf32, #tpu.memory_space<vmem>>, vector<1x1x256xf32>
    %40 = vector.shape_cast %39 : vector<1x1x256xf32> to vector<1x256xf32>
    %41 = vector.shape_cast %38 : vector<1x256xf32> to vector<1x1x256xf32>
    tpu.vector_store %arg9[%c0_23, %c0_24, %c0_25], %41 {strides = array<i32>} : memref<2x1x256xf32, #tpu.memory_space<vmem>>, vector<1x1x256xf32>,
    %c1 = arith.constant 1 : index
    %c0_26 = arith.constant 0 : index
    %c0_27 = arith.constant 0 : index
    %42 = vector.load %arg2[%c1, %c0_26, %c0_27] : memref<2x256x256xf32, #tpu.memory_space<vmem>>, vector<1x256x256xf32>
    %43 = vector.shape_cast %42 : vector<1x256x256xf32> to vector<256x256xf32>
    %cst_28 = arith.constant 0.000000e+00 : f32
    %44 = vector.broadcast %cst_28 : f32 to vector<256x256xf32>
    %45 = arith.maximumf %43, %44 : vector<256x256xf32>
    %46 = arith.truncf %45 : vector<256x256xf32> to vector<256x256xbf16>
    %cst_29 = arith.constant dense<0.000000e+00> : vector<256x256xf32>
    %47 = tpu.matmul %0, %46, %cst_29 {dimension_numbers = #tpu.dot_dimension_numbers<[1], [0], [0], [1], [0, 0, 1, 1], [], []>} : vector<256x256xbf16>, vector<256x256xbf16>, vector<256x256xf32> -> vector<256x256xf32>
    %48 = arith.truncf %47 : vector<256x256xf32> to vector<256x256xbf16>
    %c0_30 = arith.constant 0 : index
    %c0_31 = arith.constant 0 : index
    %49 = vector.load %arg4[%c0_30, %c0_31] : memref<256x1xbf16, #tpu.memory_space<vmem>>, vector<256x1xbf16>
    %50 = vector.broadcast %49 : vector<256x1xbf16> to vector<256x256xbf16>
    %51 = arith.addf %48, %50 : vector<256x256xbf16>
    %cst_32 = arith.constant 0.000000e+00 : bf16
    %52 = vector.broadcast %cst_32 : bf16 to vector<256x256xbf16>
    %53 = arith.maximumf %51, %52 : vector<256x256xbf16>
    %cst_33 = arith.constant dense<0.000000e+00> : vector<256x256xf32>
    %54 = tpu.matmul %1, %53, %cst_33 {dimension_numbers = #tpu.dot_dimension_numbers<[1], [0], [0], [1], [0, 0, 1, 1], [], []>} : vector<256x256xbf16>, vector<256x256xbf16>, vector<256x256xf32> -> vector<256x256xf32>
    %55 = arith.truncf %54 : vector<256x256xf32> to vector<256x256xbf16>
    %c0_34 = arith.constant 0 : index
    %c0_35 = arith.constant 0 : index
    %56 = vector.load %arg6[%c0_34, %c0_35] : memref<256x1xbf16, #tpu.memory_space<vmem>>, vector<256x1xbf16>
    %57 = vector.broadcast %56 : vector<256x1xbf16> to vector<256x256xbf16>
    %58 = arith.addf %55, %57 : vector<256x256xbf16>
    %cst_36 = arith.constant 0.000000e+00 : bf16
    %59 = vector.broadcast %cst_36 : bf16 to vector<256x256xbf16>
    %60 = arith.maximumf %58, %59 : vector<256x256xbf16>
    %cst_37 = arith.constant 0.000000e+00 : bf16
    %61 = vector.broadcast %cst_37 : bf16 to vector<256x256xbf16>
    %62 = arith.subf %61, %60 : vector<256x256xbf16>
    %63 = math.exp %62 : vector<256x256xbf16>
    %cst_38 = arith.constant 1.000000e+00 : bf16
    %64 = vector.broadcast %cst_38 : bf16 to vector<256x256xbf16>
    %65 = arith.addf %64, %63 : vector<256x256xbf16>
    %cst_39 = arith.constant 1.000000e+00 : bf16
    %66 = vector.broadcast %cst_39 : bf16 to vector<256x256xbf16>
    %67 = arith.divf %66, %65 : vector<256x256xbf16>
    %cst_40 = arith.constant dense<0.000000e+00> : vector<8x256xf32>
    %68 = tpu.matmul %2, %67, %cst_40 {dimension_numbers = #tpu.dot_dimension_numbers<[1], [0], [0], [1], [0, 0, 1, 1], [], []>} : vector<8x256xbf16>, vector<256x256xbf16>, vector<8x256xf32> -> vector<8x256xf32>
    %69 = vector.extract_strided_slice %68 {offsets = [0, 0], sizes = [1, 256], strides = [1, 1]} : vector<8x256xf32> to vector<1x256xf32>
    %c0_41 = arith.constant 0 : index
    %c0_42 = arith.constant 0 : index
    %70 = vector.load %arg8[%c0_41, %c0_42] : memref<1x1xf32, #tpu.memory_space<vmem>>, vector<1x1xf32>
    %71 = vector.broadcast %70 : vector<1x1xf32> to vector<1x256xf32>
    %72 = arith.addf %69, %71 : vector<1x256xf32>
    %73 = arith.negf %72 : vector<1x256xf32>
    %74 = math.exp %73 : vector<1x256xf32>
    %cst_43 = arith.constant 1.000000e+00 : f32
    %75 = vector.broadcast %cst_43 : f32 to vector<1x256xf32>
    %76 = arith.addf %75, %74 : vector<1x256xf32>
    %77 = arith.divf %75, %76 : vector<1x256xf32>
    %c1_44 = arith.constant 1 : index
    %c0_45 = arith.constant 0 : index
    %c0_46 = arith.constant 0 : index
    %78 = vector.load %arg9[%c1_44, %c0_45, %c0_46] : memref<2x1x256xf32, #tpu.memory_space<vmem>>, vector<1x1x256xf32>
    %79 = vector.shape_cast %78 : vector<1x1x256xf32> to vector<1x256xf32>
    %80 = vector.shape_cast %77 : vector<1x256xf32> to vector<1x1x256xf32>
    tpu.vector_store %arg9[%c1_44, %c0_45, %c0_46], %80 {strides = array<i32>} : memref<2x1x256xf32, #tpu.memory_space<vmem>>, vector<1x1x256xf32>,
    return
  }
  func.func @transform_0(%arg0: i32, %arg1: i32) -> (i32, i32, i32) {
    %c0_i32 = arith.constant 0 : i32
    %c0_i32_0 = arith.constant 0 : i32
    return %arg0, %c0_i32, %arg1 : i32, i32, i32
  }
  func.func @transform_1(%arg0: i32, %arg1: i32) -> (i32, i32) {
    %c0_i32 = arith.constant 0 : i32
    %c0_i32_0 = arith.constant 0 : i32
    %c0_i32_1 = arith.constant 0 : i32
    return %c0_i32, %c0_i32_0 : i32, i32
  }
  func.func @transform_2(%arg0: i32, %arg1: i32) -> (i32, i32) {
    %c0_i32 = arith.constant 0 : i32
    %c0_i32_0 = arith.constant 0 : i32
    %c0_i32_1 = arith.constant 0 : i32
    return %c0_i32, %c0_i32_0 : i32, i32
  }
  func.func @transform_3(%arg0: i32, %arg1: i32) -> (i32, i32) {
    %c0_i32 = arith.constant 0 : i32
    %c0_i32_0 = arith.constant 0 : i32
    %c0_i32_1 = arith.constant 0 : i32
    return %c0_i32, %c0_i32_0 : i32, i32
  }
  func.func @transform_4(%arg0: i32, %arg1: i32) -> (i32, i32) {
    %c0_i32 = arith.constant 0 : i32
    %c0_i32_0 = arith.constant 0 : i32
    %c0_i32_1 = arith.constant 0 : i32
    return %c0_i32, %c0_i32_0 : i32, i32
  }
  func.func @transform_5(%arg0: i32, %arg1: i32) -> (i32, i32) {
    %c0_i32 = arith.constant 0 : i32
    %c0_i32_0 = arith.constant 0 : i32
    %c0_i32_1 = arith.constant 0 : i32
    return %c0_i32, %c0_i32_0 : i32, i32
  }
  func.func @transform_6(%arg0: i32, %arg1: i32) -> (i32, i32) {
    %c0_i32 = arith.constant 0 : i32
    %c0_i32_0 = arith.constant 0 : i32
    %c0_i32_1 = arith.constant 0 : i32
    return %c0_i32, %c0_i32_0 : i32, i32
  }
  func.func @transform_7(%arg0: i32, %arg1: i32) -> (i32, i32, i32) {
    %c0_i32 = arith.constant 0 : i32
    %c0_i32_0 = arith.constant 0 : i32
    return %arg0, %c0_i32, %arg1 : i32, i32, i32
  }
}

</mosaic_0001>

<llo_original>
// kernel: object_finder_forward.1
$region0: #{object_finder_forward.1}
  #allocation0 [shape = 'u32[]', space=smem, size = 0x4, offset = 0x4, fixed_abs, tag = 'smem constant byte address 0x4 - core index']
  #allocation1 [shape = 'u32[144,128]{1,0:T(1,128)}', space=vmem, size = 0x12000, scoped, tag = 'internal scratch']
  #allocation2 [shape = 'f32[1,1]{1,0:T(1,128)S(1)}', space=vmem, size = 0x200, scoped, tag = 'scoped memory for object_finder_forward.1']
  %s0 = inlined_call_operand.vmem [shape: f32[2,256,256], index: 0, kind: input, shape index: {}]
  %s1 = inlined_call_operand.vmem [shape: bf16[256,256], index: 1, kind: input, shape index: {}]
  %s2 = inlined_call_operand.vmem [shape: bf16[256,1], index: 2, kind: input, shape index: {}]
  %s3 = inlined_call_operand.vmem [shape: bf16[256,256], index: 3, kind: input, shape index: {}]
  %s4 = inlined_call_operand.vmem [shape: bf16[256,1], index: 4, kind: input, shape index: {}]
  %s5 = inlined_call_operand.vmem [shape: bf16[8,256], index: 5, kind: input, shape index: {}]
  %s6 = inlined_call_operand.<no memory space> [shape: f32[1,1], index: 6, kind: input, shape index: {}]
  %s7 = inlined_call_operand.vmem [shape: f32[2,1,256], index: 7, kind: output, shape index: {}]
  %s8 = sld [smem:[#allocation0]]
  $region38: #{object_finder_forward.1} parent=0
    _
  %s10 = ssub.s32 1, %s8
  %s11 = scalar_select 0, %s10, %s8
  %v12 = vstv %s6
  %13 = vst [vmem:[#allocation2] sm:$0x1] %v12
  // Predicated region
  $region2: #{object_finder_forward.1} parent=0 // pred_check
    _
  $region3: #{object_finder_forward.1} parent=0 // pred_check_branch
    %15 = sbr.rel (0) target = $region5
  $region4: #{object_finder_forward.1} parent=0 // pred_region
    _
  $region5: #{object_finder_forward.1} parent=0 // pred_fallthru
    _
  // Predicated region
  $region6: #{object_finder_forward.1} parent=0 // pred_check
    _
  $region7: #{object_finder_forward.1} parent=0 // pred_check_branch
    %17 = sbr.rel (0) target = $region9
  $region8: #{object_finder_forward.1} parent=0 // pred_region
    _
  $region9: #{object_finder_forward.1} parent=0 // pred_fallthru
    _
  // Predicated region
  $region10: #{object_finder_forward.1} parent=0 // pred_check
    _
  $region11: #{object_finder_forward.1} parent=0 // pred_check_branch
    %19 = sbr.rel (0) target = $region13
  $region12: #{object_finder_forward.1} parent=0 // pred_region
    _
  $region13: #{object_finder_forward.1} parent=0 // pred_fallthru
    _
  // Predicated region
  $region14: #{object_finder_forward.1} parent=0 // pred_check
    _
  $region15: #{object_finder_forward.1} parent=0 // pred_check_branch
    %21 = sbr.rel (0) target = $region17
  $region16: #{object_finder_forward.1} parent=0 // pred_region
    _
  $region17: #{object_finder_forward.1} parent=0 // pred_fallthru
    _
  // Predicated region
  $region18: #{object_finder_forward.1} parent=0 // pred_check
    _
  $region19: #{object_finder_forward.1} parent=0 // pred_check_branch
    %23 = sbr.rel (0) target = $region21
  $region20: #{object_finder_forward.1} parent=0 // pred_region
    _
  $region21: #{object_finder_forward.1} parent=0 // pred_fallthru
    _
  // Predicated region
  $region22: #{object_finder_forward.1} parent=0 // pred_check
    _
  $region23: #{object_finder_forward.1} parent=0 // pred_check_branch
    %25 = sbr.rel (0) target = $region25
  $region24: #{object_finder_forward.1} parent=0 // pred_region
    _
  $region25: #{object_finder_forward.1} parent=0 // pred_fallthru
    _
  // Predicated region
  $region26: #{object_finder_forward.1} parent=0 // pred_check
    _
  $region27: #{object_finder_forward.1} parent=0 // pred_check_branch
    %27 = sbr.rel (0) target = $region29
  $region28: #{object_finder_forward.1} parent=0 // pred_region
    _
  $region29: #{object_finder_forward.1} parent=0 // pred_fallthru
    _
  %v30 = vld [vmem:[%s1] sm:$0xff]
  %v31 = vld [vmem:[%s1 + $0x8] sm:$0xff]
  %v32 = vld [vmem:[%s1 + $0x10] sm:$0xff]
  %v33 = vld [vmem:[%s1 + $0x18] sm:$0xff]
  %v34 = vld [vmem:[%s1 + $0x20] sm:$0xff]
  %v35 = vld [vmem:[%s1 + $0x28] sm:$0xff]
  %v36 = vld [vmem:[%s1 + $0x30] sm:$0xff]
  %v37 = vld [vmem:[%s1 + $0x38] sm:$0xff]
  %v38 = vld [vmem:[%s1 + $0x40] sm:$0xff]
  %v39 = vld [vmem:[%s1 + $0x48] sm:$0xff]
  %v40 = vld [vmem:[%s1 + $0x50] sm:$0xff]
  %v41 = vld [vmem:[%s1 + $0x58] sm:$0xff]
  %v42 = vld [vmem:[%s1 + $0x60] sm:$0xff]
  %v43 = vld [vmem:[%s1 + $0x68] sm:$0xff]
  %v44 = vld [vmem:[%s1 + $0x70] sm:$0xff]
  %v45 = vld [vmem:[%s1 + $0x78] sm:$0xff]
  %v46 = vld [vmem:[%s1 + $0x80] sm:$0xff]
  %v47 = vld [vmem:[%s1 + $0x88] sm:$0xff]
  %v48 = vld [vmem:[%s1 + $0x90] sm:$0xff]
  %v49 = vld [vmem:[%s1 + $0x98] sm:$0xff]
  %v50 = vld [vmem:[%s1 + $0xa0] sm:$0xff]
  %v51 = vld [vmem:[%s1 + $0xa8] sm:$0xff]
  %v52 = vld [vmem:[%s1 + $0xb0] sm:$0xff]
  %v53 = vld [vmem:[%s1 + $0xb8] sm:$0xff]
  %v54 = vld [vmem:[%s1 + $0xc0] sm:$0xff]
  %v55 = vld [vmem:[%s1 + $0xc8] sm:$0xff]
  %v56 = vld [vmem:[%s1 + $0xd0] sm:$0xff]
  %v57 = vld [vmem:[%s1 + $0xd8] sm:$0xff]
  %v58 = vld [vmem:[%s1 + $0xe0] sm:$0xff]
  %v59 = vld [vmem:[%s1 + $0xe8] sm:$0xff]
  %v60 = vld [vmem:[%s1 + $0xf0] sm:$0xff]
  %v61 = vld [vmem:[%s1 + $0xf8] sm:$0xff]
  %v62 = vld [vmem:[%s3] sm:$0xff]
  %v63 = vld [vmem:[%s3 + $0x8] sm:$0xff]
  %v64 = vld [vmem:[%s3 + $0x10] sm:$0xff]
  %v65 = vld [vmem:[%s3 + $0x18] sm:$0xff]
  %v66 = vld [vmem:[%s3 + $0x20] sm:$0xff]
  %v67 = vld [vmem:[%s3 + $0x28] sm:$0xff]
  %v68 = vld [vmem:[%s3 + $0x30] sm:$0xff]
  %v69 = vld [vmem:[%s3 + $0x38] sm:$0xff]
  %v70 = vld [vmem:[%s3 + $0x40] sm:$0xff]
  %v71 = vld [vmem:[%s3 + $0x48] sm:$0xff]
  %v72 = vld [vmem:[%s3 + $0x50] sm:$0xff]
  %v73 = vld [vmem:[%s3 + $0x58] sm:$0xff]
  %v74 = vld [vmem:[%s3 + $0x60] sm:$0xff]
  %v75 = vld [vmem:[%s3 + $0x68] sm:$0xff]
  %v76 = vld [vmem:[%s3 + $0x70] sm:$0xff]
  %v77 = vld [vmem:[%s3 + $0x78] sm:$0xff]
  %v78 = vld [vmem:[%s3 + $0x80] sm:$0xff]
  %v79 = vld [vmem:[%s3 + $0x88] sm:$0xff]
  %v80 = vld [vmem:[%s3 + $0x90] sm:$0xff]
  %v81 = vld [vmem:[%s3 + $0x98] sm:$0xff]
  %v82 = vld [vmem:[%s3 + $0xa0] sm:$0xff]
  %v83 = vld [vmem:[%s3 + $0xa8] sm:$0xff]
  %v84 = vld [vmem:[%s3 + $0xb0] sm:$0xff]
  %v85 = vld [vmem:[%s3 + $0xb8] sm:$0xff]
  %v86 = vld [vmem:[%s3 + $0xc0] sm:$0xff]
  %v87 = vld [vmem:[%s3 + $0xc8] sm:$0xff]
  %v88 = vld [vmem:[%s3 + $0xd0] sm:$0xff]
  %v89 = vld [vmem:[%s3 + $0xd8] sm:$0xff]
  %v90 = vld [vmem:[%s3 + $0xe0] sm:$0xff]
  %v91 = vld [vmem:[%s3 + $0xe8] sm:$0xff]
  %v92 = vld [vmem:[%s3 + $0xf0] sm:$0xff]
  %v93 = vld [vmem:[%s3 + $0xf8] sm:$0xff]
  %v94 = vld [vmem:[%s5] sm:$0xff]
  %v95 = vld [vmem:[%s0] sm:$0xff]
  %v96 = vld [vmem:[%s0 + $0x8] sm:$0xff]
  %v97 = vld [vmem:[%s0 + $0x10] sm:$0xff]
  %v98 = vld [vmem:[%s0 + $0x18] sm:$0xff]
  %v99 = vld [vmem:[%s0 + $0x20] sm:$0xff]
  %v100 = vld [vmem:[%s0 + $0x28] sm:$0xff]
  %v101 = vld [vmem:[%s0 + $0x30] sm:$0xff]
  %v102 = vld [vmem:[%s0 + $0x38] sm:$0xff]
  %v103 = vld [vmem:[%s0 + $0x40] sm:$0xff]
  %v104 = vld [vmem:[%s0 + $0x48] sm:$0xff]
  %v105 = vld [vmem:[%s0 + $0x50] sm:$0xff]
  %v106 = vld [vmem:[%s0 + $0x58] sm:$0xff]
  %v107 = vld [vmem:[%s0 + $0x60] sm:$0xff]
  %v108 = vld [vmem:[%s0 + $0x68] sm:$0xff]
  %v109 = vld [vmem:[%s0 + $0x70] sm:$0xff]
  %v110 = vld [vmem:[%s0 + $0x78] sm:$0xff]
  %v111 = vld [vmem:[%s0 + $0x80] sm:$0xff]
  %v112 = vld [vmem:[%s0 + $0x88] sm:$0xff]
  %v113 = vld [vmem:[%s0 + $0x90] sm:$0xff]
  %v114 = vld [vmem:[%s0 + $0x98] sm:$0xff]
  %v115 = vld [vmem:[%s0 + $0xa0] sm:$0xff]
  %v116 = vld [vmem:[%s0 + $0xa8] sm:$0xff]
  %v117 = vld [vmem:[%s0 + $0xb0] sm:$0xff]
  %v118 = vld [vmem:[%s0 + $0xb8] sm:$0xff]
  %v119 = vld [vmem:[%s0 + $0xc0] sm:$0xff]
  %v120 = vld [vmem:[%s0 + $0xc8] sm:$0xff]
  %v121 = vld [vmem:[%s0 + $0xd0] sm:$0xff]
  %v122 = vld [vmem:[%s0 + $0xd8] sm:$0xff]
  %v123 = vld [vmem:[%s0 + $0xe0] sm:$0xff]
  %v124 = vld [vmem:[%s0 + $0xe8] sm:$0xff]
  %v125 = vld [vmem:[%s0 + $0xf0] sm:$0xff]
  %v126 = vld [vmem:[%s0 + $0xf8] sm:$0xff]
  %v127 = vld [vmem:[%s0 + $0x100] sm:$0xff]
  %v128 = vld [vmem:[%s0 + $0x108] sm:$0xff]
  %v129 = vld [vmem:[%s0 + $0x110] sm:$0xff]
  %v130 = vld [vmem:[%s0 + $0x118] sm:$0xff]
  %v131 = vld [vmem:[%s0 + $0x120] sm:$0xff]
  %v132 = vld [vmem:[%s0 + $0x128] sm:$0xff]
  %v133 = vld [vmem:[%s0 + $0x130] sm:$0xff]
  %v134 = vld [vmem:[%s0 + $0x138] sm:$0xff]
  %v135 = vld [vmem:[%s0 + $0x140] sm:$0xff]
  %v136 = vld [vmem:[%s0 + $0x148] sm:$0xff]
  %v137 = vld [vmem:[%s0 + $0x150] sm:$0xff]
  %v138 = vld [vmem:[%s0 + $0x158] sm:$0xff]
  %v139 = vld [vmem:[%s0 + $0x160] sm:$0xff]
  %v140 = vld [vmem:[%s0 + $0x168] sm:$0xff]
  %v141 = vld [vmem:[%s0 + $0x170] sm:$0xff]
  %v142 = vld [vmem:[%s0 + $0x178] sm:$0xff]
  %v143 = vld [vmem:[%s0 + $0x180] sm:$0xff]
  %v144 = vld [vmem:[%s0 + $0x188] sm:$0xff]
  %v145 = vld [vmem:[%s0 + $0x190] sm:$0xff]
  %v146 = vld [vmem:[%s0 + $0x198] sm:$0xff]
  %v147 = vld [vmem:[%s0 + $0x1a0] sm:$0xff]
  %v148 = vld [vmem:[%s0 + $0x1a8] sm:$0xff]
  %v149 = vld [vmem:[%s0 + $0x1b0] sm:$0xff]
  %v150 = vld [vmem:[%s0 + $0x1b8] sm:$0xff]
  %v151 = vld [vmem:[%s0 + $0x1c0] sm:$0xff]
  %v152 = vld [vmem:[%s0 + $0x1c8] sm:$0xff]
  %v153 = vld [vmem:[%s0 + $0x1d0] sm:$0xff]
  %v154 = vld [vmem:[%s0 + $0x1d8] sm:$0xff]
  %v155 = vld [vmem:[%s0 + $0x1e0] sm:$0xff]
  %v156 = vld [vmem:[%s0 + $0x1e8] sm:$0xff]
  %v157 = vld [vmem:[%s0 + $0x1f0] sm:$0xff]
  %v158 = vld [vmem:[%s0 + $0x1f8] sm:$0xff]
  %v159 = vmax.f32 %v95, 0.0
  %v160 = vmax.f32 %v96, 0.0
  %v161 = vmax.f32 %v97, 0.0
  %v162 = vmax.f32 %v98, 0.0
  %v163 = vmax.f32 %v99, 0.0
  %v164 = vmax.f32 %v100, 0.0
  %v165 = vmax.f32 %v101, 0.0
  %v166 = vmax.f32 %v102, 0.0
  %v167 = vmax.f32 %v103, 0.0
  %v168 = vmax.f32 %v104, 0.0
  %v169 = vmax.f32 %v105, 0.0
  %v170 = vmax.f32 %v106, 0.0
  %v171 = vmax.f32 %v107, 0.0
  %v172 = vmax.f32 %v108, 0.0
  %v173 = vmax.f32 %v109, 0.0
  %v174 = vmax.f32 %v110, 0.0
  %v175 = vmax.f32 %v111, 0.0
  %v176 = vmax.f32 %v112, 0.0
  %v177 = vmax.f32 %v113, 0.0
  %v178 = vmax.f32 %v114, 0.0
  %v179 = vmax.f32 %v115, 0.0
  %v180 = vmax.f32 %v116, 0.0
  %v181 = vmax.f32 %v117, 0.0
  %v182 = vmax.f32 %v118, 0.0
  %v183 = vmax.f32 %v119, 0.0
  %v184 = vmax.f32 %v120, 0.0
  %v185 = vmax.f32 %v121, 0.0
  %v186 = vmax.f32 %v122, 0.0
  %v187 = vmax.f32 %v123, 0.0
  %v188 = vmax.f32 %v124, 0.0
  %v189 = vmax.f32 %v125, 0.0
  %v190 = vmax.f32 %v126, 0.0
  %v191 = vmax.f32 %v127, 0.0
  %v192 = vmax.f32 %v128, 0.0
  %v193 = vmax.f32 %v129, 0.0
  %v194 = vmax.f32 %v130, 0.0
  %v195 = vmax.f32 %v131, 0.0
  %v196 = vmax.f32 %v132, 0.0
  %v197 = vmax.f32 %v133, 0.0
  %v198 = vmax.f32 %v134, 0.0
  %v199 = vmax.f32 %v135, 0.0
  %v200 = vmax.f32 %v136, 0.0
  %v201 = vmax.f32 %v137, 0.0
  %v202 = vmax.f32 %v138, 0.0
  %v203 = vmax.f32 %v139, 0.0
  %v204 = vmax.f32 %v140, 0.0
  %v205 = vmax.f32 %v141, 0.0
  %v206 = vmax.f32 %v142, 0.0
  %v207 = vmax.f32 %v143, 0.0
  %v208 = vmax.f32 %v144, 0.0
  %v209 = vmax.f32 %v145, 0.0
  %v210 = vmax.f32 %v146, 0.0
  %v211 = vmax.f32 %v147, 0.0
  %v212 = vmax.f32 %v148, 0.0
  %v213 = vmax.f32 %v149, 0.0
  %v214 = vmax.f32 %v150, 0.0
  %v215 = vmax.f32 %v151, 0.0
  %v216 = vmax.f32 %v152, 0.0
  %v217 = vmax.f32 %v153, 0.0
  %v218 = vmax.f32 %v154, 0.0
  %v219 = vmax.f32 %v155, 0.0
  %v220 = vmax.f32 %v156, 0.0
  %v221 = vmax.f32 %v157, 0.0
  %v222 = vmax.f32 %v158, 0.0
  %v223 = vpack.c.bf16 %v161, %v159
  %v224 = vpack.c.bf16 %v162, %v160
  %v225 = vpack.c.bf16 %v165, %v163
  %v226 = vpack.c.bf16 %v166, %v164
  %v227 = vpack.c.bf16 %v169, %v167
  %v228 = vpack.c.bf16 %v170, %v168
  %v229 = vpack.c.bf16 %v173, %v171
  %v230 = vpack.c.bf16 %v174, %v172
  %v231 = vpack.c.bf16 %v177, %v175
  %v232 = vpack.c.bf16 %v178, %v176
  %v233 = vpack.c.bf16 %v181, %v179
  %v234 = vpack.c.bf16 %v182, %v180
  %v235 = vpack.c.bf16 %v185, %v183
  %v236 = vpack.c.bf16 %v186, %v184
  %v237 = vpack.c.bf16 %v189, %v187
  %v238 = vpack.c.bf16 %v190, %v188
  %v239 = vpack.c.bf16 %v193, %v191
  %v240 = vpack.c.bf16 %v194, %v192
  %v241 = vpack.c.bf16 %v197, %v195
  %v242 = vpack.c.bf16 %v198, %v196
  %v243 = vpack.c.bf16 %v201, %v199
  %v244 = vpack.c.bf16 %v202, %v200
  %v245 = vpack.c.bf16 %v205, %v203
  %v246 = vpack.c.bf16 %v206, %v204
  %v247 = vpack.c.bf16 %v209, %v207
  %v248 = vpack.c.bf16 %v210, %v208
  %v249 = vpack.c.bf16 %v213, %v211
  %v250 = vpack.c.bf16 %v214, %v212
  %v251 = vpack.c.bf16 %v217, %v215
  %v252 = vpack.c.bf16 %v218, %v216
  %v253 = vpack.c.bf16 %v221, %v219
  %v254 = vpack.c.bf16 %v222, %v220
  %v287 = vunpack.c.l.b16 %v30
  %v288 = vunpack.c.h.b16 %v30
  %v289 = vunpack.c.l.b16 %v31
  %v290 = vunpack.c.h.b16 %v31
  %v291 = vunpack.c.l.b16 %v32
  %v292 = vunpack.c.h.b16 %v32
  %v293 = vunpack.c.l.b16 %v33
  %v294 = vunpack.c.h.b16 %v33
  %v295 = vunpack.c.l.b16 %v34
  %v296 = vunpack.c.h.b16 %v34
  %v297 = vunpack.c.l.b16 %v35
  %v298 = vunpack.c.h.b16 %v35
  %v299 = vunpack.c.l.b16 %v36
  %v300 = vunpack.c.h.b16 %v36
  %v301 = vunpack.c.l.b16 %v37
  %v302 = vunpack.c.h.b16 %v37
  %v303 = vunpack.c.l.b16 %v38
  %v304 = vunpack.c.h.b16 %v38
  %v305 = vunpack.c.l.b16 %v39
  %v306 = vunpack.c.h.b16 %v39
  %v307 = vunpack.c.l.b16 %v40
  %v308 = vunpack.c.h.b16 %v40
  %v309 = vunpack.c.l.b16 %v41
  %v310 = vunpack.c.h.b16 %v41
  %v311 = vunpack.c.l.b16 %v42
  %v312 = vunpack.c.h.b16 %v42
  %v313 = vunpack.c.l.b16 %v43
  %v314 = vunpack.c.h.b16 %v43
  %v315 = vunpack.c.l.b16 %v44
  %v316 = vunpack.c.h.b16 %v44
  %v317 = vunpack.c.l.b16 %v45
  %v318 = vunpack.c.h.b16 %v45
  %v319 = vunpack.c.l.b16 %v46
  %v320 = vunpack.c.h.b16 %v46
  %v321 = vunpack.c.l.b16 %v47
  %v322 = vunpack.c.h.b16 %v47
  %v323 = vunpack.c.l.b16 %v48
  %v324 = vunpack.c.h.b16 %v48
  %v325 = vunpack.c.l.b16 %v49
  %v326 = vunpack.c.h.b16 %v49
  %v327 = vunpack.c.l.b16 %v50
  %v328 = vunpack.c.h.b16 %v50
  %v329 = vunpack.c.l.b16 %v51
  %v330 = vunpack.c.h.b16 %v51
  %v331 = vunpack.c.l.b16 %v52
  %v332 = vunpack.c.h.b16 %v52
  %v333 = vunpack.c.l.b16 %v53
  %v334 = vunpack.c.h.b16 %v53
  %v335 = vunpack.c.l.b16 %v54
  %v336 = vunpack.c.h.b16 %v54
  %v337 = vunpack.c.l.b16 %v55
  %v338 = vunpack.c.h.b16 %v55
  %v339 = vunpack.c.l.b16 %v56
  %v340 = vunpack.c.h.b16 %v56
  %v341 = vunpack.c.l.b16 %v57
  %v342 = vunpack.c.h.b16 %v57
  %v343 = vunpack.c.l.b16 %v58
  %v344 = vunpack.c.h.b16 %v58
  %v345 = vunpack.c.l.b16 %v59
  %v346 = vunpack.c.h.b16 %v59
  %v347 = vunpack.c.l.b16 %v60
  %v348 = vunpack.c.h.b16 %v60
  %v349 = vunpack.c.l.b16 %v61
  %v350 = vunpack.c.h.b16 %v61
  %v351 = vpack.c.b16 %v289, %v287
  %v352 = vpack.c.b16 %v290, %v288
  %v353 = vpack.c.b16 %v293, %v291
  %v354 = vpack.c.b16 %v294, %v292
  %v355 = vpack.c.b16 %v297, %v295
  %v356 = vpack.c.b16 %v298, %v296
  %v357 = vpack.c.b16 %v301, %v299
  %v358 = vpack.c.b16 %v302, %v300
  %v359 = vpack.c.b16 %v305, %v303
  %v360 = vpack.c.b16 %v306, %v304
  %v361 = vpack.c.b16 %v309, %v307
  %v362 = vpack.c.b16 %v310, %v308
  %v363 = vpack.c.b16 %v313, %v311
  %v364 = vpack.c.b16 %v314, %v312
  %v365 = vpack.c.b16 %v317, %v315
  %v366 = vpack.c.b16 %v318, %v316
  %v367 = vpack.c.b16 %v321, %v319
  %v368 = vpack.c.b16 %v322, %v320
  %v369 = vpack.c.b16 %v325, %v323
  %v370 = vpack.c.b16 %v326, %v324
  %v371 = vpack.c.b16 %v329, %v327
  %v372 = vpack.c.b16 %v330, %v328
  %v373 = vpack.c.b16 %v333, %v331
  %v374 = vpack.c.b16 %v334, %v332
  %v375 = vpack.c.b16 %v337, %v335
  %v376 = vpack.c.b16 %v338, %v336
  %v377 = vpack.c.b16 %v341, %v339
  %v378 = vpack.c.b16 %v342, %v340
  %v379 = vpack.c.b16 %v345, %v343
  %v380 = vpack.c.b16 %v346, %v344
  %v381 = vpack.c.b16 %v349, %v347
  %v382 = vpack.c.b16 %v350, %v348
  %415 = vmatprep.subr.bf16.mxu0 %v238
  %416 = vmatpush1.bf16.msra.mxu0 %v237
  %417 = vmatprep.subr.bf16.mxu0 %v236
  %418 = vmatpush1.bf16.msra.mxu0 %v235
  %419 = vmatprep.subr.bf16.mxu0 %v234
  %420 = vmatpush1.bf16.msra.mxu0 %v233
  %421 = vmatprep.subr.bf16.mxu0 %v232
  %422 = vmatpush1.bf16.msra.mxu0 %v231
  %423 = vmatprep.subr.bf16.mxu0 %v230
  %424 = vmatpush1.bf16.msra.mxu0 %v229
  %425 = vmatprep.subr.bf16.mxu0 %v228
  %426 = vmatpush1.bf16.msra.mxu0 %v227
  %427 = vmatprep.subr.bf16.mxu0 %v226
  %428 = vmatpush1.bf16.msra.mxu0 %v225
  %429 = vmatprep.subr.bf16.mxu0 %v224
  %430 = vmatpush1.bf16.msra.mxu0 %v223
  %431 = vmatprep.subr.bf16.mxu0 %v254
  %432 = vmatpush2.bf16.msra.mxu0 %v253
  %433 = vmatprep.subr.bf16.mxu0 %v252
  %434 = vmatpush2.bf16.msra.mxu0 %v251
  %435 = vmatprep.subr.bf16.mxu0 %v250
  %436 = vmatpush2.bf16.msra.mxu0 %v249
  %437 = vmatprep.subr.bf16.mxu0 %v248
  %438 = vmatpush2.bf16.msra.mxu0 %v247
  %439 = vmatprep.subr.bf16.mxu0 %v246
  %440 = vmatpush2.bf16.msra.mxu0 %v245
  %441 = vmatprep.subr.bf16.mxu0 %v244
  %442 = vmatpush2.bf16.msra.mxu0 %v243
  %443 = vmatprep.subr.bf16.mxu0 %v242
  %444 = vmatpush2.bf16.msra.mxu0 %v241
  %445 = vmatprep.subr.bf16.mxu0 %v240
  %446 = vmatpush2.bf16.msra.mxu0 %v239
  %447 = vmatprep.mubr.bf16.mxu0 %v352
  %448 = vmatmul.mubr.bf16.gmra.mxu0 %v351
  %v449 = vpop.f32.mrf.mxu0
  %v450 = vadd.f32 0.0, %v449
  %v451 = vpop.f32.mrf.mxu0
  %v452 = vadd.f32 0.0, %v451
  %v453 = vpop.f32.mrf.mxu0
  %v454 = vadd.f32 0.0, %v453
  %v455 = vpop.f32.mrf.mxu0
  %v456 = vadd.f32 0.0, %v455
  %457 = vmatprep.mubr.bf16.mxu0 %v354
  %458 = vmatmul.mubr.bf16.gmra.mxu0 %v353
  %v459 = vpop.f32.mrf.mxu0
  %v460 = vadd.f32 0.0, %v459
  %v461 = vpop.f32.mrf.mxu0
  %v462 = vadd.f32 0.0, %v461
  %v463 = vpop.f32.mrf.mxu0
  %v464 = vadd.f32 0.0, %v463
  %v465 = vpop.f32.mrf.mxu0
  %v466 = vadd.f32 0.0, %v465
  %467 = vmatprep.mubr.bf16.mxu0 %v356
  %468 = vmatmul.mubr.bf16.gmra.mxu0 %v355
  %v469 = vpop.f32.mrf.mxu0
  %v470 = vadd.f32 0.0, %v469
  %v471 = vpop.f32.mrf.mxu0
  %v472 = vadd.f32 0.0, %v471
  %v473 = vpop.f32.mrf.mxu0
  %v474 = vadd.f32 0.0, %v473
  %v475 = vpop.f32.mrf.mxu0
  %v476 = vadd.f32 0.0, %v475
  %477 = vmatprep.mubr.bf16.mxu0 %v358
  %478 = vmatmul.mubr.bf16.gmra.mxu0 %v357
  %v479 = vpop.f32.mrf.mxu0
  %v480 = vadd.f32 0.0, %v479
  %v481 = vpop.f32.mrf.mxu0
  %v482 = vadd.f32 0.0, %v481
  %v483 = vpop.f32.mrf.mxu0
  %v484 = vadd.f32 0.0, %v483
  %v485 = vpop.f32.mrf.mxu0
  %v486 = vadd.f32 0.0, %v485
  %487 = vmatprep.mubr.bf16.mxu0 %v360
  %488 = vmatmul.mubr.bf16.gmra.mxu0 %v359
  %v489 = vpop.f32.mrf.mxu0
  %v490 = vadd.f32 0.0, %v489
  %v491 = vpop.f32.mrf.mxu0
  %v492 = vadd.f32 0.0, %v491
  %v493 = vpop.f32.mrf.mxu0
  %v494 = vadd.f32 0.0, %v493
  %v495 = vpop.f32.mrf.mxu0
  %v496 = vadd.f32 0.0, %v495
  %497 = vmatprep.mubr.bf16.mxu0 %v362
  %498 = vmatmul.mubr.bf16.gmra.mxu0 %v361
  %v499 = vpop.f32.mrf.mxu0
  %v500 = vadd.f32 0.0, %v499
  %v501 = vpop.f32.mrf.mxu0
  %v502 = vadd.f32 0.0, %v501
  %v503 = vpop.f32.mrf.mxu0
  %v504 = vadd.f32 0.0, %v503
  %v505 = vpop.f32.mrf.mxu0
  %v506 = vadd.f32 0.0, %v505
  %507 = vmatprep.mubr.bf16.mxu0 %v364
  %508 = vmatmul.mubr.bf16.gmra.mxu0 %v363
  %v509 = vpop.f32.mrf.mxu0
  %v510 = vadd.f32 0.0, %v509
  %v511 = vpop.f32.mrf.mxu0
  %v512 = vadd.f32 0.0, %v511
  %v513 = vpop.f32.mrf.mxu0
  %v514 = vadd.f32 0.0, %v513
  %v515 = vpop.f32.mrf.mxu0
  %v516 = vadd.f32 0.0, %v515
  %517 = vmatprep.mubr.bf16.mxu0 %v366
  %518 = vmatmul.mubr.bf16.gmra.mxu0 %v365
  %v519 = vpop.f32.mrf.mxu0
  %v520 = vadd.f32 0.0, %v519
  %v521 = vpop.f32.mrf.mxu0
  %v522 = vadd.f32 0.0, %v521
  %v523 = vpop.f32.mrf.mxu0
  %v524 = vadd.f32 0.0, %v523
  %v525 = vpop.f32.mrf.mxu0
  %v526 = vadd.f32 0.0, %v525
  %527 = vmatprep.mubr.bf16.mxu0 %v368
  %528 = vmatmul.mubr.bf16.gmra.mxu0 %v367
  %v529 = vpop.f32.mrf.mxu0
  %v530 = vadd.f32 0.0, %v529
  %v531 = vpop.f32.mrf.mxu0
  %v532 = vadd.f32 0.0, %v531
  %v533 = vpop.f32.mrf.mxu0
  %v534 = vadd.f32 0.0, %v533
  %v535 = vpop.f32.mrf.mxu0
  %v536 = vadd.f32 0.0, %v535
  %537 = vmatprep.mubr.bf16.mxu0 %v370
  %538 = vmatmul.mubr.bf16.gmra.mxu0 %v369
  %v539 = vpop.f32.mrf.mxu0
  %v540 = vadd.f32 0.0, %v539
  %v541 = vpop.f32.mrf.mxu0
  %v542 = vadd.f32 0.0, %v541
  %v543 = vpop.f32.mrf.mxu0
  %v544 = vadd.f32 0.0, %v543
  %v545 = vpop.f32.mrf.mxu0
  %v546 = vadd.f32 0.0, %v545
  %547 = vmatprep.mubr.bf16.mxu0 %v372
  %548 = vmatmul.mubr.bf16.gmra.mxu0 %v371
  %v549 = vpop.f32.mrf.mxu0
  %v550 = vadd.f32 0.0, %v549
  %v551 = vpop.f32.mrf.mxu0
  %v552 = vadd.f32 0.0, %v551
  %v553 = vpop.f32.mrf.mxu0
  %v554 = vadd.f32 0.0, %v553
  %v555 = vpop.f32.mrf.mxu0
  %v556 = vadd.f32 0.0, %v555
  %557 = vmatprep.mubr.bf16.mxu0 %v374
  %558 = vmatmul.mubr.bf16.gmra.mxu0 %v373
  %v559 = vpop.f32.mrf.mxu0
  %v560 = vadd.f32 0.0, %v559
  %v561 = vpop.f32.mrf.mxu0
  %v562 = vadd.f32 0.0, %v561
  %v563 = vpop.f32.mrf.mxu0
  %v564 = vadd.f32 0.0, %v563
  %v565 = vpop.f32.mrf.mxu0
  %v566 = vadd.f32 0.0, %v565
  %567 = vmatprep.mubr.bf16.mxu0 %v376
  %568 = vmatmul.mubr.bf16.gmra.mxu0 %v375
  %v569 = vpop.f32.mrf.mxu0
  %v570 = vadd.f32 0.0, %v569
  %v571 = vpop.f32.mrf.mxu0
  %v572 = vadd.f32 0.0, %v571
  %v573 = vpop.f32.mrf.mxu0
  %v574 = vadd.f32 0.0, %v573
  %v575 = vpop.f32.mrf.mxu0
  %v576 = vadd.f32 0.0, %v575
  %577 = vmatprep.mubr.bf16.mxu0 %v378
  %578 = vmatmul.mubr.bf16.gmra.mxu0 %v377
  %v579 = vpop.f32.mrf.mxu0
  %v580 = vadd.f32 0.0, %v579
  %v581 = vpop.f32.mrf.mxu0
  %v582 = vadd.f32 0.0, %v581
  %v583 = vpop.f32.mrf.mxu0
  %v584 = vadd.f32 0.0, %v583
  %v585 = vpop.f32.mrf.mxu0
  %v586 = vadd.f32 0.0, %v585
  %587 = vmatprep.mubr.bf16.mxu0 %v380
  %588 = vmatmul.mubr.bf16.gmra.mxu0 %v379
  %v589 = vpop.f32.mrf.mxu0
  %v590 = vadd.f32 0.0, %v589
  %v591 = vpop.f32.mrf.mxu0
  %v592 = vadd.f32 0.0, %v591
  %v593 = vpop.f32.mrf.mxu0
  %v594 = vadd.f32 0.0, %v593
  %v595 = vpop.f32.mrf.mxu0
  %v596 = vadd.f32 0.0, %v595
  %597 = vmatprep.mubr.bf16.mxu0 %v382
  %598 = vmatmul.mubr.bf16.gmra.mxu0 %v381
  %v599 = vpop.f32.mrf.mxu0
  %v600 = vadd.f32 0.0, %v599
  %v601 = vpop.f32.mrf.mxu0
  %v602 = vadd.f32 0.0, %v601
  %v603 = vpop.f32.mrf.mxu0
  %v604 = vadd.f32 0.0, %v603
  %v605 = vpop.f32.mrf.mxu0
  %v606 = vadd.f32 0.0, %v605
  %607 = vdwg.mxu0
  %v608 = vpack.c.bf16 %v454, %v450
  %v609 = vpack.c.bf16 %v456, %v452
  %v610 = vpack.c.bf16 %v464, %v460
  %v611 = vpack.c.bf16 %v466, %v462
  %v612 = vpack.c.bf16 %v474, %v470
  %v613 = vpack.c.bf16 %v476, %v472
  %v614 = vpack.c.bf16 %v484, %v480
  %v615 = vpack.c.bf16 %v486, %v482
  %v616 = vpack.c.bf16 %v494, %v490
  %v617 = vpack.c.bf16 %v496, %v492
  %v618 = vpack.c.bf16 %v504, %v500
  %v619 = vpack.c.bf16 %v506, %v502
  %v620 = vpack.c.bf16 %v514, %v510
  %v621 = vpack.c.bf16 %v516, %v512
  %v622 = vpack.c.bf16 %v524, %v520
  %v623 = vpack.c.bf16 %v526, %v522
  %v624 = vpack.c.bf16 %v534, %v530
  %v625 = vpack.c.bf16 %v536, %v532
  %v626 = vpack.c.bf16 %v544, %v540
  %v627 = vpack.c.bf16 %v546, %v542
  %v628 = vpack.c.bf16 %v554, %v550
  %v629 = vpack.c.bf16 %v556, %v552
  %v630 = vpack.c.bf16 %v564, %v560
  %v631 = vpack.c.bf16 %v566, %v562
  %v632 = vpack.c.bf16 %v574, %v570
  %v633 = vpack.c.bf16 %v576, %v572
  %v634 = vpack.c.bf16 %v584, %v580
  %v635 = vpack.c.bf16 %v586, %v582
  %v636 = vpack.c.bf16 %v594, %v590
  %v637 = vpack.c.bf16 %v596, %v592
  %v638 = vpack.c.bf16 %v604, %v600
  %v639 = vpack.c.bf16 %v606, %v602
  %v640 = vld [vmem:[%s2] sm:$0xf]
  %v641 = vld [vmem:[%s2 + $0x4] sm:$0xf]
  %v642 = vld [vmem:[%s2 + $0x8] sm:$0xf]
  %v643 = vld [vmem:[%s2 + $0xc] sm:$0xf]
  %v644 = vld [vmem:[%s2 + $0x10] sm:$0xf]
  %v645 = vld [vmem:[%s2 + $0x14] sm:$0xf]
  %v646 = vld [vmem:[%s2 + $0x18] sm:$0xf]
  %v647 = vld [vmem:[%s2 + $0x1c] sm:$0xf]
  %v648 = vld [vmem:[%s2 + $0x20] sm:$0xf]
  %v649 = vld [vmem:[%s2 + $0x24] sm:$0xf]
  %v650 = vld [vmem:[%s2 + $0x28] sm:$0xf]
  %v651 = vld [vmem:[%s2 + $0x2c] sm:$0xf]
  %v652 = vld [vmem:[%s2 + $0x30] sm:$0xf]
  %v653 = vld [vmem:[%s2 + $0x34] sm:$0xf]
  %v654 = vld [vmem:[%s2 + $0x38] sm:$0xf]
  %v655 = vld [vmem:[%s2 + $0x3c] sm:$0xf]
  %v656 = vld [vmem:[%s2 + $0x40] sm:$0xf]
  %v657 = vld [vmem:[%s2 + $0x44] sm:$0xf]
  %v658 = vld [vmem:[%s2 + $0x48] sm:$0xf]
  %v659 = vld [vmem:[%s2 + $0x4c] sm:$0xf]
  %v660 = vld [vmem:[%s2 + $0x50] sm:$0xf]
  %v661 = vld [vmem:[%s2 + $0x54] sm:$0xf]
  %v662 = vld [vmem:[%s2 + $0x58] sm:$0xf]
  %v663 = vld [vmem:[%s2 + $0x5c] sm:$0xf]
  %v664 = vld [vmem:[%s2 + $0x60] sm:$0xf]
  %v665 = vld [vmem:[%s2 + $0x64] sm:$0xf]
  %v666 = vld [vmem:[%s2 + $0x68] sm:$0xf]
  %v667 = vld [vmem:[%s2 + $0x6c] sm:$0xf]
  %v668 = vld [vmem:[%s2 + $0x70] sm:$0xf]
  %v669 = vld [vmem:[%s2 + $0x74] sm:$0xf]
  %v670 = vld [vmem:[%s2 + $0x78] sm:$0xf]
  %v671 = vld [vmem:[%s2 + $0x7c] sm:$0xf]
  %673 = vset.pattern.permute.xlu0 0
  %674 = vperm.xlu0 %673, %v640
  %v675 = vpop.permute.xlu0 %674
  %v678 = vunpack.c.l.s4 839922192
  %v679 = vunpack.c.0.s8 %v678
  %v680 = vlaneseq
  %v681 = vshrl.u32 %v680, 7
  %v682 = vsub.s32 %v679, %v681
  %v683 = vrot.slane %v675, %v682
  %685 = vset.pattern.permute.xlu0 0
  %686 = vperm.xlu0 %685, %v641
  %v687 = vpop.permute.xlu0 %686
  %v690 = vunpack.c.l.s4 839922192
  %v691 = vunpack.c.0.s8 %v690
  %v692 = vlaneseq
  %v693 = vshrl.u32 %v692, 7
  %v694 = vsub.s32 %v691, %v693
  %v695 = vrot.slane %v687, %v694
  %697 = vset.pattern.permute.xlu0 0
  %698 = vperm.xlu0 %697, %v642
  %v699 = vpop.permute.xlu0 %698
  %v702 = vunpack.c.l.s4 839922192
  %v703 = vunpack.c.0.s8 %v702
  %v704 = vlaneseq
  %v705 = vshrl.u32 %v704, 7
  %v706 = vsub.s32 %v703, %v705
  %v707 = vrot.slane %v699, %v706
  %709 = vset.pattern.permute.xlu0 0
  %710 = vperm.xlu0 %709, %v643
  %v711 = vpop.permute.xlu0 %710
  %v714 = vunpack.c.l.s4 839922192
  %v715 = vunpack.c.0.s8 %v714
  %v716 = vlaneseq
  %v717 = vshrl.u32 %v716, 7
  %v718 = vsub.s32 %v715, %v717
  %v719 = vrot.slane %v711, %v718
  %721 = vset.pattern.permute.xlu0 0
  %722 = vperm.xlu0 %721, %v644
  %v723 = vpop.permute.xlu0 %722
  %v726 = vunpack.c.l.s4 839922192
  %v727 = vunpack.c.0.s8 %v726
  %v728 = vlaneseq
  %v729 = vshrl.u32 %v728, 7
  %v730 = vsub.s32 %v727, %v729
  %v731 = vrot.slane %v723, %v730
  %733 = vset.pattern.permute.xlu0 0
  %734 = vperm.xlu0 %733, %v645
  %v735 = vpop.permute.xlu0 %734
  %v738 = vunpack.c.l.s4 839922192
  %v739 = vunpack.c.0.s8 %v738
  %v740 = vlaneseq
  %v741 = vshrl.u32 %v740, 7
  %v742 = vsub.s32 %v739, %v741
  %v743 = vrot.slane %v735, %v742
  %745 = vset.pattern.permute.xlu0 0
  %746 = vperm.xlu0 %745, %v646
  %v747 = vpop.permute.xlu0 %746
  %v750 = vunpack.c.l.s4 839922192
  %v751 = vunpack.c.0.s8 %v750
  %v752 = vlaneseq
  %v753 = vshrl.u32 %v752, 7
  %v754 = vsub.s32 %v751, %v753
  %v755 = vrot.slane %v747, %v754
  %757 = vset.pattern.permute.xlu0 0
  %758 = vperm.xlu0 %757, %v647
  %v759 = vpop.permute.xlu0 %758
  %v762 = vunpack.c.l.s4 839922192
  %v763 = vunpack.c.0.s8 %v762
  %v764 = vlaneseq
  %v765 = vshrl.u32 %v764, 7
  %v766 = vsub.s32 %v763, %v765
  %v767 = vrot.slane %v759, %v766
  %769 = vset.pattern.permute.xlu0 0
  %770 = vperm.xlu0 %769, %v648
  %v771 = vpop.permute.xlu0 %770
  %v774 = vunpack.c.l.s4 839922192
  %v775 = vunpack.c.0.s8 %v774
  %v776 = vlaneseq
  %v777 = vshrl.u32 %v776, 7
  %v778 = vsub.s32 %v775, %v777
  %v779 = vrot.slane %v771, %v778
  %781 = vset.pattern.permute.xlu0 0
  %782 = vperm.xlu0 %781, %v649
  %v783 = vpop.permute.xlu0 %782
  %v786 = vunpack.c.l.s4 839922192
  %v787 = vunpack.c.0.s8 %v786
  %v788 = vlaneseq
  %v789 = vshrl.u32 %v788, 7
  %v790 = vsub.s32 %v787, %v789
  %v791 = vrot.slane %v783, %v790
  %793 = vset.pattern.permute.xlu0 0
  %794 = vperm.xlu0 %793, %v650
  %v795 = vpop.permute.xlu0 %794
  %v798 = vunpack.c.l.s4 839922192
  %v799 = vunpack.c.0.s8 %v798
  %v800 = vlaneseq
  %v801 = vshrl.u32 %v800, 7
  %v802 = vsub.s32 %v799, %v801
  %v803 = vrot.slane %v795, %v802
  %805 = vset.pattern.permute.xlu0 0
  %806 = vperm.xlu0 %805, %v651
  %v807 = vpop.permute.xlu0 %806
  %v810 = vunpack.c.l.s4 839922192
  %v811 = vunpack.c.0.s8 %v810
  %v812 = vlaneseq
  %v813 = vshrl.u32 %v812, 7
  %v814 = vsub.s32 %v811, %v813
  %v815 = vrot.slane %v807, %v814
  %817 = vset.pattern.permute.xlu0 0
  %818 = vperm.xlu0 %817, %v652
  %v819 = vpop.permute.xlu0 %818
  %v822 = vunpack.c.l.s4 839922192
  %v823 = vunpack.c.0.s8 %v822
  %v824 = vlaneseq
  %v825 = vshrl.u32 %v824, 7
  %v826 = vsub.s32 %v823, %v825
  %v827 = vrot.slane %v819, %v826
  %829 = vset.pattern.permute.xlu0 0
  %830 = vperm.xlu0 %829, %v653
  %v831 = vpop.permute.xlu0 %830
  %v834 = vunpack.c.l.s4 839922192
  %v835 = vunpack.c.0.s8 %v834
  %v836 = vlaneseq
  %v837 = vshrl.u32 %v836, 7
  %v838 = vsub.s32 %v835, %v837
  %v839 = vrot.slane %v831, %v838
  %841 = vset.pattern.permute.xlu0 0
  %842 = vperm.xlu0 %841, %v654
  %v843 = vpop.permute.xlu0 %842
  %v846 = vunpack.c.l.s4 839922192
  %v847 = vunpack.c.0.s8 %v846
  %v848 = vlaneseq
  %v849 = vshrl.u32 %v848, 7
  %v850 = vsub.s32 %v847, %v849
  %v851 = vrot.slane %v843, %v850
  %853 = vset.pattern.permute.xlu0 0
  %854 = vperm.xlu0 %853, %v655
  %v855 = vpop.permute.xlu0 %854
  %v858 = vunpack.c.l.s4 839922192
  %v859 = vunpack.c.0.s8 %v858
  %v860 = vlaneseq
  %v861 = vshrl.u32 %v860, 7
  %v862 = vsub.s32 %v859, %v861
  %v863 = vrot.slane %v855, %v862
  %865 = vset.pattern.permute.xlu0 0
  %866 = vperm.xlu0 %865, %v656
  %v867 = vpop.permute.xlu0 %866
  %v870 = vunpack.c.l.s4 839922192
  %v871 = vunpack.c.0.s8 %v870
  %v872 = vlaneseq
  %v873 = vshrl.u32 %v872, 7
  %v874 = vsub.s32 %v871, %v873
  %v875 = vrot.slane %v867, %v874
  %877 = vset.pattern.permute.xlu0 0
  %878 = vperm.xlu0 %877, %v657
  %v879 = vpop.permute.xlu0 %878
  %v882 = vunpack.c.l.s4 839922192
  %v883 = vunpack.c.0.s8 %v882
  %v884 = vlaneseq
  %v885 = vshrl.u32 %v884, 7
  %v886 = vsub.s32 %v883, %v885
  %v887 = vrot.slane %v879, %v886
  %889 = vset.pattern.permute.xlu0 0
  %890 = vperm.xlu0 %889, %v658
  %v891 = vpop.permute.xlu0 %890
  %v894 = vunpack.c.l.s4 839922192
  %v895 = vunpack.c.0.s8 %v894
  %v896 = vlaneseq
  %v897 = vshrl.u32 %v896, 7
  %v898 = vsub.s32 %v895, %v897
  %v899 = vrot.slane %v891, %v898
  %901 = vset.pattern.permute.xlu0 0
  %902 = vperm.xlu0 %901, %v659
  %v903 = vpop.permute.xlu0 %902
  %v906 = vunpack.c.l.s4 839922192
  %v907 = vunpack.c.0.s8 %v906
  %v908 = vlaneseq
  %v909 = vshrl.u32 %v908, 7
  %v910 = vsub.s32 %v907, %v909
  %v911 = vrot.slane %v903, %v910
  %913 = vset.pattern.permute.xlu0 0
  %914 = vperm.xlu0 %913, %v660
  %v915 = vpop.permute.xlu0 %914
  %v918 = vunpack.c.l.s4 839922192
  %v919 = vunpack.c.0.s8 %v918
  %v920 = vlaneseq
  %v921 = vshrl.u32 %v920, 7
  %v922 = vsub.s32 %v919, %v921
  %v923 = vrot.slane %v915, %v922
  %925 = vset.pattern.permute.xlu0 0
  %926 = vperm.xlu0 %925, %v661
  %v927 = vpop.permute.xlu0 %926
  %v930 = vunpack.c.l.s4 839922192
  %v931 = vunpack.c.0.s8 %v930
  %v932 = vlaneseq
  %v933 = vshrl.u32 %v932, 7
  %v934 = vsub.s32 %v931, %v933
  %v935 = vrot.slane %v927, %v934
  %937 = vset.pattern.permute.xlu0 0
  %938 = vperm.xlu0 %937, %v662
  %v939 = vpop.permute.xlu0 %938
  %v942 = vunpack.c.l.s4 839922192
  %v943 = vunpack.c.0.s8 %v942
  %v944 = vlaneseq
  %v945 = vshrl.u32 %v944, 7
  %v946 = vsub.s32 %v943, %v945
  %v947 = vrot.slane %v939, %v946
  %949 = vset.pattern.permute.xlu0 0
  %950 = vperm.xlu0 %949, %v663
  %v951 = vpop.permute.xlu0 %950
  %v954 = vunpack.c.l.s4 839922192
  %v955 = vunpack.c.0.s8 %v954
  %v956 = vlaneseq
  %v957 = vshrl.u32 %v956, 7
  %v958 = vsub.s32 %v955, %v957
  %v959 = vrot.slane %v951, %v958
  %961 = vset.pattern.permute.xlu0 0
  %962 = vperm.xlu0 %961, %v664
  %v963 = vpop.permute.xlu0 %962
  %v966 = vunpack.c.l.s4 839922192
  %v967 = vunpack.c.0.s8 %v966
  %v968 = vlaneseq
  %v969 = vshrl.u32 %v968, 7
  %v970 = vsub.s32 %v967, %v969
  %v971 = vrot.slane %v963, %v970
  %973 = vset.pattern.permute.xlu0 0
  %974 = vperm.xlu0 %973, %v665
  %v975 = vpop.permute.xlu0 %974
  %v978 = vunpack.c.l.s4 839922192
  %v979 = vunpack.c.0.s8 %v978
  %v980 = vlaneseq
  %v981 = vshrl.u32 %v980, 7
  %v982 = vsub.s32 %v979, %v981
  %v983 = vrot.slane %v975, %v982
  %985 = vset.pattern.permute.xlu0 0
  %986 = vperm.xlu0 %985, %v666
  %v987 = vpop.permute.xlu0 %986
  %v990 = vunpack.c.l.s4 839922192
  %v991 = vunpack.c.0.s8 %v990
  %v992 = vlaneseq
  %v993 = vshrl.u32 %v992, 7
  %v994 = vsub.s32 %v991, %v993
  %v995 = vrot.slane %v987, %v994
  %997 = vset.pattern.permute.xlu0 0
  %998 = vperm.xlu0 %997, %v667
  %v999 = vpop.permute.xlu0 %998
  %v1002 = vunpack.c.l.s4 839922192
  %v1003 = vunpack.c.0.s8 %v1002
  %v1004 = vlaneseq
  %v1005 = vshrl.u32 %v1004, 7
  %v1006 = vsub.s32 %v1003, %v1005
  %v1007 = vrot.slane %v999, %v1006
  %1009 = vset.pattern.permute.xlu0 0
  %1010 = vperm.xlu0 %1009, %v668
  %v1011 = vpop.permute.xlu0 %1010
  %v1014 = vunpack.c.l.s4 839922192
  %v1015 = vunpack.c.0.s8 %v1014
  %v1016 = vlaneseq
  %v1017 = vshrl.u32 %v1016, 7
  %v1018 = vsub.s32 %v1015, %v1017
  %v1019 = vrot.slane %v1011, %v1018
  %1021 = vset.pattern.permute.xlu0 0
  %1022 = vperm.xlu0 %1021, %v669
  %v1023 = vpop.permute.xlu0 %1022
  %v1026 = vunpack.c.l.s4 839922192
  %v1027 = vunpack.c.0.s8 %v1026
  %v1028 = vlaneseq
  %v1029 = vshrl.u32 %v1028, 7
  %v1030 = vsub.s32 %v1027, %v1029
  %v1031 = vrot.slane %v1023, %v1030
  %1033 = vset.pattern.permute.xlu0 0
  %1034 = vperm.xlu0 %1033, %v670
  %v1035 = vpop.permute.xlu0 %1034
  %v1038 = vunpack.c.l.s4 839922192
  %v1039 = vunpack.c.0.s8 %v1038
  %v1040 = vlaneseq
  %v1041 = vshrl.u32 %v1040, 7
  %v1042 = vsub.s32 %v1039, %v1041
  %v1043 = vrot.slane %v1035, %v1042
  %1045 = vset.pattern.permute.xlu0 0
  %1046 = vperm.xlu0 %1045, %v671
  %v1047 = vpop.permute.xlu0 %1046
  %v1050 = vunpack.c.l.s4 839922192
  %v1051 = vunpack.c.0.s8 %v1050
  %v1052 = vlaneseq
  %v1053 = vshrl.u32 %v1052, 7
  %v1054 = vsub.s32 %v1051, %v1053
  %v1055 = vrot.slane %v1047, %v1054
  %v1088 = vunpack.c.l.b16 %v683
  %v1089 = vunpack.c.l.b16 %v695
  %v1090 = vunpack.c.l.b16 %v707
  %v1091 = vunpack.c.l.b16 %v719
  %v1092 = vunpack.c.l.b16 %v731
  %v1093 = vunpack.c.l.b16 %v743
  %v1094 = vunpack.c.l.b16 %v755
  %v1095 = vunpack.c.l.b16 %v767
  %v1096 = vunpack.c.l.b16 %v779
  %v1097 = vunpack.c.l.b16 %v791
  %v1098 = vunpack.c.l.b16 %v803
  %v1099 = vunpack.c.l.b16 %v815
  %v1100 = vunpack.c.l.b16 %v827
  %v1101 = vunpack.c.l.b16 %v839
  %v1102 = vunpack.c.l.b16 %v851
  %v1103 = vunpack.c.l.b16 %v863
  %v1104 = vunpack.c.l.b16 %v875
  %v1105 = vunpack.c.l.b16 %v887
  %v1106 = vunpack.c.l.b16 %v899
  %v1107 = vunpack.c.l.b16 %v911
  %v1108 = vunpack.c.l.b16 %v923
  %v1109 = vunpack.c.l.b16 %v935
  %v1110 = vunpack.c.l.b16 %v947
  %v1111 = vunpack.c.l.b16 %v959
  %v1112 = vunpack.c.l.b16 %v971
  %v1113 = vunpack.c.l.b16 %v983
  %v1114 = vunpack.c.l.b16 %v995
  %v1115 = vunpack.c.l.b16 %v1007
  %v1116 = vunpack.c.l.b16 %v1019
  %v1117 = vunpack.c.l.b16 %v1031
  %v1118 = vunpack.c.l.b16 %v1043
  %v1119 = vunpack.c.l.b16 %v1055
  %v1120 = vpack.c.b16 %v1089, %v1088
  %v1121 = vpack.c.b16 %v1091, %v1090
  %v1122 = vpack.c.b16 %v1093, %v1092
  %v1123 = vpack.c.b16 %v1095, %v1094
  %v1124 = vpack.c.b16 %v1097, %v1096
  %v1125 = vpack.c.b16 %v1099, %v1098
  %v1126 = vpack.c.b16 %v1101, %v1100
  %v1127 = vpack.c.b16 %v1103, %v1102
  %v1128 = vpack.c.b16 %v1105, %v1104
  %v1129 = vpack.c.b16 %v1107, %v1106
  %v1130 = vpack.c.b16 %v1109, %v1108
  %v1131 = vpack.c.b16 %v1111, %v1110
  %v1132 = vpack.c.b16 %v1113, %v1112
  %v1133 = vpack.c.b16 %v1115, %v1114
  %v1134 = vpack.c.b16 %v1117, %v1116
  %v1135 = vpack.c.b16 %v1119, %v1118
  %v1152 = vadd.bf16 %v608, %v1120
  %v1153 = vadd.bf16 %v609, %v1120
  %v1154 = vadd.bf16 %v610, %v1121
  %v1155 = vadd.bf16 %v611, %v1121
  %v1156 = vadd.bf16 %v612, %v1122
  %v1157 = vadd.bf16 %v613, %v1122
  %v1158 = vadd.bf16 %v614, %v1123
  %v1159 = vadd.bf16 %v615, %v1123
  %v1160 = vadd.bf16 %v616, %v1124
  %v1161 = vadd.bf16 %v617, %v1124
  %v1162 = vadd.bf16 %v618, %v1125
  %v1163 = vadd.bf16 %v619, %v1125
  %v1164 = vadd.bf16 %v620, %v1126
  %v1165 = vadd.bf16 %v621, %v1126
  %v1166 = vadd.bf16 %v622, %v1127
  %v1167 = vadd.bf16 %v623, %v1127
  %v1168 = vadd.bf16 %v624, %v1128
  %v1169 = vadd.bf16 %v625, %v1128
  %v1170 = vadd.bf16 %v626, %v1129
  %v1171 = vadd.bf16 %v627, %v1129
  %v1172 = vadd.bf16 %v628, %v1130
  %v1173 = vadd.bf16 %v629, %v1130
  %v1174 = vadd.bf16 %v630, %v1131
  %v1175 = vadd.bf16 %v631, %v1131
  %v1176 = vadd.bf16 %v632, %v1132
  %v1177 = vadd.bf16 %v633, %v1132
  %v1178 = vadd.bf16 %v634, %v1133
  %v1179 = vadd.bf16 %v635, %v1133
  %v1180 = vadd.bf16 %v636, %v1134
  %v1181 = vadd.bf16 %v637, %v1134
  %v1182 = vadd.bf16 %v638, %v1135
  %v1183 = vadd.bf16 %v639, %v1135
  %v1184 = vmax.bf16 %v1152, 0
  %v1185 = vmax.bf16 %v1153, 0
  %v1186 = vmax.bf16 %v1154, 0
  %v1187 = vmax.bf16 %v1155, 0
  %v1188 = vmax.bf16 %v1156, 0
  %v1189 = vmax.bf16 %v1157, 0
  %v1190 = vmax.bf16 %v1158, 0
  %v1191 = vmax.bf16 %v1159, 0
  %v1192 = vmax.bf16 %v1160, 0
  %v1193 = vmax.bf16 %v1161, 0
  %v1194 = vmax.bf16 %v1162, 0
  %v1195 = vmax.bf16 %v1163, 0
  %v1196 = vmax.bf16 %v1164, 0
  %v1197 = vmax.bf16 %v1165, 0
  %v1198 = vmax.bf16 %v1166, 0
  %v1199 = vmax.bf16 %v1167, 0
  %v1200 = vmax.bf16 %v1168, 0
  %v1201 = vmax.bf16 %v1169, 0
  %v1202 = vmax.bf16 %v1170, 0
  %v1203 = vmax.bf16 %v1171, 0
  %v1204 = vmax.bf16 %v1172, 0
  %v1205 = vmax.bf16 %v1173, 0
  %v1206 = vmax.bf16 %v1174, 0
  %v1207 = vmax.bf16 %v1175, 0
  %v1208 = vmax.bf16 %v1176, 0
  %v1209 = vmax.bf16 %v1177, 0
  %v1210 = vmax.bf16 %v1178, 0
  %v1211 = vmax.bf16 %v1179, 0
  %v1212 = vmax.bf16 %v1180, 0
  %v1213 = vmax.bf16 %v1181, 0
  %v1214 = vmax.bf16 %v1182, 0
  %v1215 = vmax.bf16 %v1183, 0
  %v1248 = vunpack.c.l.b16 %v62
  %v1249 = vunpack.c.h.b16 %v62
  %v1250 = vunpack.c.l.b16 %v63
  %v1251 = vunpack.c.h.b16 %v63
  %v1252 = vunpack.c.l.b16 %v64
  %v1253 = vunpack.c.h.b16 %v64
  %v1254 = vunpack.c.l.b16 %v65
  %v1255 = vunpack.c.h.b16 %v65
  %v1256 = vunpack.c.l.b16 %v66
  %v1257 = vunpack.c.h.b16 %v66
  %v1258 = vunpack.c.l.b16 %v67
  %v1259 = vunpack.c.h.b16 %v67
  %v1260 = vunpack.c.l.b16 %v68
  %v1261 = vunpack.c.h.b16 %v68
  %v1262 = vunpack.c.l.b16 %v69
  %v1263 = vunpack.c.h.b16 %v69
  %v1264 = vunpack.c.l.b16 %v70
  %v1265 = vunpack.c.h.b16 %v70
  %v1266 = vunpack.c.l.b16 %v71
  %v1267 = vunpack.c.h.b16 %v71
  %v1268 = vunpack.c.l.b16 %v72
  %v1269 = vunpack.c.h.b16 %v72
  %v1270 = vunpack.c.l.b16 %v73
  %v1271 = vunpack.c.h.b16 %v73
  %v1272 = vunpack.c.l.b16 %v74
  %v1273 = vunpack.c.h.b16 %v74
  %v1274 = vunpack.c.l.b16 %v75
  %v1275 = vunpack.c.h.b16 %v75
  %v1276 = vunpack.c.l.b16 %v76
  %v1277 = vunpack.c.h.b16 %v76
  %v1278 = vunpack.c.l.b16 %v77
  %v1279 = vunpack.c.h.b16 %v77
  %v1280 = vunpack.c.l.b16 %v78
  %v1281 = vunpack.c.h.b16 %v78
  %v1282 = vunpack.c.l.b16 %v79
  %v1283 = vunpack.c.h.b16 %v79
  %v1284 = vunpack.c.l.b16 %v80
  %v1285 = vunpack.c.h.b16 %v80
  %v1286 = vunpack.c.l.b16 %v81
  %v1287 = vunpack.c.h.b16 %v81
  %v1288 = vunpack.c.l.b16 %v82
  %v1289 = vunpack.c.h.b16 %v82
  %v1290 = vunpack.c.l.b16 %v83
  %v1291 = vunpack.c.h.b16 %v83
  %v1292 = vunpack.c.l.b16 %v84
  %v1293 = vunpack.c.h.b16 %v84
  %v1294 = vunpack.c.l.b16 %v85
  %v1295 = vunpack.c.h.b16 %v85
  %v1296 = vunpack.c.l.b16 %v86
  %v1297 = vunpack.c.h.b16 %v86
  %v1298 = vunpack.c.l.b16 %v87
  %v1299 = vunpack.c.h.b16 %v87
  %v1300 = vunpack.c.l.b16 %v88
  %v1301 = vunpack.c.h.b16 %v88
  %v1302 = vunpack.c.l.b16 %v89
  %v1303 = vunpack.c.h.b16 %v89
  %v1304 = vunpack.c.l.b16 %v90
  %v1305 = vunpack.c.h.b16 %v90
  %v1306 = vunpack.c.l.b16 %v91
  %v1307 = vunpack.c.h.b16 %v91
  %v1308 = vunpack.c.l.b16 %v92
  %v1309 = vunpack.c.h.b16 %v92
  %v1310 = vunpack.c.l.b16 %v93
  %v1311 = vunpack.c.h.b16 %v93
  %v1312 = vpack.c.b16 %v1250, %v1248
  %v1313 = vpack.c.b16 %v1251, %v1249
  %v1314 = vpack.c.b16 %v1254, %v1252
  %v1315 = vpack.c.b16 %v1255, %v1253
  %v1316 = vpack.c.b16 %v1258, %v1256
  %v1317 = vpack.c.b16 %v1259, %v1257
  %v1318 = vpack.c.b16 %v1262, %v1260
  %v1319 = vpack.c.b16 %v1263, %v1261
  %v1320 = vpack.c.b16 %v1266, %v1264
  %v1321 = vpack.c.b16 %v1267, %v1265
  %v1322 = vpack.c.b16 %v1270, %v1268
  %v1323 = vpack.c.b16 %v1271, %v1269
  %v1324 = vpack.c.b16 %v1274, %v1272
  %v1325 = vpack.c.b16 %v1275, %v1273
  %v1326 = vpack.c.b16 %v1278, %v1276
  %v1327 = vpack.c.b16 %v1279, %v1277
  %v1328 = vpack.c.b16 %v1282, %v1280
  %v1329 = vpack.c.b16 %v1283, %v1281
  %v1330 = vpack.c.b16 %v1286, %v1284
  %v1331 = vpack.c.b16 %v1287, %v1285
  %v1332 = vpack.c.b16 %v1290, %v1288
  %v1333 = vpack.c.b16 %v1291, %v1289
  %v1334 = vpack.c.b16 %v1294, %v1292
  %v1335 = vpack.c.b16 %v1295, %v1293
  %v1336 = vpack.c.b16 %v1298, %v1296
  %v1337 = vpack.c.b16 %v1299, %v1297
  %v1338 = vpack.c.b16 %v1302, %v1300
  %v1339 = vpack.c.b16 %v1303, %v1301
  %v1340 = vpack.c.b16 %v1306, %v1304
  %v1341 = vpack.c.b16 %v1307, %v1305
  %v1342 = vpack.c.b16 %v1310, %v1308
  %v1343 = vpack.c.b16 %v1311, %v1309
  %1376 = vmatprep.subr.bf16.mxu0 %v1199
  %1377 = vmatpush1.bf16.msra.mxu0 %v1198
  %1378 = vmatprep.subr.bf16.mxu0 %v1197
  %1379 = vmatpush1.bf16.msra.mxu0 %v1196
  %1380 = vmatprep.subr.bf16.mxu0 %v1195
  %1381 = vmatpush1.bf16.msra.mxu0 %v1194
  %1382 = vmatprep.subr.bf16.mxu0 %v1193
  %1383 = vmatpush1.bf16.msra.mxu0 %v1192
  %1384 = vmatprep.subr.bf16.mxu0 %v1191
  %1385 = vmatpush1.bf16.msra.mxu0 %v1190
  %1386 = vmatprep.subr.bf16.mxu0 %v1189
  %1387 = vmatpush1.bf16.msra.mxu0 %v1188
  %1388 = vmatprep.subr.bf16.mxu0 %v1187
  %1389 = vmatpush1.bf16.msra.mxu0 %v1186
  %1390 = vmatprep.subr.bf16.mxu0 %v1185
  %1391 = vmatpush1.bf16.msra.mxu0 %v1184
  %1392 = vmatprep.subr.bf16.mxu0 %v1215
  %1393 = vmatpush2.bf16.msra.mxu0 %v1214
  %1394 = vmatprep.subr.bf16.mxu0 %v1213
  %1395 = vmatpush2.bf16.msra.mxu0 %v1212
  %1396 = vmatprep.subr.bf16.mxu0 %v1211
  %1397 = vmatpush2.bf16.msra.mxu0 %v1210
  %1398 = vmatprep.subr.bf16.mxu0 %v1209
  %1399 = vmatpush2.bf16.msra.mxu0 %v1208
  %1400 = vmatprep.subr.bf16.mxu0 %v1207
  %1401 = vmatpush2.bf16.msra.mxu0 %v1206
  %1402 = vmatprep.subr.bf16.mxu0 %v1205
  %1403 = vmatpush2.bf16.msra.mxu0 %v1204
  %1404 = vmatprep.subr.bf16.mxu0 %v1203
  %1405 = vmatpush2.bf16.msra.mxu0 %v1202
  %1406 = vmatprep.subr.bf16.mxu0 %v1201
  %1407 = vmatpush2.bf16.msra.mxu0 %v1200
  %1408 = vmatprep.mubr.bf16.mxu0 %v1313
  %1409 = vmatmul.mubr.bf16.gmra.mxu0 %v1312
  %v1410 = vpop.f32.mrf.mxu0
  %v1411 = vadd.f32 0.0, %v1410
  %v1412 = vpop.f32.mrf.mxu0
  %v1413 = vadd.f32 0.0, %v1412
  %v1414 = vpop.f32.mrf.mxu0
  %v1415 = vadd.f32 0.0, %v1414
  %v1416 = vpop.f32.mrf.mxu0
  %v1417 = vadd.f32 0.0, %v1416
  %1418 = vmatprep.mubr.bf16.mxu0 %v1315
  %1419 = vmatmul.mubr.bf16.gmra.mxu0 %v1314
  %v1420 = vpop.f32.mrf.mxu0
  %v1421 = vadd.f32 0.0, %v1420
  %v1422 = vpop.f32.mrf.mxu0
  %v1423 = vadd.f32 0.0, %v1422
  %v1424 = vpop.f32.mrf.mxu0
  %v1425 = vadd.f32 0.0, %v1424
  %v1426 = vpop.f32.mrf.mxu0
  %v1427 = vadd.f32 0.0, %v1426
  %1428 = vmatprep.mubr.bf16.mxu0 %v1317
  %1429 = vmatmul.mubr.bf16.gmra.mxu0 %v1316
  %v1430 = vpop.f32.mrf.mxu0
  %v1431 = vadd.f32 0.0, %v1430
  %v1432 = vpop.f32.mrf.mxu0
  %v1433 = vadd.f32 0.0, %v1432
  %v1434 = vpop.f32.mrf.mxu0
  %v1435 = vadd.f32 0.0, %v1434
  %v1436 = vpop.f32.mrf.mxu0
  %v1437 = vadd.f32 0.0, %v1436
  %1438 = vmatprep.mubr.bf16.mxu0 %v1319
  %1439 = vmatmul.mubr.bf16.gmra.mxu0 %v1318
  %v1440 = vpop.f32.mrf.mxu0
  %v1441 = vadd.f32 0.0, %v1440
  %v1442 = vpop.f32.mrf.mxu0
  %v1443 = vadd.f32 0.0, %v1442
  %v1444 = vpop.f32.mrf.mxu0
  %v1445 = vadd.f32 0.0, %v1444
  %v1446 = vpop.f32.mrf.mxu0
  %v1447 = vadd.f32 0.0, %v1446
  %1448 = vmatprep.mubr.bf16.mxu0 %v1321
  %1449 = vmatmul.mubr.bf16.gmra.mxu0 %v1320
  %v1450 = vpop.f32.mrf.mxu0
  %v1451 = vadd.f32 0.0, %v1450
  %v1452 = vpop.f32.mrf.mxu0
  %v1453 = vadd.f32 0.0, %v1452
  %v1454 = vpop.f32.mrf.mxu0
  %v1455 = vadd.f32 0.0, %v1454
  %v1456 = vpop.f32.mrf.mxu0
  %v1457 = vadd.f32 0.0, %v1456
  %1458 = vmatprep.mubr.bf16.mxu0 %v1323
  %1459 = vmatmul.mubr.bf16.gmra.mxu0 %v1322
  %v1460 = vpop.f32.mrf.mxu0
  %v1461 = vadd.f32 0.0, %v1460
  %v1462 = vpop.f32.mrf.mxu0
  %v1463 = vadd.f32 0.0, %v1462
  %v1464 = vpop.f32.mrf.mxu0
  %v1465 = vadd.f32 0.0, %v1464
  %v1466 = vpop.f32.mrf.mxu0
  %v1467 = vadd.f32 0.0, %v1466
  %1468 = vmatprep.mubr.bf16.mxu0 %v1325
  %1469 = vmatmul.mubr.bf16.gmra.mxu0 %v1324
  %v1470 = vpop.f32.mrf.mxu0
  %v1471 = vadd.f32 0.0, %v1470
  %v1472 = vpop.f32.mrf.mxu0
  %v1473 = vadd.f32 0.0, %v1472
  %v1474 = vpop.f32.mrf.mxu0
  %v1475 = vadd.f32 0.0, %v1474
  %v1476 = vpop.f32.mrf.mxu0
  %v1477 = vadd.f32 0.0, %v1476
  %1478 = vmatprep.mubr.bf16.mxu0 %v1327
  %1479 = vmatmul.mubr.bf16.gmra.mxu0 %v1326
  %v1480 = vpop.f32.mrf.mxu0
  %v1481 = vadd.f32 0.0, %v1480
  %v1482 = vpop.f32.mrf.mxu0
  %v1483 = vadd.f32 0.0, %v1482
  %v1484 = vpop.f32.mrf.mxu0
  %v1485 = vadd.f32 0.0, %v1484
  %v1486 = vpop.f32.mrf.mxu0
  %v1487 = vadd.f32 0.0, %v1486
  %1488 = vmatprep.mubr.bf16.mxu0 %v1329
  %1489 = vmatmul.mubr.bf16.gmra.mxu0 %v1328
  %v1490 = vpop.f32.mrf.mxu0
  %v1491 = vadd.f32 0.0, %v1490
  %v1492 = vpop.f32.mrf.mxu0
  %v1493 = vadd.f32 0.0, %v1492
  %v1494 = vpop.f32.mrf.mxu0
  %v1495 = vadd.f32 0.0, %v1494
  %v1496 = vpop.f32.mrf.mxu0
  %v1497 = vadd.f32 0.0, %v1496
  %1498 = vmatprep.mubr.bf16.mxu0 %v1331
  %1499 = vmatmul.mubr.bf16.gmra.mxu0 %v1330
  %v1500 = vpop.f32.mrf.mxu0
  %v1501 = vadd.f32 0.0, %v1500
  %v1502 = vpop.f32.mrf.mxu0
  %v1503 = vadd.f32 0.0, %v1502
  %v1504 = vpop.f32.mrf.mxu0
  %v1505 = vadd.f32 0.0, %v1504
  %v1506 = vpop.f32.mrf.mxu0
  %v1507 = vadd.f32 0.0, %v1506
  %1508 = vmatprep.mubr.bf16.mxu0 %v1333
  %1509 = vmatmul.mubr.bf16.gmra.mxu0 %v1332
  %v1510 = vpop.f32.mrf.mxu0
  %v1511 = vadd.f32 0.0, %v1510
  %v1512 = vpop.f32.mrf.mxu0
  %v1513 = vadd.f32 0.0, %v1512
  %v1514 = vpop.f32.mrf.mxu0
  %v1515 = vadd.f32 0.0, %v1514
  %v1516 = vpop.f32.mrf.mxu0
  %v1517 = vadd.f32 0.0, %v1516
  %1518 = vmatprep.mubr.bf16.mxu0 %v1335
  %1519 = vmatmul.mubr.bf16.gmra.mxu0 %v1334
  %v1520 = vpop.f32.mrf.mxu0
  %v1521 = vadd.f32 0.0, %v1520
  %v1522 = vpop.f32.mrf.mxu0
  %v1523 = vadd.f32 0.0, %v1522
  %v1524 = vpop.f32.mrf.mxu0
  %v1525 = vadd.f32 0.0, %v1524
  %v1526 = vpop.f32.mrf.mxu0
  %v1527 = vadd.f32 0.0, %v1526
  %1528 = vmatprep.mubr.bf16.mxu0 %v1337
  %1529 = vmatmul.mubr.bf16.gmra.mxu0 %v1336
  %v1530 = vpop.f32.mrf.mxu0
  %v1531 = vadd.f32 0.0, %v1530
  %v1532 = vpop.f32.mrf.mxu0
  %v1533 = vadd.f32 0.0, %v1532
  %v1534 = vpop.f32.mrf.mxu0
  %v1535 = vadd.f32 0.0, %v1534
  %v1536 = vpop.f32.mrf.mxu0
  %v1537 = vadd.f32 0.0, %v1536
  %1538 = vmatprep.mubr.bf16.mxu0 %v1339
  %1539 = vmatmul.mubr.bf16.gmra.mxu0 %v1338
  %v1540 = vpop.f32.mrf.mxu0
  %v1541 = vadd.f32 0.0, %v1540
  %v1542 = vpop.f32.mrf.mxu0
  %v1543 = vadd.f32 0.0, %v1542
  %v1544 = vpop.f32.mrf.mxu0
  %v1545 = vadd.f32 0.0, %v1544
  %v1546 = vpop.f32.mrf.mxu0
  %v1547 = vadd.f32 0.0, %v1546
  %1548 = vmatprep.mubr.bf16.mxu0 %v1341
  %1549 = vmatmul.mubr.bf16.gmra.mxu0 %v1340
  %v1550 = vpop.f32.mrf.mxu0
  %v1551 = vadd.f32 0.0, %v1550
  %v1552 = vpop.f32.mrf.mxu0
  %v1553 = vadd.f32 0.0, %v1552
  %v1554 = vpop.f32.mrf.mxu0
  %v1555 = vadd.f32 0.0, %v1554
  %v1556 = vpop.f32.mrf.mxu0
  %v1557 = vadd.f32 0.0, %v1556
  %1558 = vmatprep.mubr.bf16.mxu0 %v1343
  %1559 = vmatmul.mubr.bf16.gmra.mxu0 %v1342
  %v1560 = vpop.f32.mrf.mxu0
  %v1561 = vadd.f32 0.0, %v1560
  %v1562 = vpop.f32.mrf.mxu0
  %v1563 = vadd.f32 0.0, %v1562
  %v1564 = vpop.f32.mrf.mxu0
  %v1565 = vadd.f32 0.0, %v1564
  %v1566 = vpop.f32.mrf.mxu0
  %v1567 = vadd.f32 0.0, %v1566
  %1568 = vdwg.mxu0
  %v1569 = vpack.c.bf16 %v1415, %v1411
  %v1570 = vpack.c.bf16 %v1417, %v1413
  %v1571 = vpack.c.bf16 %v1425, %v1421
  %v1572 = vpack.c.bf16 %v1427, %v1423
  %v1573 = vpack.c.bf16 %v1435, %v1431
  %v1574 = vpack.c.bf16 %v1437, %v1433
  %v1575 = vpack.c.bf16 %v1445, %v1441
  %v1576 = vpack.c.bf16 %v1447, %v1443
  %v1577 = vpack.c.bf16 %v1455, %v1451
  %v1578 = vpack.c.bf16 %v1457, %v1453
  %v1579 = vpack.c.bf16 %v1465, %v1461
  %v1580 = vpack.c.bf16 %v1467, %v1463
  %v1581 = vpack.c.bf16 %v1475, %v1471
  %v1582 = vpack.c.bf16 %v1477, %v1473
  %v1583 = vpack.c.bf16 %v1485, %v1481
  %v1584 = vpack.c.bf16 %v1487, %v1483
  %v1585 = vpack.c.bf16 %v1495, %v1491
  %v1586 = vpack.c.bf16 %v1497, %v1493
  %v1587 = vpack.c.bf16 %v1505, %v1501
  %v1588 = vpack.c.bf16 %v1507, %v1503
  %v1589 = vpack.c.bf16 %v1515, %v1511
  %v1590 = vpack.c.bf16 %v1517, %v1513
  %v1591 = vpack.c.bf16 %v1525, %v1521
  %v1592 = vpack.c.bf16 %v1527, %v1523
  %v1593 = vpack.c.bf16 %v1535, %v1531
  %v1594 = vpack.c.bf16 %v1537, %v1533
  %v1595 = vpack.c.bf16 %v1545, %v1541
  %v1596 = vpack.c.bf16 %v1547, %v1543
  %v1597 = vpack.c.bf16 %v1555, %v1551
  %v1598 = vpack.c.bf16 %v1557, %v1553
  %v1599 = vpack.c.bf16 %v1565, %v1561
  %v1600 = vpack.c.bf16 %v1567, %v1563
  %v1601 = vld [vmem:[%s4] sm:$0xf]
  %v1602 = vld [vmem:[%s4 + $0x4] sm:$0xf]
  %v1603 = vld [vmem:[%s4 + $0x8] sm:$0xf]
  %v1604 = vld [vmem:[%s4 + $0xc] sm:$0xf]
  %v1605 = vld [vmem:[%s4 + $0x10] sm:$0xf]
  %v1606 = vld [vmem:[%s4 + $0x14] sm:$0xf]
  %v1607 = vld [vmem:[%s4 + $0x18] sm:$0xf]
  %v1608 = vld [vmem:[%s4 + $0x1c] sm:$0xf]
  %v1609 = vld [vmem:[%s4 + $0x20] sm:$0xf]
  %v1610 = vld [vmem:[%s4 + $0x24] sm:$0xf]
  %v1611 = vld [vmem:[%s4 + $0x28] sm:$0xf]
  %v1612 = vld [vmem:[%s4 + $0x2c] sm:$0xf]
  %v1613 = vld [vmem:[%s4 + $0x30] sm:$0xf]
  %v1614 = vld [vmem:[%s4 + $0x34] sm:$0xf]
  %v1615 = vld [vmem:[%s4 + $0x38] sm:$0xf]
  %v1616 = vld [vmem:[%s4 + $0x3c] sm:$0xf]
  %v1617 = vld [vmem:[%s4 + $0x40] sm:$0xf]
  %v1618 = vld [vmem:[%s4 + $0x44] sm:$0xf]
  %v1619 = vld [vmem:[%s4 + $0x48] sm:$0xf]
  %v1620 = vld [vmem:[%s4 + $0x4c] sm:$0xf]
  %v1621 = vld [vmem:[%s4 + $0x50] sm:$0xf]
  %v1622 = vld [vmem:[%s4 + $0x54] sm:$0xf]
  %v1623 = vld [vmem:[%s4 + $0x58] sm:$0xf]
  %v1624 = vld [vmem:[%s4 + $0x5c] sm:$0xf]
  %v1625 = vld [vmem:[%s4 + $0x60] sm:$0xf]
  %v1626 = vld [vmem:[%s4 + $0x64] sm:$0xf]
  %v1627 = vld [vmem:[%s4 + $0x68] sm:$0xf]
  %v1628 = vld [vmem:[%s4 + $0x6c] sm:$0xf]
  %v1629 = vld [vmem:[%s4 + $0x70] sm:$0xf]
  %v1630 = vld [vmem:[%s4 + $0x74] sm:$0xf]
  %v1631 = vld [vmem:[%s4 + $0x78] sm:$0xf]
  %v1632 = vld [vmem:[%s4 + $0x7c] sm:$0xf]
  %1634 = vset.pattern.permute.xlu0 0
  %1635 = vperm.xlu0 %1634, %v1601
  %v1636 = vpop.permute.xlu0 %1635
  %v1639 = vunpack.c.l.s4 839922192
  %v1640 = vunpack.c.0.s8 %v1639
  %v1641 = vlaneseq
  %v1642 = vshrl.u32 %v1641, 7
  %v1643 = vsub.s32 %v1640, %v1642
  %v1644 = vrot.slane %v1636, %v1643
  %1646 = vset.pattern.permute.xlu0 0
  %1647 = vperm.xlu0 %1646, %v1602
  %v1648 = vpop.permute.xlu0 %1647
  %v1651 = vunpack.c.l.s4 839922192
  %v1652 = vunpack.c.0.s8 %v1651
  %v1653 = vlaneseq
  %v1654 = vshrl.u32 %v1653, 7
  %v1655 = vsub.s32 %v1652, %v1654
  %v1656 = vrot.slane %v1648, %v1655
  %1658 = vset.pattern.permute.xlu0 0
  %1659 = vperm.xlu0 %1658, %v1603
  %v1660 = vpop.permute.xlu0 %1659
  %v1663 = vunpack.c.l.s4 839922192
  %v1664 = vunpack.c.0.s8 %v1663
  %v1665 = vlaneseq
  %v1666 = vshrl.u32 %v1665, 7
  %v1667 = vsub.s32 %v1664, %v1666
  %v1668 = vrot.slane %v1660, %v1667
  %1670 = vset.pattern.permute.xlu0 0
  %1671 = vperm.xlu0 %1670, %v1604
  %v1672 = vpop.permute.xlu0 %1671
  %v1675 = vunpack.c.l.s4 839922192
  %v1676 = vunpack.c.0.s8 %v1675
  %v1677 = vlaneseq
  %v1678 = vshrl.u32 %v1677, 7
  %v1679 = vsub.s32 %v1676, %v1678
  %v1680 = vrot.slane %v1672, %v1679
  %1682 = vset.pattern.permute.xlu0 0
  %1683 = vperm.xlu0 %1682, %v1605
  %v1684 = vpop.permute.xlu0 %1683
  %v1687 = vunpack.c.l.s4 839922192
  %v1688 = vunpack.c.0.s8 %v1687
  %v1689 = vlaneseq
  %v1690 = vshrl.u32 %v1689, 7
  %v1691 = vsub.s32 %v1688, %v1690
  %v1692 = vrot.slane %v1684, %v1691
  %1694 = vset.pattern.permute.xlu0 0
  %1695 = vperm.xlu0 %1694, %v1606
  %v1696 = vpop.permute.xlu0 %1695
  %v1699 = vunpack.c.l.s4 839922192
  %v1700 = vunpack.c.0.s8 %v1699
  %v1701 = vlaneseq
  %v1702 = vshrl.u32 %v1701, 7
  %v1703 = vsub.s32 %v1700, %v1702
  %v1704 = vrot.slane %v1696, %v1703
  %1706 = vset.pattern.permute.xlu0 0
  %1707 = vperm.xlu0 %1706, %v1607
  %v1708 = vpop.permute.xlu0 %1707
  %v1711 = vunpack.c.l.s4 839922192
  %v1712 = vunpack.c.0.s8 %v1711
  %v1713 = vlaneseq
  %v1714 = vshrl.u32 %v1713, 7
  %v1715 = vsub.s32 %v1712, %v1714
  %v1716 = vrot.slane %v1708, %v1715
  %1718 = vset.pattern.permute.xlu0 0
  %1719 = vperm.xlu0 %1718, %v1608
  %v1720 = vpop.permute.xlu0 %1719
  %v1723 = vunpack.c.l.s4 839922192
  %v1724 = vunpack.c.0.s8 %v1723
  %v1725 = vlaneseq
  %v1726 = vshrl.u32 %v1725, 7
  %v1727 = vsub.s32 %v1724, %v1726
  %v1728 = vrot.slane %v1720, %v1727
  %1730 = vset.pattern.permute.xlu0 0
  %1731 = vperm.xlu0 %1730, %v1609
  %v1732 = vpop.permute.xlu0 %1731
  %v1735 = vunpack.c.l.s4 839922192
  %v1736 = vunpack.c.0.s8 %v1735
  %v1737 = vlaneseq
  %v1738 = vshrl.u32 %v1737, 7
  %v1739 = vsub.s32 %v1736, %v1738
  %v1740 = vrot.slane %v1732, %v1739
  %1742 = vset.pattern.permute.xlu0 0
  %1743 = vperm.xlu0 %1742, %v1610
  %v1744 = vpop.permute.xlu0 %1743
  %v1747 = vunpack.c.l.s4 839922192
  %v1748 = vunpack.c.0.s8 %v1747
  %v1749 = vlaneseq
  %v1750 = vshrl.u32 %v1749, 7
  %v1751 = vsub.s32 %v1748, %v1750
  %v1752 = vrot.slane %v1744, %v1751
  %1754 = vset.pattern.permute.xlu0 0
  %1755 = vperm.xlu0 %1754, %v1611
  %v1756 = vpop.permute.xlu0 %1755
  %v1759 = vunpack.c.l.s4 839922192
  %v1760 = vunpack.c.0.s8 %v1759
  %v1761 = vlaneseq
  %v1762 = vshrl.u32 %v1761, 7
  %v1763 = vsub.s32 %v1760, %v1762
  %v1764 = vrot.slane %v1756, %v1763
  %1766 = vset.pattern.permute.xlu0 0
  %1767 = vperm.xlu0 %1766, %v1612
  %v1768 = vpop.permute.xlu0 %1767
  %v1771 = vunpack.c.l.s4 839922192
  %v1772 = vunpack.c.0.s8 %v1771
  %v1773 = vlaneseq
  %v1774 = vshrl.u32 %v1773, 7
  %v1775 = vsub.s32 %v1772, %v1774
  %v1776 = vrot.slane %v1768, %v1775
  %1778 = vset.pattern.permute.xlu0 0
  %1779 = vperm.xlu0 %1778, %v1613
  %v1780 = vpop.permute.xlu0 %1779
  %v1783 = vunpack.c.l.s4 839922192
  %v1784 = vunpack.c.0.s8 %v1783
  %v1785 = vlaneseq
  %v1786 = vshrl.u32 %v1785, 7
  %v1787 = vsub.s32 %v1784, %v1786
  %v1788 = vrot.slane %v1780, %v1787
  %1790 = vset.pattern.permute.xlu0 0
  %1791 = vperm.xlu0 %1790, %v1614
  %v1792 = vpop.permute.xlu0 %1791
  %v1795 = vunpack.c.l.s4 839922192
  %v1796 = vunpack.c.0.s8 %v1795
  %v1797 = vlaneseq
  %v1798 = vshrl.u32 %v1797, 7
  %v1799 = vsub.s32 %v1796, %v1798
  %v1800 = vrot.slane %v1792, %v1799
  %1802 = vset.pattern.permute.xlu0 0
  %1803 = vperm.xlu0 %1802, %v1615
  %v1804 = vpop.permute.xlu0 %1803
  %v1807 = vunpack.c.l.s4 839922192
  %v1808 = vunpack.c.0.s8 %v1807
  %v1809 = vlaneseq
  %v1810 = vshrl.u32 %v1809, 7
  %v1811 = vsub.s32 %v1808, %v1810
  %v1812 = vrot.slane %v1804, %v1811
  %1814 = vset.pattern.permute.xlu0 0
  %1815 = vperm.xlu0 %1814, %v1616
  %v1816 = vpop.permute.xlu0 %1815
  %v1819 = vunpack.c.l.s4 839922192
  %v1820 = vunpack.c.0.s8 %v1819
  %v1821 = vlaneseq
  %v1822 = vshrl.u32 %v1821, 7
  %v1823 = vsub.s32 %v1820, %v1822
  %v1824 = vrot.slane %v1816, %v1823
  %1826 = vset.pattern.permute.xlu0 0
  %1827 = vperm.xlu0 %1826, %v1617
  %v1828 = vpop.permute.xlu0 %1827
  %v1831 = vunpack.c.l.s4 839922192
  %v1832 = vunpack.c.0.s8 %v1831
  %v1833 = vlaneseq
  %v1834 = vshrl.u32 %v1833, 7
  %v1835 = vsub.s32 %v1832, %v1834
  %v1836 = vrot.slane %v1828, %v1835
  %1838 = vset.pattern.permute.xlu0 0
  %1839 = vperm.xlu0 %1838, %v1618
  %v1840 = vpop.permute.xlu0 %1839
  %v1843 = vunpack.c.l.s4 839922192
  %v1844 = vunpack.c.0.s8 %v1843
  %v1845 = vlaneseq
  %v1846 = vshrl.u32 %v1845, 7
  %v1847 = vsub.s32 %v1844, %v1846
  %v1848 = vrot.slane %v1840, %v1847
  %1850 = vset.pattern.permute.xlu0 0
  %1851 = vperm.xlu0 %1850, %v1619
  %v1852 = vpop.permute.xlu0 %1851
  %v1855 = vunpack.c.l.s4 839922192
  %v1856 = vunpack.c.0.s8 %v1855
  %v1857 = vlaneseq
  %v1858 = vshrl.u32 %v1857, 7
  %v1859 = vsub.s32 %v1856, %v1858
  %v1860 = vrot.slane %v1852, %v1859
  %1862 = vset.pattern.permute.xlu0 0
  %1863 = vperm.xlu0 %1862, %v1620
  %v1864 = vpop.permute.xlu0 %1863
  %v1867 = vunpack.c.l.s4 839922192
  %v1868 = vunpack.c.0.s8 %v1867
  %v1869 = vlaneseq
  %v1870 = vshrl.u32 %v1869, 7
  %v1871 = vsub.s32 %v1868, %v1870
  %v1872 = vrot.slane %v1864, %v1871
  %1874 = vset.pattern.permute.xlu0 0
  %1875 = vperm.xlu0 %1874, %v1621
  %v1876 = vpop.permute.xlu0 %1875
  %v1879 = vunpack.c.l.s4 839922192
  %v1880 = vunpack.c.0.s8 %v1879
  %v1881 = vlaneseq
  %v1882 = vshrl.u32 %v1881, 7
  %v1883 = vsub.s32 %v1880, %v1882
  %v1884 = vrot.slane %v1876, %v1883
  %1886 = vset.pattern.permute.xlu0 0
  %1887 = vperm.xlu0 %1886, %v1622
  %v1888 = vpop.permute.xlu0 %1887
  %v1891 = vunpack.c.l.s4 839922192
  %v1892 = vunpack.c.0.s8 %v1891
  %v1893 = vlaneseq
  %v1894 = vshrl.u32 %v1893, 7
  %v1895 = vsub.s32 %v1892, %v1894
  %v1896 = vrot.slane %v1888, %v1895
  %1898 = vset.pattern.permute.xlu0 0
  %1899 = vperm.xlu0 %1898, %v1623
  %v1900 = vpop.permute.xlu0 %1899
  %v1903 = vunpack.c.l.s4 839922192
  %v1904 = vunpack.c.0.s8 %v1903
  %v1905 = vlaneseq
  %v1906 = vshrl.u32 %v1905, 7
  %v1907 = vsub.s32 %v1904, %v1906
  %v1908 = vrot.slane %v1900, %v1907
  %1910 = vset.pattern.permute.xlu0 0
  %1911 = vperm.xlu0 %1910, %v1624
  %v1912 = vpop.permute.xlu0 %1911
  %v1915 = vunpack.c.l.s4 839922192
  %v1916 = vunpack.c.0.s8 %v1915
  %v1917 = vlaneseq
  %v1918 = vshrl.u32 %v1917, 7
  %v1919 = vsub.s32 %v1916, %v1918
  %v1920 = vrot.slane %v1912, %v1919
  %1922 = vset.pattern.permute.xlu0 0
  %1923 = vperm.xlu0 %1922, %v1625
  %v1924 = vpop.permute.xlu0 %1923
  %v1927 = vunpack.c.l.s4 839922192
  %v1928 = vunpack.c.0.s8 %v1927
  %v1929 = vlaneseq
  %v1930 = vshrl.u32 %v1929, 7
  %v1931 = vsub.s32 %v1928, %v1930
  %v1932 = vrot.slane %v1924, %v1931
  %1934 = vset.pattern.permute.xlu0 0
  %1935 = vperm.xlu0 %1934, %v1626
  %v1936 = vpop.permute.xlu0 %1935
  %v1939 = vunpack.c.l.s4 839922192
  %v1940 = vunpack.c.0.s8 %v1939
  %v1941 = vlaneseq
  %v1942 = vshrl.u32 %v1941, 7
  %v1943 = vsub.s32 %v1940, %v1942
  %v1944 = vrot.slane %v1936, %v1943
  %1946 = vset.pattern.permute.xlu0 0
  %1947 = vperm.xlu0 %1946, %v1627
  %v1948 = vpop.permute.xlu0 %1947
  %v1951 = vunpack.c.l.s4 839922192
  %v1952 = vunpack.c.0.s8 %v1951
  %v1953 = vlaneseq
  %v1954 = vshrl.u32 %v1953, 7
  %v1955 = vsub.s32 %v1952, %v1954
  %v1956 = vrot.slane %v1948, %v1955
  %1958 = vset.pattern.permute.xlu0 0
  %1959 = vperm.xlu0 %1958, %v1628
  %v1960 = vpop.permute.xlu0 %1959
  %v1963 = vunpack.c.l.s4 839922192
  %v1964 = vunpack.c.0.s8 %v1963
  %v1965 = vlaneseq
  %v1966 = vshrl.u32 %v1965, 7
  %v1967 = vsub.s32 %v1964, %v1966
  %v1968 = vrot.slane %v1960, %v1967
  %1970 = vset.pattern.permute.xlu0 0
  %1971 = vperm.xlu0 %1970, %v1629
  %v1972 = vpop.permute.xlu0 %1971
  %v1975 = vunpack.c.l.s4 839922192
  %v1976 = vunpack.c.0.s8 %v1975
  %v1977 = vlaneseq
  %v1978 = vshrl.u32 %v1977, 7
  %v1979 = vsub.s32 %v1976, %v1978
  %v1980 = vrot.slane %v1972, %v1979
  %1982 = vset.pattern.permute.xlu0 0
  %1983 = vperm.xlu0 %1982, %v1630
  %v1984 = vpop.permute.xlu0 %1983
  %v1987 = vunpack.c.l.s4 839922192
  %v1988 = vunpack.c.0.s8 %v1987
  %v1989 = vlaneseq
  %v1990 = vshrl.u32 %v1989, 7
  %v1991 = vsub.s32 %v1988, %v1990
  %v1992 = vrot.slane %v1984, %v1991
  %1994 = vset.pattern.permute.xlu0 0
  %1995 = vperm.xlu0 %1994, %v1631
  %v1996 = vpop.permute.xlu0 %1995
  %v1999 = vunpack.c.l.s4 839922192
  %v2000 = vunpack.c.0.s8 %v1999
  %v2001 = vlaneseq
  %v2002 = vshrl.u32 %v2001, 7
  %v2003 = vsub.s32 %v2000, %v2002
  %v2004 = vrot.slane %v1996, %v2003
  %2006 = vset.pattern.permute.xlu0 0
  %2007 = vperm.xlu0 %2006, %v1632
  %v2008 = vpop.permute.xlu0 %2007
  %v2011 = vunpack.c.l.s4 839922192
  %v2012 = vunpack.c.0.s8 %v2011
  %v2013 = vlaneseq
  %v2014 = vshrl.u32 %v2013, 7
  %v2015 = vsub.s32 %v2012, %v2014
  %v2016 = vrot.slane %v2008, %v2015
  %v2049 = vunpack.c.l.b16 %v1644
  %v2050 = vunpack.c.l.b16 %v1656
  %v2051 = vunpack.c.l.b16 %v1668
  %v2052 = vunpack.c.l.b16 %v1680
  %v2053 = vunpack.c.l.b16 %v1692
  %v2054 = vunpack.c.l.b16 %v1704
  %v2055 = vunpack.c.l.b16 %v1716
  %v2056 = vunpack.c.l.b16 %v1728
  %v2057 = vunpack.c.l.b16 %v1740
  %v2058 = vunpack.c.l.b16 %v1752
  %v2059 = vunpack.c.l.b16 %v1764
  %v2060 = vunpack.c.l.b16 %v1776
  %v2061 = vunpack.c.l.b16 %v1788
  %v2062 = vunpack.c.l.b16 %v1800
  %v2063 = vunpack.c.l.b16 %v1812
  %v2064 = vunpack.c.l.b16 %v1824
  %v2065 = vunpack.c.l.b16 %v1836
  %v2066 = vunpack.c.l.b16 %v1848
  %v2067 = vunpack.c.l.b16 %v1860
  %v2068 = vunpack.c.l.b16 %v1872
  %v2069 = vunpack.c.l.b16 %v1884
  %v2070 = vunpack.c.l.b16 %v1896
  %v2071 = vunpack.c.l.b16 %v1908
  %v2072 = vunpack.c.l.b16 %v1920
  %v2073 = vunpack.c.l.b16 %v1932
  %v2074 = vunpack.c.l.b16 %v1944
  %v2075 = vunpack.c.l.b16 %v1956
  %v2076 = vunpack.c.l.b16 %v1968
  %v2077 = vunpack.c.l.b16 %v1980
  %v2078 = vunpack.c.l.b16 %v1992
  %v2079 = vunpack.c.l.b16 %v2004
  %v2080 = vunpack.c.l.b16 %v2016
  %v2081 = vpack.c.b16 %v2050, %v2049
  %v2082 = vpack.c.b16 %v2052, %v2051
  %v2083 = vpack.c.b16 %v2054, %v2053
  %v2084 = vpack.c.b16 %v2056, %v2055
  %v2085 = vpack.c.b16 %v2058, %v2057
  %v2086 = vpack.c.b16 %v2060, %v2059
  %v2087 = vpack.c.b16 %v2062, %v2061
  %v2088 = vpack.c.b16 %v2064, %v2063
  %v2089 = vpack.c.b16 %v2066, %v2065
  %v2090 = vpack.c.b16 %v2068, %v2067
  %v2091 = vpack.c.b16 %v2070, %v2069
  %v2092 = vpack.c.b16 %v2072, %v2071
  %v2093 = vpack.c.b16 %v2074, %v2073
  %v2094 = vpack.c.b16 %v2076, %v2075
  %v2095 = vpack.c.b16 %v2078, %v2077
  %v2096 = vpack.c.b16 %v2080, %v2079
  %v2113 = vadd.bf16 %v1569, %v2081
  %v2114 = vadd.bf16 %v1570, %v2081
  %v2115 = vadd.bf16 %v1571, %v2082
  %v2116 = vadd.bf16 %v1572, %v2082
  %v2117 = vadd.bf16 %v1573, %v2083
  %v2118 = vadd.bf16 %v1574, %v2083
  %v2119 = vadd.bf16 %v1575, %v2084
  %v2120 = vadd.bf16 %v1576, %v2084
  %v2121 = vadd.bf16 %v1577, %v2085
  %v2122 = vadd.bf16 %v1578, %v2085
  %v2123 = vadd.bf16 %v1579, %v2086
  %v2124 = vadd.bf16 %v1580, %v2086
  %v2125 = vadd.bf16 %v1581, %v2087
  %v2126 = vadd.bf16 %v1582, %v2087
  %v2127 = vadd.bf16 %v1583, %v2088
  %v2128 = vadd.bf16 %v1584, %v2088
  %v2129 = vadd.bf16 %v1585, %v2089
  %v2130 = vadd.bf16 %v1586, %v2089
  %v2131 = vadd.bf16 %v1587, %v2090
  %v2132 = vadd.bf16 %v1588, %v2090
  %v2133 = vadd.bf16 %v1589, %v2091
  %v2134 = vadd.bf16 %v1590, %v2091
  %v2135 = vadd.bf16 %v1591, %v2092
  %v2136 = vadd.bf16 %v1592, %v2092
  %v2137 = vadd.bf16 %v1593, %v2093
  %v2138 = vadd.bf16 %v1594, %v2093
  %v2139 = vadd.bf16 %v1595, %v2094
  %v2140 = vadd.bf16 %v1596, %v2094
  %v2141 = vadd.bf16 %v1597, %v2095
  %v2142 = vadd.bf16 %v1598, %v2095
  %v2143 = vadd.bf16 %v1599, %v2096
  %v2144 = vadd.bf16 %v1600, %v2096
  %v2145 = vmax.bf16 %v2113, 0
  %v2146 = vmax.bf16 %v2114, 0
  %v2147 = vmax.bf16 %v2115, 0
  %v2148 = vmax.bf16 %v2116, 0
  %v2149 = vmax.bf16 %v2117, 0
  %v2150 = vmax.bf16 %v2118, 0
  %v2151 = vmax.bf16 %v2119, 0
  %v2152 = vmax.bf16 %v2120, 0
  %v2153 = vmax.bf16 %v2121, 0
  %v2154 = vmax.bf16 %v2122, 0
  %v2155 = vmax.bf16 %v2123, 0
  %v2156 = vmax.bf16 %v2124, 0
  %v2157 = vmax.bf16 %v2125, 0
  %v2158 = vmax.bf16 %v2126, 0
  %v2159 = vmax.bf16 %v2127, 0
  %v2160 = vmax.bf16 %v2128, 0
  %v2161 = vmax.bf16 %v2129, 0
  %v2162 = vmax.bf16 %v2130, 0
  %v2163 = vmax.bf16 %v2131, 0
  %v2164 = vmax.bf16 %v2132, 0
  %v2165 = vmax.bf16 %v2133, 0
  %v2166 = vmax.bf16 %v2134, 0
  %v2167 = vmax.bf16 %v2135, 0
  %v2168 = vmax.bf16 %v2136, 0
  %v2169 = vmax.bf16 %v2137, 0
  %v2170 = vmax.bf16 %v2138, 0
  %v2171 = vmax.bf16 %v2139, 0
  %v2172 = vmax.bf16 %v2140, 0
  %v2173 = vmax.bf16 %v2141, 0
  %v2174 = vmax.bf16 %v2142, 0
  %v2175 = vmax.bf16 %v2143, 0
  %v2176 = vmax.bf16 %v2144, 0
  %v2177 = vsub.bf16 0, %v2145
  %v2178 = vsub.bf16 0, %v2146
  %v2179 = vsub.bf16 0, %v2147
  %v2180 = vsub.bf16 0, %v2148
  %v2181 = vsub.bf16 0, %v2149
  %v2182 = vsub.bf16 0, %v2150
  %v2183 = vsub.bf16 0, %v2151
  %v2184 = vsub.bf16 0, %v2152
  %v2185 = vsub.bf16 0, %v2153
  %v2186 = vsub.bf16 0, %v2154
  %v2187 = vsub.bf16 0, %v2155
  %v2188 = vsub.bf16 0, %v2156
  %v2189 = vsub.bf16 0, %v2157
  %v2190 = vsub.bf16 0, %v2158
  %v2191 = vsub.bf16 0, %v2159
  %v2192 = vsub.bf16 0, %v2160
  %v2193 = vsub.bf16 0, %v2161
  %v2194 = vsub.bf16 0, %v2162
  %v2195 = vsub.bf16 0, %v2163
  %v2196 = vsub.bf16 0, %v2164
  %v2197 = vsub.bf16 0, %v2165
  %v2198 = vsub.bf16 0, %v2166
  %v2199 = vsub.bf16 0, %v2167
  %v2200 = vsub.bf16 0, %v2168
  %v2201 = vsub.bf16 0, %v2169
  %v2202 = vsub.bf16 0, %v2170
  %v2203 = vsub.bf16 0, %v2171
  %v2204 = vsub.bf16 0, %v2172
  %v2205 = vsub.bf16 0, %v2173
  %v2206 = vsub.bf16 0, %v2174
  %v2207 = vsub.bf16 0, %v2175
  %v2208 = vsub.bf16 0, %v2176
  %v2210 = vmul.bf16 %v2177, 1069105081
  %v2211 = vpow.bf16.pop %v2210
  %v2213 = vmul.bf16 %v2178, 1069105081
  %v2214 = vpow.bf16.pop %v2213
  %v2216 = vmul.bf16 %v2179, 1069105081
  %v2217 = vpow.bf16.pop %v2216
  %v2219 = vmul.bf16 %v2180, 1069105081
  %v2220 = vpow.bf16.pop %v2219
  %v2222 = vmul.bf16 %v2181, 1069105081
  %v2223 = vpow.bf16.pop %v2222
  %v2225 = vmul.bf16 %v2182, 1069105081
  %v2226 = vpow.bf16.pop %v2225
  %v2228 = vmul.bf16 %v2183, 1069105081
  %v2229 = vpow.bf16.pop %v2228
  %v2231 = vmul.bf16 %v2184, 1069105081
  %v2232 = vpow.bf16.pop %v2231
  %v2234 = vmul.bf16 %v2185, 1069105081
  %v2235 = vpow.bf16.pop %v2234
  %v2237 = vmul.bf16 %v2186, 1069105081
  %v2238 = vpow.bf16.pop %v2237
  %v2240 = vmul.bf16 %v2187, 1069105081
  %v2241 = vpow.bf16.pop %v2240
  %v2243 = vmul.bf16 %v2188, 1069105081
  %v2244 = vpow.bf16.pop %v2243
  %v2246 = vmul.bf16 %v2189, 1069105081
  %v2247 = vpow.bf16.pop %v2246
  %v2249 = vmul.bf16 %v2190, 1069105081
  %v2250 = vpow.bf16.pop %v2249
  %v2252 = vmul.bf16 %v2191, 1069105081
  %v2253 = vpow.bf16.pop %v2252
  %v2255 = vmul.bf16 %v2192, 1069105081
  %v2256 = vpow.bf16.pop %v2255
  %v2258 = vmul.bf16 %v2193, 1069105081
  %v2259 = vpow.bf16.pop %v2258
  %v2261 = vmul.bf16 %v2194, 1069105081
  %v2262 = vpow.bf16.pop %v2261
  %v2264 = vmul.bf16 %v2195, 1069105081
  %v2265 = vpow.bf16.pop %v2264
  %v2267 = vmul.bf16 %v2196, 1069105081
  %v2268 = vpow.bf16.pop %v2267
  %v2270 = vmul.bf16 %v2197, 1069105081
  %v2271 = vpow.bf16.pop %v2270
  %v2273 = vmul.bf16 %v2198, 1069105081
  %v2274 = vpow.bf16.pop %v2273
  %v2276 = vmul.bf16 %v2199, 1069105081
  %v2277 = vpow.bf16.pop %v2276
  %v2279 = vmul.bf16 %v2200, 1069105081
  %v2280 = vpow.bf16.pop %v2279
  %v2282 = vmul.bf16 %v2201, 1069105081
  %v2283 = vpow.bf16.pop %v2282
  %v2285 = vmul.bf16 %v2202, 1069105081
  %v2286 = vpow.bf16.pop %v2285
  %v2288 = vmul.bf16 %v2203, 1069105081
  %v2289 = vpow.bf16.pop %v2288
  %v2291 = vmul.bf16 %v2204, 1069105081
  %v2292 = vpow.bf16.pop %v2291
  %v2294 = vmul.bf16 %v2205, 1069105081
  %v2295 = vpow.bf16.pop %v2294
  %v2297 = vmul.bf16 %v2206, 1069105081
  %v2298 = vpow.bf16.pop %v2297
  %v2300 = vmul.bf16 %v2207, 1069105081
  %v2301 = vpow.bf16.pop %v2300
  %v2303 = vmul.bf16 %v2208, 1069105081
  %v2304 = vpow.bf16.pop %v2303
  %v2305 = vadd.bf16 %v2211, 1065369472
  %v2306 = vadd.bf16 %v2214, 1065369472
  %v2307 = vadd.bf16 %v2217, 1065369472
  %v2308 = vadd.bf16 %v2220, 1065369472
  %v2309 = vadd.bf16 %v2223, 1065369472
  %v2310 = vadd.bf16 %v2226, 1065369472
  %v2311 = vadd.bf16 %v2229, 1065369472
  %v2312 = vadd.bf16 %v2232, 1065369472
  %v2313 = vadd.bf16 %v2235, 1065369472
  %v2314 = vadd.bf16 %v2238, 1065369472
  %v2315 = vadd.bf16 %v2241, 1065369472
  %v2316 = vadd.bf16 %v2244, 1065369472
  %v2317 = vadd.bf16 %v2247, 1065369472
  %v2318 = vadd.bf16 %v2250, 1065369472
  %v2319 = vadd.bf16 %v2253, 1065369472
  %v2320 = vadd.bf16 %v2256, 1065369472
  %v2321 = vadd.bf16 %v2259, 1065369472
  %v2322 = vadd.bf16 %v2262, 1065369472
  %v2323 = vadd.bf16 %v2265, 1065369472
  %v2324 = vadd.bf16 %v2268, 1065369472
  %v2325 = vadd.bf16 %v2271, 1065369472
  %v2326 = vadd.bf16 %v2274, 1065369472
  %v2327 = vadd.bf16 %v2277, 1065369472
  %v2328 = vadd.bf16 %v2280, 1065369472
  %v2329 = vadd.bf16 %v2283, 1065369472
  %v2330 = vadd.bf16 %v2286, 1065369472
  %v2331 = vadd.bf16 %v2289, 1065369472
  %v2332 = vadd.bf16 %v2292, 1065369472
  %v2333 = vadd.bf16 %v2295, 1065369472
  %v2334 = vadd.bf16 %v2298, 1065369472
  %v2335 = vadd.bf16 %v2301, 1065369472
  %v2336 = vadd.bf16 %v2304, 1065369472
  %v2337 = vrcp.bf16.pop %v2305
  %v2338 = vmul.bf16 1065369472, %v2337
  %v2339 = vrcp.bf16.pop %v2306
  %v2340 = vmul.bf16 1065369472, %v2339
  %v2341 = vrcp.bf16.pop %v2307
  %v2342 = vmul.bf16 1065369472, %v2341
  %v2343 = vrcp.bf16.pop %v2308
  %v2344 = vmul.bf16 1065369472, %v2343
  %v2345 = vrcp.bf16.pop %v2309
  %v2346 = vmul.bf16 1065369472, %v2345
  %v2347 = vrcp.bf16.pop %v2310
  %v2348 = vmul.bf16 1065369472, %v2347
  %v2349 = vrcp.bf16.pop %v2311
  %v2350 = vmul.bf16 1065369472, %v2349
  %v2351 = vrcp.bf16.pop %v2312
  %v2352 = vmul.bf16 1065369472, %v2351
  %v2353 = vrcp.bf16.pop %v2313
  %v2354 = vmul.bf16 1065369472, %v2353
  %v2355 = vrcp.bf16.pop %v2314
  %v2356 = vmul.bf16 1065369472, %v2355
  %v2357 = vrcp.bf16.pop %v2315
  %v2358 = vmul.bf16 1065369472, %v2357
  %v2359 = vrcp.bf16.pop %v2316
  %v2360 = vmul.bf16 1065369472, %v2359
  %v2361 = vrcp.bf16.pop %v2317
  %v2362 = vmul.bf16 1065369472, %v2361
  %v2363 = vrcp.bf16.pop %v2318
  %v2364 = vmul.bf16 1065369472, %v2363
  %v2365 = vrcp.bf16.pop %v2319
  %v2366 = vmul.bf16 1065369472, %v2365
  %v2367 = vrcp.bf16.pop %v2320
  %v2368 = vmul.bf16 1065369472, %v2367
  %v2369 = vrcp.bf16.pop %v2321
  %v2370 = vmul.bf16 1065369472, %v2369
  %v2371 = vrcp.bf16.pop %v2322
  %v2372 = vmul.bf16 1065369472, %v2371
  %v2373 = vrcp.bf16.pop %v2323
  %v2374 = vmul.bf16 1065369472, %v2373
  %v2375 = vrcp.bf16.pop %v2324
  %v2376 = vmul.bf16 1065369472, %v2375
  %v2377 = vrcp.bf16.pop %v2325
  %v2378 = vmul.bf16 1065369472, %v2377
  %v2379 = vrcp.bf16.pop %v2326
  %v2380 = vmul.bf16 1065369472, %v2379
  %v2381 = vrcp.bf16.pop %v2327
  %v2382 = vmul.bf16 1065369472, %v2381
  %v2383 = vrcp.bf16.pop %v2328
  %v2384 = vmul.bf16 1065369472, %v2383
  %v2385 = vrcp.bf16.pop %v2329
  %v2386 = vmul.bf16 1065369472, %v2385
  %v2387 = vrcp.bf16.pop %v2330
  %v2388 = vmul.bf16 1065369472, %v2387
  %v2389 = vrcp.bf16.pop %v2331
  %v2390 = vmul.bf16 1065369472, %v2389
  %v2391 = vrcp.bf16.pop %v2332
  %v2392 = vmul.bf16 1065369472, %v2391
  %v2393 = vrcp.bf16.pop %v2333
  %v2394 = vmul.bf16 1065369472, %v2393
  %v2395 = vrcp.bf16.pop %v2334
  %v2396 = vmul.bf16 1065369472, %v2395
  %v2397 = vrcp.bf16.pop %v2335
  %v2398 = vmul.bf16 1065369472, %v2397
  %v2399 = vrcp.bf16.pop %v2336
  %v2400 = vmul.bf16 1065369472, %v2399
  %v2402 = vunpack.c.l.b16 %v94
  %v2403 = vunpack.c.h.b16 %v94
  %v2404 = vpack.c.b16 %v2402, %v2402
  %v2405 = vpack.c.b16 %v2403, %v2403
  %2408 = vmatprep.subr.bf16.mxu0 %v2368
  %2409 = vmatpush1.bf16.msra.mxu0 %v2366
  %2410 = vmatprep.subr.bf16.mxu0 %v2364
  %2411 = vmatpush1.bf16.msra.mxu0 %v2362
  %2412 = vmatprep.subr.bf16.mxu0 %v2360
  %2413 = vmatpush1.bf16.msra.mxu0 %v2358
  %2414 = vmatprep.subr.bf16.mxu0 %v2356
  %2415 = vmatpush1.bf16.msra.mxu0 %v2354
  %2416 = vmatprep.subr.bf16.mxu0 %v2352
  %2417 = vmatpush1.bf16.msra.mxu0 %v2350
  %2418 = vmatprep.subr.bf16.mxu0 %v2348
  %2419 = vmatpush1.bf16.msra.mxu0 %v2346
  %2420 = vmatprep.subr.bf16.mxu0 %v2344
  %2421 = vmatpush1.bf16.msra.mxu0 %v2342
  %2422 = vmatprep.subr.bf16.mxu0 %v2340
  %2423 = vmatpush1.bf16.msra.mxu0 %v2338
  %2424 = vmatprep.subr.bf16.mxu0 %v2400
  %2425 = vmatpush2.bf16.msra.mxu0 %v2398
  %2426 = vmatprep.subr.bf16.mxu0 %v2396
  %2427 = vmatpush2.bf16.msra.mxu0 %v2394
  %2428 = vmatprep.subr.bf16.mxu0 %v2392
  %2429 = vmatpush2.bf16.msra.mxu0 %v2390
  %2430 = vmatprep.subr.bf16.mxu0 %v2388
  %2431 = vmatpush2.bf16.msra.mxu0 %v2386
  %2432 = vmatprep.subr.bf16.mxu0 %v2384
  %2433 = vmatpush2.bf16.msra.mxu0 %v2382
  %2434 = vmatprep.subr.bf16.mxu0 %v2380
  %2435 = vmatpush2.bf16.msra.mxu0 %v2378
  %2436 = vmatprep.subr.bf16.mxu0 %v2376
  %2437 = vmatpush2.bf16.msra.mxu0 %v2374
  %2438 = vmatprep.subr.bf16.mxu0 %v2372
  %2439 = vmatpush2.bf16.msra.mxu0 %v2370
  %2440 = vmatprep.mubr.bf16.mxu0 %v2405
  %2441 = vmatmul.mubr.bf16.gmra.mxu0 %v2404
  %v2442 = vpop.f32.mrf.mxu0
  %v2443 = vadd.f32 0.0, %v2442
  %v2444 = vpop.f32.mrf.mxu0
  %v2445 = vadd.f32 0.0, %v2444
  %v2446 = vpop.f32.mrf.mxu0
  %v2447 = vpop.f32.mrf.mxu0
  %2448 = vdwg.mxu0
  %v2449 = vld [vmem:[#allocation2] sm:$0x1]
  %2451 = vset.pattern.permute.xlu0 0
  %2452 = vperm.xlu0 %2451, %v2449
  %v2453 = vpop.permute.xlu0 %2452
  %v2455 = vlaneseq
  %v2456 = vshrl.u32 %v2455, 7
  %v2457 = vsub.s32 0, %v2456
  %v2458 = vrot.slane %v2453, %v2457
  %v2459 = vadd.f32 %v2443, %v2458
  %v2460 = vadd.f32 %v2445, %v2458
  %v2461 = vxor.u32 %v2459, 2147483648
  %v2462 = vxor.u32 %v2460, 2147483648
  %v2463 = vmul.f32 %v2461, 1.442695
  %v2464 = vpow.pop %v2463
  %v2465 = vmul.f32 %v2462, 1.442695
  %v2466 = vpow.pop %v2465
  %v2467 = vadd.f32 %v2464, 1.0
  %v2468 = vadd.f32 %v2466, 1.0
  %v2469 = vrcp.pop %v2467
  %v2470 = vmul.f32 1.0, %v2469
  %v2471 = vrcp.pop %v2468
  %v2472 = vmul.f32 1.0, %v2471
  %v2475 = vcombine.low %v2470, %v2472
  %v2477 = vunpack.c.l.s4 1966171168
  %v2478 = vunpack.c.0.s8 %v2477
  %v2479 = vlaneseq
  %v2480 = vshrl.u32 %v2479, 7
  %v2481 = vsub.s32 %v2478, %v2480
  %v2482 = vrot.slane %v2475, %v2481
  %v2484 = vunpack.c.l.s4 1966171168
  %v2485 = vunpack.c.0.s8 %v2484
  %v2486 = vlaneseq
  %v2487 = vshrl.u32 %v2486, 7
  %v2488 = vsub.s32 %v2485, %v2487
  %v2489 = vrot.slane %v2482, %v2488
  %v2491 = vlaneseq
  %vm2492 = vcmp.ge.s32.totalorder %v2491, 0
  %vm2493 = vcmp.lt.s32.totalorder %v2491, 256
  %vm2494 = vmand %vm2492, %vm2493
  %2495 = vst.msk [vmem:[%s7] sm:$0x3] %vm2494, %v2489
  %s2496 = scalar_lea.vmem %s0, 512
  %v2497 = vld [vmem:[%s2496] sm:$0xff]
  %v2498 = vld [vmem:[%s2496 + $0x8] sm:$0xff]
  %v2499 = vld [vmem:[%s2496 + $0x10] sm:$0xff]
  %v2500 = vld [vmem:[%s2496 + $0x18] sm:$0xff]
  %v2501 = vld [vmem:[%s2496 + $0x20] sm:$0xff]
  %v2502 = vld [vmem:[%s2496 + $0x28] sm:$0xff]
  %v2503 = vld [vmem:[%s2496 + $0x30] sm:$0xff]
  %v2504 = vld [vmem:[%s2496 + $0x38] sm:$0xff]
  %v2505 = vld [vmem:[%s2496 + $0x40] sm:$0xff]
  %v2506 = vld [vmem:[%s2496 + $0x48] sm:$0xff]
  %v2507 = vld [vmem:[%s2496 + $0x50] sm:$0xff]
  %v2508 = vld [vmem:[%s2496 + $0x58] sm:$0xff]
  %v2509 = vld [vmem:[%s2496 + $0x60] sm:$0xff]
  %v2510 = vld [vmem:[%s2496 + $0x68] sm:$0xff]
  %v2511 = vld [vmem:[%s2496 + $0x70] sm:$0xff]
  %v2512 = vld [vmem:[%s2496 + $0x78] sm:$0xff]
  %v2513 = vld [vmem:[%s2496 + $0x80] sm:$0xff]
  %v2514 = vld [vmem:[%s2496 + $0x88] sm:$0xff]
  %v2515 = vld [vmem:[%s2496 + $0x90] sm:$0xff]
  %v2516 = vld [vmem:[%s2496 + $0x98] sm:$0xff]
  %v2517 = vld [vmem:[%s2496 + $0xa0] sm:$0xff]
  %v2518 = vld [vmem:[%s2496 + $0xa8] sm:$0xff]
  %v2519 = vld [vmem:[%s2496 + $0xb0] sm:$0xff]
  %v2520 = vld [vmem:[%s2496 + $0xb8] sm:$0xff]
  %v2521 = vld [vmem:[%s2496 + $0xc0] sm:$0xff]
  %v2522 = vld [vmem:[%s2496 + $0xc8] sm:$0xff]
  %v2523 = vld [vmem:[%s2496 + $0xd0] sm:$0xff]
  %v2524 = vld [vmem:[%s2496 + $0xd8] sm:$0xff]
  %v2525 = vld [vmem:[%s2496 + $0xe0] sm:$0xff]
  %v2526 = vld [vmem:[%s2496 + $0xe8] sm:$0xff]
  %v2527 = vld [vmem:[%s2496 + $0xf0] sm:$0xff]
  %v2528 = vld [vmem:[%s2496 + $0xf8] sm:$0xff]
  %v2529 = vld [vmem:[%s2496 + $0x100] sm:$0xff]
  %v2530 = vld [vmem:[%s2496 + $0x108] sm:$0xff]
  %v2531 = vld [vmem:[%s2496 + $0x110] sm:$0xff]
  %v2532 = vld [vmem:[%s2496 + $0x118] sm:$0xff]
  %v2533 = vld [vmem:[%s2496 + $0x120] sm:$0xff]
  %v2534 = vld [vmem:[%s2496 + $0x128] sm:$0xff]
  %v2535 = vld [vmem:[%s2496 + $0x130] sm:$0xff]
  %v2536 = vld [vmem:[%s2496 + $0x138] sm:$0xff]
  %v2537 = vld [vmem:[%s2496 + $0x140] sm:$0xff]
  %v2538 = vld [vmem:[%s2496 + $0x148] sm:$0xff]
  %v2539 = vld [vmem:[%s2496 + $0x150] sm:$0xff]
  %v2540 = vld [vmem:[%s2496 + $0x158] sm:$0xff]
  %v2541 = vld [vmem:[%s2496 + $0x160] sm:$0xff]
  %v2542 = vld [vmem:[%s2496 + $0x168] sm:$0xff]
  %v2543 = vld [vmem:[%s2496 + $0x170] sm:$0xff]
  %v2544 = vld [vmem:[%s2496 + $0x178] sm:$0xff]
  %v2545 = vld [vmem:[%s2496 + $0x180] sm:$0xff]
  %v2546 = vld [vmem:[%s2496 + $0x188] sm:$0xff]
  %v2547 = vld [vmem:[%s2496 + $0x190] sm:$0xff]
  %v2548 = vld [vmem:[%s2496 + $0x198] sm:$0xff]
  %v2549 = vld [vmem:[%s2496 + $0x1a0] sm:$0xff]
  %v2550 = vld [vmem:[%s2496 + $0x1a8] sm:$0xff]
  %v2551 = vld [vmem:[%s2496 + $0x1b0] sm:$0xff]
  %v2552 = vld [vmem:[%s2496 + $0x1b8] sm:$0xff]
  %v2553 = vld [vmem:[%s2496 + $0x1c0] sm:$0xff]
  %v2554 = vld [vmem:[%s2496 + $0x1c8] sm:$0xff]
  %v2555 = vld [vmem:[%s2496 + $0x1d0] sm:$0xff]
  %v2556 = vld [vmem:[%s2496 + $0x1d8] sm:$0xff]
  %v2557 = vld [vmem:[%s2496 + $0x1e0] sm:$0xff]
  %v2558 = vld [vmem:[%s2496 + $0x1e8] sm:$0xff]
  %v2559 = vld [vmem:[%s2496 + $0x1f0] sm:$0xff]
  %v2560 = vld [vmem:[%s2496 + $0x1f8] sm:$0xff]
  %v2561 = vmax.f32 %v2497, 0.0
  %v2562 = vmax.f32 %v2498, 0.0
  %v2563 = vmax.f32 %v2499, 0.0
  %v2564 = vmax.f32 %v2500, 0.0
  %v2565 = vmax.f32 %v2501, 0.0
  %v2566 = vmax.f32 %v2502, 0.0
  %v2567 = vmax.f32 %v2503, 0.0
  %v2568 = vmax.f32 %v2504, 0.0
  %v2569 = vmax.f32 %v2505, 0.0
  %v2570 = vmax.f32 %v2506, 0.0
  %v2571 = vmax.f32 %v2507, 0.0
  %v2572 = vmax.f32 %v2508, 0.0
  %v2573 = vmax.f32 %v2509, 0.0
  %v2574 = vmax.f32 %v2510, 0.0
  %v2575 = vmax.f32 %v2511, 0.0
  %v2576 = vmax.f32 %v2512, 0.0
  %v2577 = vmax.f32 %v2513, 0.0
  %v2578 = vmax.f32 %v2514, 0.0
  %v2579 = vmax.f32 %v2515, 0.0
  %v2580 = vmax.f32 %v2516, 0.0
  %v2581 = vmax.f32 %v2517, 0.0
  %v2582 = vmax.f32 %v2518, 0.0
  %v2583 = vmax.f32 %v2519, 0.0
  %v2584 = vmax.f32 %v2520, 0.0
  %v2585 = vmax.f32 %v2521, 0.0
  %v2586 = vmax.f32 %v2522, 0.0
  %v2587 = vmax.f32 %v2523, 0.0
  %v2588 = vmax.f32 %v2524, 0.0
  %v2589 = vmax.f32 %v2525, 0.0
  %v2590 = vmax.f32 %v2526, 0.0
  %v2591 = vmax.f32 %v2527, 0.0
  %v2592 = vmax.f32 %v2528, 0.0
  %v2593 = vmax.f32 %v2529, 0.0
  %v2594 = vmax.f32 %v2530, 0.0
  %v2595 = vmax.f32 %v2531, 0.0
  %v2596 = vmax.f32 %v2532, 0.0
  %v2597 = vmax.f32 %v2533, 0.0
  %v2598 = vmax.f32 %v2534, 0.0
  %v2599 = vmax.f32 %v2535, 0.0
  %v2600 = vmax.f32 %v2536, 0.0
  %v2601 = vmax.f32 %v2537, 0.0
  %v2602 = vmax.f32 %v2538, 0.0
  %v2603 = vmax.f32 %v2539, 0.0
  %v2604 = vmax.f32 %v2540, 0.0
  %v2605 = vmax.f32 %v2541, 0.0
  %v2606 = vmax.f32 %v2542, 0.0
  %v2607 = vmax.f32 %v2543, 0.0
  %v2608 = vmax.f32 %v2544, 0.0
  %v2609 = vmax.f32 %v2545, 0.0
  %v2610 = vmax.f32 %v2546, 0.0
  %v2611 = vmax.f32 %v2547, 0.0
  %v2612 = vmax.f32 %v2548, 0.0
  %v2613 = vmax.f32 %v2549, 0.0
  %v2614 = vmax.f32 %v2550, 0.0
  %v2615 = vmax.f32 %v2551, 0.0
  %v2616 = vmax.f32 %v2552, 0.0
  %v2617 = vmax.f32 %v2553, 0.0
  %v2618 = vmax.f32 %v2554, 0.0
  %v2619 = vmax.f32 %v2555, 0.0
  %v2620 = vmax.f32 %v2556, 0.0
  %v2621 = vmax.f32 %v2557, 0.0
  %v2622 = vmax.f32 %v2558, 0.0
  %v2623 = vmax.f32 %v2559, 0.0
  %v2624 = vmax.f32 %v2560, 0.0
  %v2625 = vpack.c.bf16 %v2563, %v2561
  %v2626 = vpack.c.bf16 %v2564, %v2562
  %v2627 = vpack.c.bf16 %v2567, %v2565
  %v2628 = vpack.c.bf16 %v2568, %v2566
  %v2629 = vpack.c.bf16 %v2571, %v2569
  %v2630 = vpack.c.bf16 %v2572, %v2570
  %v2631 = vpack.c.bf16 %v2575, %v2573
  %v2632 = vpack.c.bf16 %v2576, %v2574
  %v2633 = vpack.c.bf16 %v2579, %v2577
  %v2634 = vpack.c.bf16 %v2580, %v2578
  %v2635 = vpack.c.bf16 %v2583, %v2581
  %v2636 = vpack.c.bf16 %v2584, %v2582
  %v2637 = vpack.c.bf16 %v2587, %v2585
  %v2638 = vpack.c.bf16 %v2588, %v2586
  %v2639 = vpack.c.bf16 %v2591, %v2589
  %v2640 = vpack.c.bf16 %v2592, %v2590
  %v2641 = vpack.c.bf16 %v2595, %v2593
  %v2642 = vpack.c.bf16 %v2596, %v2594
  %v2643 = vpack.c.bf16 %v2599, %v2597
  %v2644 = vpack.c.bf16 %v2600, %v2598
  %v2645 = vpack.c.bf16 %v2603, %v2601
  %v2646 = vpack.c.bf16 %v2604, %v2602
  %v2647 = vpack.c.bf16 %v2607, %v2605
  %v2648 = vpack.c.bf16 %v2608, %v2606
  %v2649 = vpack.c.bf16 %v2611, %v2609
  %v2650 = vpack.c.bf16 %v2612, %v2610
  %v2651 = vpack.c.bf16 %v2615, %v2613
  %v2652 = vpack.c.bf16 %v2616, %v2614
  %v2653 = vpack.c.bf16 %v2619, %v2617
  %v2654 = vpack.c.bf16 %v2620, %v2618
  %v2655 = vpack.c.bf16 %v2623, %v2621
  %v2656 = vpack.c.bf16 %v2624, %v2622
  %2657 = vmatprep.subr.bf16.mxu0 %v2640
  %2658 = vmatpush1.bf16.msra.mxu0 %v2639
  %2659 = vmatprep.subr.bf16.mxu0 %v2638
  %2660 = vmatpush1.bf16.msra.mxu0 %v2637
  %2661 = vmatprep.subr.bf16.mxu0 %v2636
  %2662 = vmatpush1.bf16.msra.mxu0 %v2635
  %2663 = vmatprep.subr.bf16.mxu0 %v2634
  %2664 = vmatpush1.bf16.msra.mxu0 %v2633
  %2665 = vmatprep.subr.bf16.mxu0 %v2632
  %2666 = vmatpush1.bf16.msra.mxu0 %v2631
  %2667 = vmatprep.subr.bf16.mxu0 %v2630
  %2668 = vmatpush1.bf16.msra.mxu0 %v2629
  %2669 = vmatprep.subr.bf16.mxu0 %v2628
  %2670 = vmatpush1.bf16.msra.mxu0 %v2627
  %2671 = vmatprep.subr.bf16.mxu0 %v2626
  %2672 = vmatpush1.bf16.msra.mxu0 %v2625
  %2673 = vmatprep.subr.bf16.mxu0 %v2656
  %2674 = vmatpush2.bf16.msra.mxu0 %v2655
  %2675 = vmatprep.subr.bf16.mxu0 %v2654
  %2676 = vmatpush2.bf16.msra.mxu0 %v2653
  %2677 = vmatprep.subr.bf16.mxu0 %v2652
  %2678 = vmatpush2.bf16.msra.mxu0 %v2651
  %2679 = vmatprep.subr.bf16.mxu0 %v2650
  %2680 = vmatpush2.bf16.msra.mxu0 %v2649
  %2681 = vmatprep.subr.bf16.mxu0 %v2648
  %2682 = vmatpush2.bf16.msra.mxu0 %v2647
  %2683 = vmatprep.subr.bf16.mxu0 %v2646
  %2684 = vmatpush2.bf16.msra.mxu0 %v2645
  %2685 = vmatprep.subr.bf16.mxu0 %v2644
  %2686 = vmatpush2.bf16.msra.mxu0 %v2643
  %2687 = vmatprep.subr.bf16.mxu0 %v2642
  %2688 = vmatpush2.bf16.msra.mxu0 %v2641
  %2689 = vmatprep.mubr.bf16.mxu0 %v352
  %2690 = vmatmul.mubr.bf16.gmra.mxu0 %v351
  %v2691 = vpop.f32.mrf.mxu0
  %v2692 = vadd.f32 0.0, %v2691
  %v2693 = vpop.f32.mrf.mxu0
  %v2694 = vadd.f32 0.0, %v2693
  %v2695 = vpop.f32.mrf.mxu0
  %v2696 = vadd.f32 0.0, %v2695
  %v2697 = vpop.f32.mrf.mxu0
  %v2698 = vadd.f32 0.0, %v2697
  %2699 = vmatprep.mubr.bf16.mxu0 %v354
  %2700 = vmatmul.mubr.bf16.gmra.mxu0 %v353
  %v2701 = vpop.f32.mrf.mxu0
  %v2702 = vadd.f32 0.0, %v2701
  %v2703 = vpop.f32.mrf.mxu0
  %v2704 = vadd.f32 0.0, %v2703
  %v2705 = vpop.f32.mrf.mxu0
  %v2706 = vadd.f32 0.0, %v2705
  %v2707 = vpop.f32.mrf.mxu0
  %v2708 = vadd.f32 0.0, %v2707
  %2709 = vmatprep.mubr.bf16.mxu0 %v356
  %2710 = vmatmul.mubr.bf16.gmra.mxu0 %v355
  %v2711 = vpop.f32.mrf.mxu0
  %v2712 = vadd.f32 0.0, %v2711
  %v2713 = vpop.f32.mrf.mxu0
  %v2714 = vadd.f32 0.0, %v2713
  %v2715 = vpop.f32.mrf.mxu0
  %v2716 = vadd.f32 0.0, %v2715
  %v2717 = vpop.f32.mrf.mxu0
  %v2718 = vadd.f32 0.0, %v2717
  %2719 = vmatprep.mubr.bf16.mxu0 %v358
  %2720 = vmatmul.mubr.bf16.gmra.mxu0 %v357
  %v2721 = vpop.f32.mrf.mxu0
  %v2722 = vadd.f32 0.0, %v2721
  %v2723 = vpop.f32.mrf.mxu0
  %v2724 = vadd.f32 0.0, %v2723
  %v2725 = vpop.f32.mrf.mxu0
  %v2726 = vadd.f32 0.0, %v2725
  %v2727 = vpop.f32.mrf.mxu0
  %v2728 = vadd.f32 0.0, %v2727
  %2729 = vmatprep.mubr.bf16.mxu0 %v360
  %2730 = vmatmul.mubr.bf16.gmra.mxu0 %v359
  %v2731 = vpop.f32.mrf.mxu0
  %v2732 = vadd.f32 0.0, %v2731
  %v2733 = vpop.f32.mrf.mxu0
  %v2734 = vadd.f32 0.0, %v2733
  %v2735 = vpop.f32.mrf.mxu0
  %v2736 = vadd.f32 0.0, %v2735
  %v2737 = vpop.f32.mrf.mxu0
  %v2738 = vadd.f32 0.0, %v2737
  %2739 = vmatprep.mubr.bf16.mxu0 %v362
  %2740 = vmatmul.mubr.bf16.gmra.mxu0 %v361
  %v2741 = vpop.f32.mrf.mxu0
  %v2742 = vadd.f32 0.0, %v2741
  %v2743 = vpop.f32.mrf.mxu0
  %v2744 = vadd.f32 0.0, %v2743
  %v2745 = vpop.f32.mrf.mxu0
  %v2746 = vadd.f32 0.0, %v2745
  %v2747 = vpop.f32.mrf.mxu0
  %v2748 = vadd.f32 0.0, %v2747
  %2749 = vmatprep.mubr.bf16.mxu0 %v364
  %2750 = vmatmul.mubr.bf16.gmra.mxu0 %v363
  %v2751 = vpop.f32.mrf.mxu0
  %v2752 = vadd.f32 0.0, %v2751
  %v2753 = vpop.f32.mrf.mxu0
  %v2754 = vadd.f32 0.0, %v2753
  %v2755 = vpop.f32.mrf.mxu0
  %v2756 = vadd.f32 0.0, %v2755
  %v2757 = vpop.f32.mrf.mxu0
  %v2758 = vadd.f32 0.0, %v2757
  %2759 = vmatprep.mubr.bf16.mxu0 %v366
  %2760 = vmatmul.mubr.bf16.gmra.mxu0 %v365
  %v2761 = vpop.f32.mrf.mxu0
  %v2762 = vadd.f32 0.0, %v2761
  %v2763 = vpop.f32.mrf.mxu0
  %v2764 = vadd.f32 0.0, %v2763
  %v2765 = vpop.f32.mrf.mxu0
  %v2766 = vadd.f32 0.0, %v2765
  %v2767 = vpop.f32.mrf.mxu0
  %v2768 = vadd.f32 0.0, %v2767
  %2769 = vmatprep.mubr.bf16.mxu0 %v368
  %2770 = vmatmul.mubr.bf16.gmra.mxu0 %v367
  %v2771 = vpop.f32.mrf.mxu0
  %v2772 = vadd.f32 0.0, %v2771
  %v2773 = vpop.f32.mrf.mxu0
  %v2774 = vadd.f32 0.0, %v2773
  %v2775 = vpop.f32.mrf.mxu0
  %v2776 = vadd.f32 0.0, %v2775
  %v2777 = vpop.f32.mrf.mxu0
  %v2778 = vadd.f32 0.0, %v2777
  %2779 = vmatprep.mubr.bf16.mxu0 %v370
  %2780 = vmatmul.mubr.bf16.gmra.mxu0 %v369
  %v2781 = vpop.f32.mrf.mxu0
  %v2782 = vadd.f32 0.0, %v2781
  %v2783 = vpop.f32.mrf.mxu0
  %v2784 = vadd.f32 0.0, %v2783
  %v2785 = vpop.f32.mrf.mxu0
  %v2786 = vadd.f32 0.0, %v2785
  %v2787 = vpop.f32.mrf.mxu0
  %v2788 = vadd.f32 0.0, %v2787
  %2789 = vmatprep.mubr.bf16.mxu0 %v372
  %2790 = vmatmul.mubr.bf16.gmra.mxu0 %v371
  %v2791 = vpop.f32.mrf.mxu0
  %v2792 = vadd.f32 0.0, %v2791
  %v2793 = vpop.f32.mrf.mxu0
  %v2794 = vadd.f32 0.0, %v2793
  %v2795 = vpop.f32.mrf.mxu0
  %v2796 = vadd.f32 0.0, %v2795
  %v2797 = vpop.f32.mrf.mxu0
  %v2798 = vadd.f32 0.0, %v2797
  %2799 = vmatprep.mubr.bf16.mxu0 %v374
  %2800 = vmatmul.mubr.bf16.gmra.mxu0 %v373
  %v2801 = vpop.f32.mrf.mxu0
  %v2802 = vadd.f32 0.0, %v2801
  %v2803 = vpop.f32.mrf.mxu0
  %v2804 = vadd.f32 0.0, %v2803
  %v2805 = vpop.f32.mrf.mxu0
  %v2806 = vadd.f32 0.0, %v2805
  %v2807 = vpop.f32.mrf.mxu0
  %v2808 = vadd.f32 0.0, %v2807
  %2809 = vmatprep.mubr.bf16.mxu0 %v376
  %2810 = vmatmul.mubr.bf16.gmra.mxu0 %v375
  %v2811 = vpop.f32.mrf.mxu0
  %v2812 = vadd.f32 0.0, %v2811
  %v2813 = vpop.f32.mrf.mxu0
  %v2814 = vadd.f32 0.0, %v2813
  %v2815 = vpop.f32.mrf.mxu0
  %v2816 = vadd.f32 0.0, %v2815
  %v2817 = vpop.f32.mrf.mxu0
  %v2818 = vadd.f32 0.0, %v2817
  %2819 = vmatprep.mubr.bf16.mxu0 %v378
  %2820 = vmatmul.mubr.bf16.gmra.mxu0 %v377
  %v2821 = vpop.f32.mrf.mxu0
  %v2822 = vadd.f32 0.0, %v2821
  %v2823 = vpop.f32.mrf.mxu0
  %v2824 = vadd.f32 0.0, %v2823
  %v2825 = vpop.f32.mrf.mxu0
  %v2826 = vadd.f32 0.0, %v2825
  %v2827 = vpop.f32.mrf.mxu0
  %v2828 = vadd.f32 0.0, %v2827
  %2829 = vmatprep.mubr.bf16.mxu0 %v380
  %2830 = vmatmul.mubr.bf16.gmra.mxu0 %v379
  %v2831 = vpop.f32.mrf.mxu0
  %v2832 = vadd.f32 0.0, %v2831
  %v2833 = vpop.f32.mrf.mxu0
  %v2834 = vadd.f32 0.0, %v2833
  %v2835 = vpop.f32.mrf.mxu0
  %v2836 = vadd.f32 0.0, %v2835
  %v2837 = vpop.f32.mrf.mxu0
  %v2838 = vadd.f32 0.0, %v2837
  %2839 = vmatprep.mubr.bf16.mxu0 %v382
  %2840 = vmatmul.mubr.bf16.gmra.mxu0 %v381
  %v2841 = vpop.f32.mrf.mxu0
  %v2842 = vadd.f32 0.0, %v2841
  %v2843 = vpop.f32.mrf.mxu0
  %v2844 = vadd.f32 0.0, %v2843
  %v2845 = vpop.f32.mrf.mxu0
  %v2846 = vadd.f32 0.0, %v2845
  %v2847 = vpop.f32.mrf.mxu0
  %v2848 = vadd.f32 0.0, %v2847
  %2849 = vdwg.mxu0
  %v2850 = vpack.c.bf16 %v2696, %v2692
  %v2851 = vpack.c.bf16 %v2698, %v2694
  %v2852 = vpack.c.bf16 %v2706, %v2702
  %v2853 = vpack.c.bf16 %v2708, %v2704
  %v2854 = vpack.c.bf16 %v2716, %v2712
  %v2855 = vpack.c.bf16 %v2718, %v2714
  %v2856 = vpack.c.bf16 %v2726, %v2722
  %v2857 = vpack.c.bf16 %v2728, %v2724
  %v2858 = vpack.c.bf16 %v2736, %v2732
  %v2859 = vpack.c.bf16 %v2738, %v2734
  %v2860 = vpack.c.bf16 %v2746, %v2742
  %v2861 = vpack.c.bf16 %v2748, %v2744
  %v2862 = vpack.c.bf16 %v2756, %v2752
  %v2863 = vpack.c.bf16 %v2758, %v2754
  %v2864 = vpack.c.bf16 %v2766, %v2762
  %v2865 = vpack.c.bf16 %v2768, %v2764
  %v2866 = vpack.c.bf16 %v2776, %v2772
  %v2867 = vpack.c.bf16 %v2778, %v2774
  %v2868 = vpack.c.bf16 %v2786, %v2782
  %v2869 = vpack.c.bf16 %v2788, %v2784
  %v2870 = vpack.c.bf16 %v2796, %v2792
  %v2871 = vpack.c.bf16 %v2798, %v2794
  %v2872 = vpack.c.bf16 %v2806, %v2802
  %v2873 = vpack.c.bf16 %v2808, %v2804
  %v2874 = vpack.c.bf16 %v2816, %v2812
  %v2875 = vpack.c.bf16 %v2818, %v2814
  %v2876 = vpack.c.bf16 %v2826, %v2822
  %v2877 = vpack.c.bf16 %v2828, %v2824
  %v2878 = vpack.c.bf16 %v2836, %v2832
  %v2879 = vpack.c.bf16 %v2838, %v2834
  %v2880 = vpack.c.bf16 %v2846, %v2842
  %v2881 = vpack.c.bf16 %v2848, %v2844
  %v2882 = vld [vmem:[%s2] sm:$0xf]
  %v2883 = vld [vmem:[%s2 + $0x4] sm:$0xf]
  %v2884 = vld [vmem:[%s2 + $0x8] sm:$0xf]
  %v2885 = vld [vmem:[%s2 + $0xc] sm:$0xf]
  %v2886 = vld [vmem:[%s2 + $0x10] sm:$0xf]
  %v2887 = vld [vmem:[%s2 + $0x14] sm:$0xf]
  %v2888 = vld [vmem:[%s2 + $0x18] sm:$0xf]
  %v2889 = vld [vmem:[%s2 + $0x1c] sm:$0xf]
  %v2890 = vld [vmem:[%s2 + $0x20] sm:$0xf]
  %v2891 = vld [vmem:[%s2 + $0x24] sm:$0xf]
  %v2892 = vld [vmem:[%s2 + $0x28] sm:$0xf]
  %v2893 = vld [vmem:[%s2 + $0x2c] sm:$0xf]
  %v2894 = vld [vmem:[%s2 + $0x30] sm:$0xf]
  %v2895 = vld [vmem:[%s2 + $0x34] sm:$0xf]
  %v2896 = vld [vmem:[%s2 + $0x38] sm:$0xf]
  %v2897 = vld [vmem:[%s2 + $0x3c] sm:$0xf]
  %v2898 = vld [vmem:[%s2 + $0x40] sm:$0xf]
  %v2899 = vld [vmem:[%s2 + $0x44] sm:$0xf]
  %v2900 = vld [vmem:[%s2 + $0x48] sm:$0xf]
  %v2901 = vld [vmem:[%s2 + $0x4c] sm:$0xf]
  %v2902 = vld [vmem:[%s2 + $0x50] sm:$0xf]
  %v2903 = vld [vmem:[%s2 + $0x54] sm:$0xf]
  %v2904 = vld [vmem:[%s2 + $0x58] sm:$0xf]
  %v2905 = vld [vmem:[%s2 + $0x5c] sm:$0xf]
  %v2906 = vld [vmem:[%s2 + $0x60] sm:$0xf]
  %v2907 = vld [vmem:[%s2 + $0x64] sm:$0xf]
  %v2908 = vld [vmem:[%s2 + $0x68] sm:$0xf]
  %v2909 = vld [vmem:[%s2 + $0x6c] sm:$0xf]
  %v2910 = vld [vmem:[%s2 + $0x70] sm:$0xf]
  %v2911 = vld [vmem:[%s2 + $0x74] sm:$0xf]
  %v2912 = vld [vmem:[%s2 + $0x78] sm:$0xf]
  %v2913 = vld [vmem:[%s2 + $0x7c] sm:$0xf]
  %2915 = vset.pattern.permute.xlu0 0
  %2916 = vperm.xlu0 %2915, %v2882
  %v2917 = vpop.permute.xlu0 %2916
  %v2920 = vunpack.c.l.s4 839922192
  %v2921 = vunpack.c.0.s8 %v2920
  %v2922 = vlaneseq
  %v2923 = vshrl.u32 %v2922, 7
  %v2924 = vsub.s32 %v2921, %v2923
  %v2925 = vrot.slane %v2917, %v2924
  %2927 = vset.pattern.permute.xlu0 0
  %2928 = vperm.xlu0 %2927, %v2883
  %v2929 = vpop.permute.xlu0 %2928
  %v2932 = vunpack.c.l.s4 839922192
  %v2933 = vunpack.c.0.s8 %v2932
  %v2934 = vlaneseq
  %v2935 = vshrl.u32 %v2934, 7
  %v2936 = vsub.s32 %v2933, %v2935
  %v2937 = vrot.slane %v2929, %v2936
  %2939 = vset.pattern.permute.xlu0 0
  %2940 = vperm.xlu0 %2939, %v2884
  %v2941 = vpop.permute.xlu0 %2940
  %v2944 = vunpack.c.l.s4 839922192
  %v2945 = vunpack.c.0.s8 %v2944
  %v2946 = vlaneseq
  %v2947 = vshrl.u32 %v2946, 7
  %v2948 = vsub.s32 %v2945, %v2947
  %v2949 = vrot.slane %v2941, %v2948
  %2951 = vset.pattern.permute.xlu0 0
  %2952 = vperm.xlu0 %2951, %v2885
  %v2953 = vpop.permute.xlu0 %2952
  %v2956 = vunpack.c.l.s4 839922192
  %v2957 = vunpack.c.0.s8 %v2956
  %v2958 = vlaneseq
  %v2959 = vshrl.u32 %v2958, 7
  %v2960 = vsub.s32 %v2957, %v2959
  %v2961 = vrot.slane %v2953, %v2960
  %2963 = vset.pattern.permute.xlu0 0
  %2964 = vperm.xlu0 %2963, %v2886
  %v2965 = vpop.permute.xlu0 %2964
  %v2968 = vunpack.c.l.s4 839922192
  %v2969 = vunpack.c.0.s8 %v2968
  %v2970 = vlaneseq
  %v2971 = vshrl.u32 %v2970, 7
  %v2972 = vsub.s32 %v2969, %v2971
  %v2973 = vrot.slane %v2965, %v2972
  %2975 = vset.pattern.permute.xlu0 0
  %2976 = vperm.xlu0 %2975, %v2887
  %v2977 = vpop.permute.xlu0 %2976
  %v2980 = vunpack.c.l.s4 839922192
  %v2981 = vunpack.c.0.s8 %v2980
  %v2982 = vlaneseq
  %v2983 = vshrl.u32 %v2982, 7
  %v2984 = vsub.s32 %v2981, %v2983
  %v2985 = vrot.slane %v2977, %v2984
  %2987 = vset.pattern.permute.xlu0 0
  %2988 = vperm.xlu0 %2987, %v2888
  %v2989 = vpop.permute.xlu0 %2988
  %v2992 = vunpack.c.l.s4 839922192
  %v2993 = vunpack.c.0.s8 %v2992
  %v2994 = vlaneseq
  %v2995 = vshrl.u32 %v2994, 7
  %v2996 = vsub.s32 %v2993, %v2995
  %v2997 = vrot.slane %v2989, %v2996
  %2999 = vset.pattern.permute.xlu0 0
  %3000 = vperm.xlu0 %2999, %v2889
  %v3001 = vpop.permute.xlu0 %3000
  %v3004 = vunpack.c.l.s4 839922192
  %v3005 = vunpack.c.0.s8 %v3004
  %v3006 = vlaneseq
  %v3007 = vshrl.u32 %v3006, 7
  %v3008 = vsub.s32 %v3005, %v3007
  %v3009 = vrot.slane %v3001, %v3008
  %3011 = vset.pattern.permute.xlu0 0
  %3012 = vperm.xlu0 %3011, %v2890
  %v3013 = vpop.permute.xlu0 %3012
  %v3016 = vunpack.c.l.s4 839922192
  %v3017 = vunpack.c.0.s8 %v3016
  %v3018 = vlaneseq
  %v3019 = vshrl.u32 %v3018, 7
  %v3020 = vsub.s32 %v3017, %v3019
  %v3021 = vrot.slane %v3013, %v3020
  %3023 = vset.pattern.permute.xlu0 0
  %3024 = vperm.xlu0 %3023, %v2891
  %v3025 = vpop.permute.xlu0 %3024
  %v3028 = vunpack.c.l.s4 839922192
  %v3029 = vunpack.c.0.s8 %v3028
  %v3030 = vlaneseq
  %v3031 = vshrl.u32 %v3030, 7
  %v3032 = vsub.s32 %v3029, %v3031
  %v3033 = vrot.slane %v3025, %v3032
  %3035 = vset.pattern.permute.xlu0 0
  %3036 = vperm.xlu0 %3035, %v2892
  %v3037 = vpop.permute.xlu0 %3036
  %v3040 = vunpack.c.l.s4 839922192
  %v3041 = vunpack.c.0.s8 %v3040
  %v3042 = vlaneseq
  %v3043 = vshrl.u32 %v3042, 7
  %v3044 = vsub.s32 %v3041, %v3043
  %v3045 = vrot.slane %v3037, %v3044
  %3047 = vset.pattern.permute.xlu0 0
  %3048 = vperm.xlu0 %3047, %v2893
  %v3049 = vpop.permute.xlu0 %3048
  %v3052 = vunpack.c.l.s4 839922192
  %v3053 = vunpack.c.0.s8 %v3052
  %v3054 = vlaneseq
  %v3055 = vshrl.u32 %v3054, 7
  %v3056 = vsub.s32 %v3053, %v3055
  %v3057 = vrot.slane %v3049, %v3056
  %3059 = vset.pattern.permute.xlu0 0
  %3060 = vperm.xlu0 %3059, %v2894
  %v3061 = vpop.permute.xlu0 %3060
  %v3064 = vunpack.c.l.s4 839922192
  %v3065 = vunpack.c.0.s8 %v3064
  %v3066 = vlaneseq
  %v3067 = vshrl.u32 %v3066, 7
  %v3068 = vsub.s32 %v3065, %v3067
  %v3069 = vrot.slane %v3061, %v3068
  %3071 = vset.pattern.permute.xlu0 0
  %3072 = vperm.xlu0 %3071, %v2895
  %v3073 = vpop.permute.xlu0 %3072
  %v3076 = vunpack.c.l.s4 839922192
  %v3077 = vunpack.c.0.s8 %v3076
  %v3078 = vlaneseq
  %v3079 = vshrl.u32 %v3078, 7
  %v3080 = vsub.s32 %v3077, %v3079
  %v3081 = vrot.slane %v3073, %v3080
  %3083 = vset.pattern.permute.xlu0 0
  %3084 = vperm.xlu0 %3083, %v2896
  %v3085 = vpop.permute.xlu0 %3084
  %v3088 = vunpack.c.l.s4 839922192
  %v3089 = vunpack.c.0.s8 %v3088
  %v3090 = vlaneseq
  %v3091 = vshrl.u32 %v3090, 7
  %v3092 = vsub.s32 %v3089, %v3091
  %v3093 = vrot.slane %v3085, %v3092
  %3095 = vset.pattern.permute.xlu0 0
  %3096 = vperm.xlu0 %3095, %v2897
  %v3097 = vpop.permute.xlu0 %3096
  %v3100 = vunpack.c.l.s4 839922192
  %v3101 = vunpack.c.0.s8 %v3100
  %v3102 = vlaneseq
  %v3103 = vshrl.u32 %v3102, 7
  %v3104 = vsub.s32 %v3101, %v3103
  %v3105 = vrot.slane %v3097, %v3104
  %3107 = vset.pattern.permute.xlu0 0
  %3108 = vperm.xlu0 %3107, %v2898
  %v3109 = vpop.permute.xlu0 %3108
  %v3112 = vunpack.c.l.s4 839922192
  %v3113 = vunpack.c.0.s8 %v3112
  %v3114 = vlaneseq
  %v3115 = vshrl.u32 %v3114, 7
  %v3116 = vsub.s32 %v3113, %v3115
  %v3117 = vrot.slane %v3109, %v3116
  %3119 = vset.pattern.permute.xlu0 0
  %3120 = vperm.xlu0 %3119, %v2899
  %v3121 = vpop.permute.xlu0 %3120
  %v3124 = vunpack.c.l.s4 839922192
  %v3125 = vunpack.c.0.s8 %v3124
  %v3126 = vlaneseq
  %v3127 = vshrl.u32 %v3126, 7
  %v3128 = vsub.s32 %v3125, %v3127
  %v3129 = vrot.slane %v3121, %v3128
  %3131 = vset.pattern.permute.xlu0 0
  %3132 = vperm.xlu0 %3131, %v2900
  %v3133 = vpop.permute.xlu0 %3132
  %v3136 = vunpack.c.l.s4 839922192
  %v3137 = vunpack.c.0.s8 %v3136
  %v3138 = vlaneseq
  %v3139 = vshrl.u32 %v3138, 7
  %v3140 = vsub.s32 %v3137, %v3139
  %v3141 = vrot.slane %v3133, %v3140
  %3143 = vset.pattern.permute.xlu0 0
  %3144 = vperm.xlu0 %3143, %v2901
  %v3145 = vpop.permute.xlu0 %3144
  %v3148 = vunpack.c.l.s4 839922192
  %v3149 = vunpack.c.0.s8 %v3148
  %v3150 = vlaneseq
  %v3151 = vshrl.u32 %v3150, 7
  %v3152 = vsub.s32 %v3149, %v3151
  %v3153 = vrot.slane %v3145, %v3152
  %3155 = vset.pattern.permute.xlu0 0
  %3156 = vperm.xlu0 %3155, %v2902
  %v3157 = vpop.permute.xlu0 %3156
  %v3160 = vunpack.c.l.s4 839922192
  %v3161 = vunpack.c.0.s8 %v3160
  %v3162 = vlaneseq
  %v3163 = vshrl.u32 %v3162, 7
  %v3164 = vsub.s32 %v3161, %v3163
  %v3165 = vrot.slane %v3157, %v3164
  %3167 = vset.pattern.permute.xlu0 0
  %3168 = vperm.xlu0 %3167, %v2903
  %v3169 = vpop.permute.xlu0 %3168
  %v3172 = vunpack.c.l.s4 839922192
  %v3173 = vunpack.c.0.s8 %v3172
  %v3174 = vlaneseq
  %v3175 = vshrl.u32 %v3174, 7
  %v3176 = vsub.s32 %v3173, %v3175
  %v3177 = vrot.slane %v3169, %v3176
  %3179 = vset.pattern.permute.xlu0 0
  %3180 = vperm.xlu0 %3179, %v2904
  %v3181 = vpop.permute.xlu0 %3180
  %v3184 = vunpack.c.l.s4 839922192
  %v3185 = vunpack.c.0.s8 %v3184
  %v3186 = vlaneseq
  %v3187 = vshrl.u32 %v3186, 7
  %v3188 = vsub.s32 %v3185, %v3187
  %v3189 = vrot.slane %v3181, %v3188
  %3191 = vset.pattern.permute.xlu0 0
  %3192 = vperm.xlu0 %3191, %v2905
  %v3193 = vpop.permute.xlu0 %3192
  %v3196 = vunpack.c.l.s4 839922192
  %v3197 = vunpack.c.0.s8 %v3196
  %v3198 = vlaneseq
  %v3199 = vshrl.u32 %v3198, 7
  %v3200 = vsub.s32 %v3197, %v3199
  %v3201 = vrot.slane %v3193, %v3200
  %3203 = vset.pattern.permute.xlu0 0
  %3204 = vperm.xlu0 %3203, %v2906
  %v3205 = vpop.permute.xlu0 %3204
  %v3208 = vunpack.c.l.s4 839922192
  %v3209 = vunpack.c.0.s8 %v3208
  %v3210 = vlaneseq
  %v3211 = vshrl.u32 %v3210, 7
  %v3212 = vsub.s32 %v3209, %v3211
  %v3213 = vrot.slane %v3205, %v3212
  %3215 = vset.pattern.permute.xlu0 0
  %3216 = vperm.xlu0 %3215, %v2907
  %v3217 = vpop.permute.xlu0 %3216
  %v3220 = vunpack.c.l.s4 839922192
  %v3221 = vunpack.c.0.s8 %v3220
  %v3222 = vlaneseq
  %v3223 = vshrl.u32 %v3222, 7
  %v3224 = vsub.s32 %v3221, %v3223
  %v3225 = vrot.slane %v3217, %v3224
  %3227 = vset.pattern.permute.xlu0 0
  %3228 = vperm.xlu0 %3227, %v2908
  %v3229 = vpop.permute.xlu0 %3228
  %v3232 = vunpack.c.l.s4 839922192
  %v3233 = vunpack.c.0.s8 %v3232
  %v3234 = vlaneseq
  %v3235 = vshrl.u32 %v3234, 7
  %v3236 = vsub.s32 %v3233, %v3235
  %v3237 = vrot.slane %v3229, %v3236
  %3239 = vset.pattern.permute.xlu0 0
  %3240 = vperm.xlu0 %3239, %v2909
  %v3241 = vpop.permute.xlu0 %3240
  %v3244 = vunpack.c.l.s4 839922192
  %v3245 = vunpack.c.0.s8 %v3244
  %v3246 = vlaneseq
  %v3247 = vshrl.u32 %v3246, 7
  %v3248 = vsub.s32 %v3245, %v3247
  %v3249 = vrot.slane %v3241, %v3248
  %3251 = vset.pattern.permute.xlu0 0
  %3252 = vperm.xlu0 %3251, %v2910
  %v3253 = vpop.permute.xlu0 %3252
  %v3256 = vunpack.c.l.s4 839922192
  %v3257 = vunpack.c.0.s8 %v3256
  %v3258 = vlaneseq
  %v3259 = vshrl.u32 %v3258, 7
  %v3260 = vsub.s32 %v3257, %v3259
  %v3261 = vrot.slane %v3253, %v3260
  %3263 = vset.pattern.permute.xlu0 0
  %3264 = vperm.xlu0 %3263, %v2911
  %v3265 = vpop.permute.xlu0 %3264
  %v3268 = vunpack.c.l.s4 839922192
  %v3269 = vunpack.c.0.s8 %v3268
  %v3270 = vlaneseq
  %v3271 = vshrl.u32 %v3270, 7
  %v3272 = vsub.s32 %v3269, %v3271
  %v3273 = vrot.slane %v3265, %v3272
  %3275 = vset.pattern.permute.xlu0 0
  %3276 = vperm.xlu0 %3275, %v2912
  %v3277 = vpop.permute.xlu0 %3276
  %v3280 = vunpack.c.l.s4 839922192
  %v3281 = vunpack.c.0.s8 %v3280
  %v3282 = vlaneseq
  %v3283 = vshrl.u32 %v3282, 7
  %v3284 = vsub.s32 %v3281, %v3283
  %v3285 = vrot.slane %v3277, %v3284
  %3287 = vset.pattern.permute.xlu0 0
  %3288 = vperm.xlu0 %3287, %v2913
  %v3289 = vpop.permute.xlu0 %3288
  %v3292 = vunpack.c.l.s4 839922192
  %v3293 = vunpack.c.0.s8 %v3292
  %v3294 = vlaneseq
  %v3295 = vshrl.u32 %v3294, 7
  %v3296 = vsub.s32 %v3293, %v3295
  %v3297 = vrot.slane %v3289, %v3296
  %v3330 = vunpack.c.l.b16 %v2925
  %v3331 = vunpack.c.l.b16 %v2937
  %v3332 = vunpack.c.l.b16 %v2949
  %v3333 = vunpack.c.l.b16 %v2961
  %v3334 = vunpack.c.l.b16 %v2973
  %v3335 = vunpack.c.l.b16 %v2985
  %v3336 = vunpack.c.l.b16 %v2997
  %v3337 = vunpack.c.l.b16 %v3009
  %v3338 = vunpack.c.l.b16 %v3021
  %v3339 = vunpack.c.l.b16 %v3033
  %v3340 = vunpack.c.l.b16 %v3045
  %v3341 = vunpack.c.l.b16 %v3057
  %v3342 = vunpack.c.l.b16 %v3069
  %v3343 = vunpack.c.l.b16 %v3081
  %v3344 = vunpack.c.l.b16 %v3093
  %v3345 = vunpack.c.l.b16 %v3105
  %v3346 = vunpack.c.l.b16 %v3117
  %v3347 = vunpack.c.l.b16 %v3129
  %v3348 = vunpack.c.l.b16 %v3141
  %v3349 = vunpack.c.l.b16 %v3153
  %v3350 = vunpack.c.l.b16 %v3165
  %v3351 = vunpack.c.l.b16 %v3177
  %v3352 = vunpack.c.l.b16 %v3189
  %v3353 = vunpack.c.l.b16 %v3201
  %v3354 = vunpack.c.l.b16 %v3213
  %v3355 = vunpack.c.l.b16 %v3225
  %v3356 = vunpack.c.l.b16 %v3237
  %v3357 = vunpack.c.l.b16 %v3249
  %v3358 = vunpack.c.l.b16 %v3261
  %v3359 = vunpack.c.l.b16 %v3273
  %v3360 = vunpack.c.l.b16 %v3285
  %v3361 = vunpack.c.l.b16 %v3297
  %v3362 = vpack.c.b16 %v3331, %v3330
  %v3363 = vpack.c.b16 %v3333, %v3332
  %v3364 = vpack.c.b16 %v3335, %v3334
  %v3365 = vpack.c.b16 %v3337, %v3336
  %v3366 = vpack.c.b16 %v3339, %v3338
  %v3367 = vpack.c.b16 %v3341, %v3340
  %v3368 = vpack.c.b16 %v3343, %v3342
  %v3369 = vpack.c.b16 %v3345, %v3344
  %v3370 = vpack.c.b16 %v3347, %v3346
  %v3371 = vpack.c.b16 %v3349, %v3348
  %v3372 = vpack.c.b16 %v3351, %v3350
  %v3373 = vpack.c.b16 %v3353, %v3352
  %v3374 = vpack.c.b16 %v3355, %v3354
  %v3375 = vpack.c.b16 %v3357, %v3356
  %v3376 = vpack.c.b16 %v3359, %v3358
  %v3377 = vpack.c.b16 %v3361, %v3360
  %v3394 = vadd.bf16 %v2850, %v3362
  %v3395 = vadd.bf16 %v2851, %v3362
  %v3396 = vadd.bf16 %v2852, %v3363
  %v3397 = vadd.bf16 %v2853, %v3363
  %v3398 = vadd.bf16 %v2854, %v3364
  %v3399 = vadd.bf16 %v2855, %v3364
  %v3400 = vadd.bf16 %v2856, %v3365
  %v3401 = vadd.bf16 %v2857, %v3365
  %v3402 = vadd.bf16 %v2858, %v3366
  %v3403 = vadd.bf16 %v2859, %v3366
  %v3404 = vadd.bf16 %v2860, %v3367
  %v3405 = vadd.bf16 %v2861, %v3367
  %v3406 = vadd.bf16 %v2862, %v3368
  %v3407 = vadd.bf16 %v2863, %v3368
  %v3408 = vadd.bf16 %v2864, %v3369
  %v3409 = vadd.bf16 %v2865, %v3369
  %v3410 = vadd.bf16 %v2866, %v3370
  %v3411 = vadd.bf16 %v2867, %v3370
  %v3412 = vadd.bf16 %v2868, %v3371
  %v3413 = vadd.bf16 %v2869, %v3371
  %v3414 = vadd.bf16 %v2870, %v3372
  %v3415 = vadd.bf16 %v2871, %v3372
  %v3416 = vadd.bf16 %v2872, %v3373
  %v3417 = vadd.bf16 %v2873, %v3373
  %v3418 = vadd.bf16 %v2874, %v3374
  %v3419 = vadd.bf16 %v2875, %v3374
  %v3420 = vadd.bf16 %v2876, %v3375
  %v3421 = vadd.bf16 %v2877, %v3375
  %v3422 = vadd.bf16 %v2878, %v3376
  %v3423 = vadd.bf16 %v2879, %v3376
  %v3424 = vadd.bf16 %v2880, %v3377
  %v3425 = vadd.bf16 %v2881, %v3377
  %v3426 = vmax.bf16 %v3394, 0
  %v3427 = vmax.bf16 %v3395, 0
  %v3428 = vmax.bf16 %v3396, 0
  %v3429 = vmax.bf16 %v3397, 0
  %v3430 = vmax.bf16 %v3398, 0
  %v3431 = vmax.bf16 %v3399, 0
  %v3432 = vmax.bf16 %v3400, 0
  %v3433 = vmax.bf16 %v3401, 0
  %v3434 = vmax.bf16 %v3402, 0
  %v3435 = vmax.bf16 %v3403, 0
  %v3436 = vmax.bf16 %v3404, 0
  %v3437 = vmax.bf16 %v3405, 0
  %v3438 = vmax.bf16 %v3406, 0
  %v3439 = vmax.bf16 %v3407, 0
  %v3440 = vmax.bf16 %v3408, 0
  %v3441 = vmax.bf16 %v3409, 0
  %v3442 = vmax.bf16 %v3410, 0
  %v3443 = vmax.bf16 %v3411, 0
  %v3444 = vmax.bf16 %v3412, 0
  %v3445 = vmax.bf16 %v3413, 0
  %v3446 = vmax.bf16 %v3414, 0
  %v3447 = vmax.bf16 %v3415, 0
  %v3448 = vmax.bf16 %v3416, 0
  %v3449 = vmax.bf16 %v3417, 0
  %v3450 = vmax.bf16 %v3418, 0
  %v3451 = vmax.bf16 %v3419, 0
  %v3452 = vmax.bf16 %v3420, 0
  %v3453 = vmax.bf16 %v3421, 0
  %v3454 = vmax.bf16 %v3422, 0
  %v3455 = vmax.bf16 %v3423, 0
  %v3456 = vmax.bf16 %v3424, 0
  %v3457 = vmax.bf16 %v3425, 0
  %3458 = vmatprep.subr.bf16.mxu0 %v3441
  %3459 = vmatpush1.bf16.msra.mxu0 %v3440
  %3460 = vmatprep.subr.bf16.mxu0 %v3439
  %3461 = vmatpush1.bf16.msra.mxu0 %v3438
  %3462 = vmatprep.subr.bf16.mxu0 %v3437
  %3463 = vmatpush1.bf16.msra.mxu0 %v3436
  %3464 = vmatprep.subr.bf16.mxu0 %v3435
  %3465 = vmatpush1.bf16.msra.mxu0 %v3434
  %3466 = vmatprep.subr.bf16.mxu0 %v3433
  %3467 = vmatpush1.bf16.msra.mxu0 %v3432
  %3468 = vmatprep.subr.bf16.mxu0 %v3431
  %3469 = vmatpush1.bf16.msra.mxu0 %v3430
  %3470 = vmatprep.subr.bf16.mxu0 %v3429
  %3471 = vmatpush1.bf16.msra.mxu0 %v3428
  %3472 = vmatprep.subr.bf16.mxu0 %v3427
  %3473 = vmatpush1.bf16.msra.mxu0 %v3426
  %3474 = vmatprep.subr.bf16.mxu0 %v3457
  %3475 = vmatpush2.bf16.msra.mxu0 %v3456
  %3476 = vmatprep.subr.bf16.mxu0 %v3455
  %3477 = vmatpush2.bf16.msra.mxu0 %v3454
  %3478 = vmatprep.subr.bf16.mxu0 %v3453
  %3479 = vmatpush2.bf16.msra.mxu0 %v3452
  %3480 = vmatprep.subr.bf16.mxu0 %v3451
  %3481 = vmatpush2.bf16.msra.mxu0 %v3450
  %3482 = vmatprep.subr.bf16.mxu0 %v3449
  %3483 = vmatpush2.bf16.msra.mxu0 %v3448
  %3484 = vmatprep.subr.bf16.mxu0 %v3447
  %3485 = vmatpush2.bf16.msra.mxu0 %v3446
  %3486 = vmatprep.subr.bf16.mxu0 %v3445
  %3487 = vmatpush2.bf16.msra.mxu0 %v3444
  %3488 = vmatprep.subr.bf16.mxu0 %v3443
  %3489 = vmatpush2.bf16.msra.mxu0 %v3442
  %3490 = vmatprep.mubr.bf16.mxu0 %v1313
  %3491 = vmatmul.mubr.bf16.gmra.mxu0 %v1312
  %v3492 = vpop.f32.mrf.mxu0
  %v3493 = vadd.f32 0.0, %v3492
  %v3494 = vpop.f32.mrf.mxu0
  %v3495 = vadd.f32 0.0, %v3494
  %v3496 = vpop.f32.mrf.mxu0
  %v3497 = vadd.f32 0.0, %v3496
  %v3498 = vpop.f32.mrf.mxu0
  %v3499 = vadd.f32 0.0, %v3498
  %3500 = vmatprep.mubr.bf16.mxu0 %v1315
  %3501 = vmatmul.mubr.bf16.gmra.mxu0 %v1314
  %v3502 = vpop.f32.mrf.mxu0
  %v3503 = vadd.f32 0.0, %v3502
  %v3504 = vpop.f32.mrf.mxu0
  %v3505 = vadd.f32 0.0, %v3504
  %v3506 = vpop.f32.mrf.mxu0
  %v3507 = vadd.f32 0.0, %v3506
  %v3508 = vpop.f32.mrf.mxu0
  %v3509 = vadd.f32 0.0, %v3508
  %3510 = vmatprep.mubr.bf16.mxu0 %v1317
  %3511 = vmatmul.mubr.bf16.gmra.mxu0 %v1316
  %v3512 = vpop.f32.mrf.mxu0
  %v3513 = vadd.f32 0.0, %v3512
  %v3514 = vpop.f32.mrf.mxu0
  %v3515 = vadd.f32 0.0, %v3514
  %v3516 = vpop.f32.mrf.mxu0
  %v3517 = vadd.f32 0.0, %v3516
  %v3518 = vpop.f32.mrf.mxu0
  %v3519 = vadd.f32 0.0, %v3518
  %3520 = vmatprep.mubr.bf16.mxu0 %v1319
  %3521 = vmatmul.mubr.bf16.gmra.mxu0 %v1318
  %v3522 = vpop.f32.mrf.mxu0
  %v3523 = vadd.f32 0.0, %v3522
  %v3524 = vpop.f32.mrf.mxu0
  %v3525 = vadd.f32 0.0, %v3524
  %v3526 = vpop.f32.mrf.mxu0
  %v3527 = vadd.f32 0.0, %v3526
  %v3528 = vpop.f32.mrf.mxu0
  %v3529 = vadd.f32 0.0, %v3528
  %3530 = vmatprep.mubr.bf16.mxu0 %v1321
  %3531 = vmatmul.mubr.bf16.gmra.mxu0 %v1320
  %v3532 = vpop.f32.mrf.mxu0
  %v3533 = vadd.f32 0.0, %v3532
  %v3534 = vpop.f32.mrf.mxu0
  %v3535 = vadd.f32 0.0, %v3534
  %v3536 = vpop.f32.mrf.mxu0
  %v3537 = vadd.f32 0.0, %v3536
  %v3538 = vpop.f32.mrf.mxu0
  %v3539 = vadd.f32 0.0, %v3538
  %3540 = vmatprep.mubr.bf16.mxu0 %v1323
  %3541 = vmatmul.mubr.bf16.gmra.mxu0 %v1322
  %v3542 = vpop.f32.mrf.mxu0
  %v3543 = vadd.f32 0.0, %v3542
  %v3544 = vpop.f32.mrf.mxu0
  %v3545 = vadd.f32 0.0, %v3544
  %v3546 = vpop.f32.mrf.mxu0
  %v3547 = vadd.f32 0.0, %v3546
  %v3548 = vpop.f32.mrf.mxu0
  %v3549 = vadd.f32 0.0, %v3548
  %3550 = vmatprep.mubr.bf16.mxu0 %v1325
  %3551 = vmatmul.mubr.bf16.gmra.mxu0 %v1324
  %v3552 = vpop.f32.mrf.mxu0
  %v3553 = vadd.f32 0.0, %v3552
  %v3554 = vpop.f32.mrf.mxu0
  %v3555 = vadd.f32 0.0, %v3554
  %v3556 = vpop.f32.mrf.mxu0
  %v3557 = vadd.f32 0.0, %v3556
  %v3558 = vpop.f32.mrf.mxu0
  %v3559 = vadd.f32 0.0, %v3558
  %3560 = vmatprep.mubr.bf16.mxu0 %v1327
  %3561 = vmatmul.mubr.bf16.gmra.mxu0 %v1326
  %v3562 = vpop.f32.mrf.mxu0
  %v3563 = vadd.f32 0.0, %v3562
  %v3564 = vpop.f32.mrf.mxu0
  %v3565 = vadd.f32 0.0, %v3564
  %v3566 = vpop.f32.mrf.mxu0
  %v3567 = vadd.f32 0.0, %v3566
  %v3568 = vpop.f32.mrf.mxu0
  %v3569 = vadd.f32 0.0, %v3568
  %3570 = vmatprep.mubr.bf16.mxu0 %v1329
  %3571 = vmatmul.mubr.bf16.gmra.mxu0 %v1328
  %v3572 = vpop.f32.mrf.mxu0
  %v3573 = vadd.f32 0.0, %v3572
  %v3574 = vpop.f32.mrf.mxu0
  %v3575 = vadd.f32 0.0, %v3574
  %v3576 = vpop.f32.mrf.mxu0
  %v3577 = vadd.f32 0.0, %v3576
  %v3578 = vpop.f32.mrf.mxu0
  %v3579 = vadd.f32 0.0, %v3578
  %3580 = vmatprep.mubr.bf16.mxu0 %v1331
  %3581 = vmatmul.mubr.bf16.gmra.mxu0 %v1330
  %v3582 = vpop.f32.mrf.mxu0
  %v3583 = vadd.f32 0.0, %v3582
  %v3584 = vpop.f32.mrf.mxu0
  %v3585 = vadd.f32 0.0, %v3584
  %v3586 = vpop.f32.mrf.mxu0
  %v3587 = vadd.f32 0.0, %v3586
  %v3588 = vpop.f32.mrf.mxu0
  %v3589 = vadd.f32 0.0, %v3588
  %3590 = vmatprep.mubr.bf16.mxu0 %v1333
  %3591 = vmatmul.mubr.bf16.gmra.mxu0 %v1332
  %v3592 = vpop.f32.mrf.mxu0
  %v3593 = vadd.f32 0.0, %v3592
  %v3594 = vpop.f32.mrf.mxu0
  %v3595 = vadd.f32 0.0, %v3594
  %v3596 = vpop.f32.mrf.mxu0
  %v3597 = vadd.f32 0.0, %v3596
  %v3598 = vpop.f32.mrf.mxu0
  %v3599 = vadd.f32 0.0, %v3598
  %3600 = vmatprep.mubr.bf16.mxu0 %v1335
  %3601 = vmatmul.mubr.bf16.gmra.mxu0 %v1334
  %v3602 = vpop.f32.mrf.mxu0
  %v3603 = vadd.f32 0.0, %v3602
  %v3604 = vpop.f32.mrf.mxu0
  %v3605 = vadd.f32 0.0, %v3604
  %v3606 = vpop.f32.mrf.mxu0
  %v3607 = vadd.f32 0.0, %v3606
  %v3608 = vpop.f32.mrf.mxu0
  %v3609 = vadd.f32 0.0, %v3608
  %3610 = vmatprep.mubr.bf16.mxu0 %v1337
  %3611 = vmatmul.mubr.bf16.gmra.mxu0 %v1336
  %v3612 = vpop.f32.mrf.mxu0
  %v3613 = vadd.f32 0.0, %v3612
  %v3614 = vpop.f32.mrf.mxu0
  %v3615 = vadd.f32 0.0, %v3614
  %v3616 = vpop.f32.mrf.mxu0
  %v3617 = vadd.f32 0.0, %v3616
  %v3618 = vpop.f32.mrf.mxu0
  %v3619 = vadd.f32 0.0, %v3618
  %3620 = vmatprep.mubr.bf16.mxu0 %v1339
  %3621 = vmatmul.mubr.bf16.gmra.mxu0 %v1338
  %v3622 = vpop.f32.mrf.mxu0
  %v3623 = vadd.f32 0.0, %v3622
  %v3624 = vpop.f32.mrf.mxu0
  %v3625 = vadd.f32 0.0, %v3624
  %v3626 = vpop.f32.mrf.mxu0
  %v3627 = vadd.f32 0.0, %v3626
  %v3628 = vpop.f32.mrf.mxu0
  %v3629 = vadd.f32 0.0, %v3628
  %3630 = vmatprep.mubr.bf16.mxu0 %v1341
  %3631 = vmatmul.mubr.bf16.gmra.mxu0 %v1340
  %v3632 = vpop.f32.mrf.mxu0
  %v3633 = vadd.f32 0.0, %v3632
  %v3634 = vpop.f32.mrf.mxu0
  %v3635 = vadd.f32 0.0, %v3634
  %v3636 = vpop.f32.mrf.mxu0
  %v3637 = vadd.f32 0.0, %v3636
  %v3638 = vpop.f32.mrf.mxu0
  %v3639 = vadd.f32 0.0, %v3638
  %3640 = vmatprep.mubr.bf16.mxu0 %v1343
  %3641 = vmatmul.mubr.bf16.gmra.mxu0 %v1342
  %v3642 = vpop.f32.mrf.mxu0
  %v3643 = vadd.f32 0.0, %v3642
  %v3644 = vpop.f32.mrf.mxu0
  %v3645 = vadd.f32 0.0, %v3644
  %v3646 = vpop.f32.mrf.mxu0
  %v3647 = vadd.f32 0.0, %v3646
  %v3648 = vpop.f32.mrf.mxu0
  %v3649 = vadd.f32 0.0, %v3648
  %3650 = vdwg.mxu0
  %v3651 = vpack.c.bf16 %v3497, %v3493
  %v3652 = vpack.c.bf16 %v3499, %v3495
  %v3653 = vpack.c.bf16 %v3507, %v3503
  %v3654 = vpack.c.bf16 %v3509, %v3505
  %v3655 = vpack.c.bf16 %v3517, %v3513
  %v3656 = vpack.c.bf16 %v3519, %v3515
  %v3657 = vpack.c.bf16 %v3527, %v3523
  %v3658 = vpack.c.bf16 %v3529, %v3525
  %v3659 = vpack.c.bf16 %v3537, %v3533
  %v3660 = vpack.c.bf16 %v3539, %v3535
  %v3661 = vpack.c.bf16 %v3547, %v3543
  %v3662 = vpack.c.bf16 %v3549, %v3545
  %v3663 = vpack.c.bf16 %v3557, %v3553
  %v3664 = vpack.c.bf16 %v3559, %v3555
  %v3665 = vpack.c.bf16 %v3567, %v3563
  %v3666 = vpack.c.bf16 %v3569, %v3565
  %v3667 = vpack.c.bf16 %v3577, %v3573
  %v3668 = vpack.c.bf16 %v3579, %v3575
  %v3669 = vpack.c.bf16 %v3587, %v3583
  %v3670 = vpack.c.bf16 %v3589, %v3585
  %v3671 = vpack.c.bf16 %v3597, %v3593
  %v3672 = vpack.c.bf16 %v3599, %v3595
  %v3673 = vpack.c.bf16 %v3607, %v3603
  %v3674 = vpack.c.bf16 %v3609, %v3605
  %v3675 = vpack.c.bf16 %v3617, %v3613
  %v3676 = vpack.c.bf16 %v3619, %v3615
  %v3677 = vpack.c.bf16 %v3627, %v3623
  %v3678 = vpack.c.bf16 %v3629, %v3625
  %v3679 = vpack.c.bf16 %v3637, %v3633
  %v3680 = vpack.c.bf16 %v3639, %v3635
  %v3681 = vpack.c.bf16 %v3647, %v3643
  %v3682 = vpack.c.bf16 %v3649, %v3645
  %v3683 = vld [vmem:[%s4] sm:$0xf]
  %v3684 = vld [vmem:[%s4 + $0x4] sm:$0xf]
  %v3685 = vld [vmem:[%s4 + $0x8] sm:$0xf]
  %v3686 = vld [vmem:[%s4 + $0xc] sm:$0xf]
  %v3687 = vld [vmem:[%s4 + $0x10] sm:$0xf]
  %v3688 = vld [vmem:[%s4 + $0x14] sm:$0xf]
  %v3689 = vld [vmem:[%s4 + $0x18] sm:$0xf]
  %v3690 = vld [vmem:[%s4 + $0x1c] sm:$0xf]
  %v3691 = vld [vmem:[%s4 + $0x20] sm:$0xf]
  %v3692 = vld [vmem:[%s4 + $0x24] sm:$0xf]
  %v3693 = vld [vmem:[%s4 + $0x28] sm:$0xf]
  %v3694 = vld [vmem:[%s4 + $0x2c] sm:$0xf]
  %v3695 = vld [vmem:[%s4 + $0x30] sm:$0xf]
  %v3696 = vld [vmem:[%s4 + $0x34] sm:$0xf]
  %v3697 = vld [vmem:[%s4 + $0x38] sm:$0xf]
  %v3698 = vld [vmem:[%s4 + $0x3c] sm:$0xf]
  %v3699 = vld [vmem:[%s4 + $0x40] sm:$0xf]
  %v3700 = vld [vmem:[%s4 + $0x44] sm:$0xf]
  %v3701 = vld [vmem:[%s4 + $0x48] sm:$0xf]
  %v3702 = vld [vmem:[%s4 + $0x4c] sm:$0xf]
  %v3703 = vld [vmem:[%s4 + $0x50] sm:$0xf]
  %v3704 = vld [vmem:[%s4 + $0x54] sm:$0xf]
  %v3705 = vld [vmem:[%s4 + $0x58] sm:$0xf]
  %v3706 = vld [vmem:[%s4 + $0x5c] sm:$0xf]
  %v3707 = vld [vmem:[%s4 + $0x60] sm:$0xf]
  %v3708 = vld [vmem:[%s4 + $0x64] sm:$0xf]
  %v3709 = vld [vmem:[%s4 + $0x68] sm:$0xf]
  %v3710 = vld [vmem:[%s4 + $0x6c] sm:$0xf]
  %v3711 = vld [vmem:[%s4 + $0x70] sm:$0xf]
  %v3712 = vld [vmem:[%s4 + $0x74] sm:$0xf]
  %v3713 = vld [vmem:[%s4 + $0x78] sm:$0xf]
  %v3714 = vld [vmem:[%s4 + $0x7c] sm:$0xf]
  %3716 = vset.pattern.permute.xlu0 0
  %3717 = vperm.xlu0 %3716, %v3683
  %v3718 = vpop.permute.xlu0 %3717
  %v3721 = vunpack.c.l.s4 839922192
  %v3722 = vunpack.c.0.s8 %v3721
  %v3723 = vlaneseq
  %v3724 = vshrl.u32 %v3723, 7
  %v3725 = vsub.s32 %v3722, %v3724
  %v3726 = vrot.slane %v3718, %v3725
  %3728 = vset.pattern.permute.xlu0 0
  %3729 = vperm.xlu0 %3728, %v3684
  %v3730 = vpop.permute.xlu0 %3729
  %v3733 = vunpack.c.l.s4 839922192
  %v3734 = vunpack.c.0.s8 %v3733
  %v3735 = vlaneseq
  %v3736 = vshrl.u32 %v3735, 7
  %v3737 = vsub.s32 %v3734, %v3736
  %v3738 = vrot.slane %v3730, %v3737
  %3740 = vset.pattern.permute.xlu0 0
  %3741 = vperm.xlu0 %3740, %v3685
  %v3742 = vpop.permute.xlu0 %3741
  %v3745 = vunpack.c.l.s4 839922192
  %v3746 = vunpack.c.0.s8 %v3745
  %v3747 = vlaneseq
  %v3748 = vshrl.u32 %v3747, 7
  %v3749 = vsub.s32 %v3746, %v3748
  %v3750 = vrot.slane %v3742, %v3749
  %3752 = vset.pattern.permute.xlu0 0
  %3753 = vperm.xlu0 %3752, %v3686
  %v3754 = vpop.permute.xlu0 %3753
  %v3757 = vunpack.c.l.s4 839922192
  %v3758 = vunpack.c.0.s8 %v3757
  %v3759 = vlaneseq
  %v3760 = vshrl.u32 %v3759, 7
  %v3761 = vsub.s32 %v3758, %v3760
  %v3762 = vrot.slane %v3754, %v3761
  %3764 = vset.pattern.permute.xlu0 0
  %3765 = vperm.xlu0 %3764, %v3687
  %v3766 = vpop.permute.xlu0 %3765
  %v3769 = vunpack.c.l.s4 839922192
  %v3770 = vunpack.c.0.s8 %v3769
  %v3771 = vlaneseq
  %v3772 = vshrl.u32 %v3771, 7
  %v3773 = vsub.s32 %v3770, %v3772
  %v3774 = vrot.slane %v3766, %v3773
  %3776 = vset.pattern.permute.xlu0 0
  %3777 = vperm.xlu0 %3776, %v3688
  %v3778 = vpop.permute.xlu0 %3777
  %v3781 = vunpack.c.l.s4 839922192
  %v3782 = vunpack.c.0.s8 %v3781
  %v3783 = vlaneseq
  %v3784 = vshrl.u32 %v3783, 7
  %v3785 = vsub.s32 %v3782, %v3784
  %v3786 = vrot.slane %v3778, %v3785
  %3788 = vset.pattern.permute.xlu0 0
  %3789 = vperm.xlu0 %3788, %v3689
  %v3790 = vpop.permute.xlu0 %3789
  %v3793 = vunpack.c.l.s4 839922192
  %v3794 = vunpack.c.0.s8 %v3793
  %v3795 = vlaneseq
  %v3796 = vshrl.u32 %v3795, 7
  %v3797 = vsub.s32 %v3794, %v3796
  %v3798 = vrot.slane %v3790, %v3797
  %3800 = vset.pattern.permute.xlu0 0
  %3801 = vperm.xlu0 %3800, %v3690
  %v3802 = vpop.permute.xlu0 %3801
  %v3805 = vunpack.c.l.s4 839922192
  %v3806 = vunpack.c.0.s8 %v3805
  %v3807 = vlaneseq
  %v3808 = vshrl.u32 %v3807, 7
  %v3809 = vsub.s32 %v3806, %v3808
  %v3810 = vrot.slane %v3802, %v3809
  %3812 = vset.pattern.permute.xlu0 0
  %3813 = vperm.xlu0 %3812, %v3691
  %v3814 = vpop.permute.xlu0 %3813
  %v3817 = vunpack.c.l.s4 839922192
  %v3818 = vunpack.c.0.s8 %v3817
  %v3819 = vlaneseq
  %v3820 = vshrl.u32 %v3819, 7
  %v3821 = vsub.s32 %v3818, %v3820
  %v3822 = vrot.slane %v3814, %v3821
  %3824 = vset.pattern.permute.xlu0 0
  %3825 = vperm.xlu0 %3824, %v3692
  %v3826 = vpop.permute.xlu0 %3825
  %v3829 = vunpack.c.l.s4 839922192
  %v3830 = vunpack.c.0.s8 %v3829
  %v3831 = vlaneseq
  %v3832 = vshrl.u32 %v3831, 7
  %v3833 = vsub.s32 %v3830, %v3832
  %v3834 = vrot.slane %v3826, %v3833
  %3836 = vset.pattern.permute.xlu0 0
  %3837 = vperm.xlu0 %3836, %v3693
  %v3838 = vpop.permute.xlu0 %3837
  %v3841 = vunpack.c.l.s4 839922192
  %v3842 = vunpack.c.0.s8 %v3841
  %v3843 = vlaneseq
  %v3844 = vshrl.u32 %v3843, 7
  %v3845 = vsub.s32 %v3842, %v3844
  %v3846 = vrot.slane %v3838, %v3845
  %3848 = vset.pattern.permute.xlu0 0
  %3849 = vperm.xlu0 %3848, %v3694
  %v3850 = vpop.permute.xlu0 %3849
  %v3853 = vunpack.c.l.s4 839922192
  %v3854 = vunpack.c.0.s8 %v3853
  %v3855 = vlaneseq
  %v3856 = vshrl.u32 %v3855, 7
  %v3857 = vsub.s32 %v3854, %v3856
  %v3858 = vrot.slane %v3850, %v3857
  %3860 = vset.pattern.permute.xlu0 0
  %3861 = vperm.xlu0 %3860, %v3695
  %v3862 = vpop.permute.xlu0 %3861
  %v3865 = vunpack.c.l.s4 839922192
  %v3866 = vunpack.c.0.s8 %v3865
  %v3867 = vlaneseq
  %v3868 = vshrl.u32 %v3867, 7
  %v3869 = vsub.s32 %v3866, %v3868
  %v3870 = vrot.slane %v3862, %v3869
  %3872 = vset.pattern.permute.xlu0 0
  %3873 = vperm.xlu0 %3872, %v3696
  %v3874 = vpop.permute.xlu0 %3873
  %v3877 = vunpack.c.l.s4 839922192
  %v3878 = vunpack.c.0.s8 %v3877
  %v3879 = vlaneseq
  %v3880 = vshrl.u32 %v3879, 7
  %v3881 = vsub.s32 %v3878, %v3880
  %v3882 = vrot.slane %v3874, %v3881
  %3884 = vset.pattern.permute.xlu0 0
  %3885 = vperm.xlu0 %3884, %v3697
  %v3886 = vpop.permute.xlu0 %3885
  %v3889 = vunpack.c.l.s4 839922192
  %v3890 = vunpack.c.0.s8 %v3889
  %v3891 = vlaneseq
  %v3892 = vshrl.u32 %v3891, 7
  %v3893 = vsub.s32 %v3890, %v3892
  %v3894 = vrot.slane %v3886, %v3893
  %3896 = vset.pattern.permute.xlu0 0
  %3897 = vperm.xlu0 %3896, %v3698
  %v3898 = vpop.permute.xlu0 %3897
  %v3901 = vunpack.c.l.s4 839922192
  %v3902 = vunpack.c.0.s8 %v3901
  %v3903 = vlaneseq
  %v3904 = vshrl.u32 %v3903, 7
  %v3905 = vsub.s32 %v3902, %v3904
  %v3906 = vrot.slane %v3898, %v3905
  %3908 = vset.pattern.permute.xlu0 0
  %3909 = vperm.xlu0 %3908, %v3699
  %v3910 = vpop.permute.xlu0 %3909
  %v3913 = vunpack.c.l.s4 839922192
  %v3914 = vunpack.c.0.s8 %v3913
  %v3915 = vlaneseq
  %v3916 = vshrl.u32 %v3915, 7
  %v3917 = vsub.s32 %v3914, %v3916
  %v3918 = vrot.slane %v3910, %v3917
  %3920 = vset.pattern.permute.xlu0 0
  %3921 = vperm.xlu0 %3920, %v3700
  %v3922 = vpop.permute.xlu0 %3921
  %v3925 = vunpack.c.l.s4 839922192
  %v3926 = vunpack.c.0.s8 %v3925
  %v3927 = vlaneseq
  %v3928 = vshrl.u32 %v3927, 7
  %v3929 = vsub.s32 %v3926, %v3928
  %v3930 = vrot.slane %v3922, %v3929
  %3932 = vset.pattern.permute.xlu0 0
  %3933 = vperm.xlu0 %3932, %v3701
  %v3934 = vpop.permute.xlu0 %3933
  %v3937 = vunpack.c.l.s4 839922192
  %v3938 = vunpack.c.0.s8 %v3937
  %v3939 = vlaneseq
  %v3940 = vshrl.u32 %v3939, 7
  %v3941 = vsub.s32 %v3938, %v3940
  %v3942 = vrot.slane %v3934, %v3941
  %3944 = vset.pattern.permute.xlu0 0
  %3945 = vperm.xlu0 %3944, %v3702
  %v3946 = vpop.permute.xlu0 %3945
  %v3949 = vunpack.c.l.s4 839922192
  %v3950 = vunpack.c.0.s8 %v3949
  %v3951 = vlaneseq
  %v3952 = vshrl.u32 %v3951, 7
  %v3953 = vsub.s32 %v3950, %v3952
  %v3954 = vrot.slane %v3946, %v3953
  %3956 = vset.pattern.permute.xlu0 0
  %3957 = vperm.xlu0 %3956, %v3703
  %v3958 = vpop.permute.xlu0 %3957
  %v3961 = vunpack.c.l.s4 839922192
  %v3962 = vunpack.c.0.s8 %v3961
  %v3963 = vlaneseq
  %v3964 = vshrl.u32 %v3963, 7
  %v3965 = vsub.s32 %v3962, %v3964
  %v3966 = vrot.slane %v3958, %v3965
  %3968 = vset.pattern.permute.xlu0 0
  %3969 = vperm.xlu0 %3968, %v3704
  %v3970 = vpop.permute.xlu0 %3969
  %v3973 = vunpack.c.l.s4 839922192
  %v3974 = vunpack.c.0.s8 %v3973
  %v3975 = vlaneseq
  %v3976 = vshrl.u32 %v3975, 7
  %v3977 = vsub.s32 %v3974, %v3976
  %v3978 = vrot.slane %v3970, %v3977
  %3980 = vset.pattern.permute.xlu0 0
  %3981 = vperm.xlu0 %3980, %v3705
  %v3982 = vpop.permute.xlu0 %3981
  %v3985 = vunpack.c.l.s4 839922192
  %v3986 = vunpack.c.0.s8 %v3985
  %v3987 = vlaneseq
  %v3988 = vshrl.u32 %v3987, 7
  %v3989 = vsub.s32 %v3986, %v3988
  %v3990 = vrot.slane %v3982, %v3989
  %3992 = vset.pattern.permute.xlu0 0
  %3993 = vperm.xlu0 %3992, %v3706
  %v3994 = vpop.permute.xlu0 %3993
  %v3997 = vunpack.c.l.s4 839922192
  %v3998 = vunpack.c.0.s8 %v3997
  %v3999 = vlaneseq
  %v4000 = vshrl.u32 %v3999, 7
  %v4001 = vsub.s32 %v3998, %v4000
  %v4002 = vrot.slane %v3994, %v4001
  %4004 = vset.pattern.permute.xlu0 0
  %4005 = vperm.xlu0 %4004, %v3707
  %v4006 = vpop.permute.xlu0 %4005
  %v4009 = vunpack.c.l.s4 839922192
  %v4010 = vunpack.c.0.s8 %v4009
  %v4011 = vlaneseq
  %v4012 = vshrl.u32 %v4011, 7
  %v4013 = vsub.s32 %v4010, %v4012
  %v4014 = vrot.slane %v4006, %v4013
  %4016 = vset.pattern.permute.xlu0 0
  %4017 = vperm.xlu0 %4016, %v3708
  %v4018 = vpop.permute.xlu0 %4017
  %v4021 = vunpack.c.l.s4 839922192
  %v4022 = vunpack.c.0.s8 %v4021
  %v4023 = vlaneseq
  %v4024 = vshrl.u32 %v4023, 7
  %v4025 = vsub.s32 %v4022, %v4024
  %v4026 = vrot.slane %v4018, %v4025
  %4028 = vset.pattern.permute.xlu0 0
  %4029 = vperm.xlu0 %4028, %v3709
  %v4030 = vpop.permute.xlu0 %4029
  %v4033 = vunpack.c.l.s4 839922192
  %v4034 = vunpack.c.0.s8 %v4033
  %v4035 = vlaneseq
  %v4036 = vshrl.u32 %v4035, 7
  %v4037 = vsub.s32 %v4034, %v4036
  %v4038 = vrot.slane %v4030, %v4037
  %4040 = vset.pattern.permute.xlu0 0
  %4041 = vperm.xlu0 %4040, %v3710
  %v4042 = vpop.permute.xlu0 %4041
  %v4045 = vunpack.c.l.s4 839922192
  %v4046 = vunpack.c.0.s8 %v4045
  %v4047 = vlaneseq
  %v4048 = vshrl.u32 %v4047, 7
  %v4049 = vsub.s32 %v4046, %v4048
  %v4050 = vrot.slane %v4042, %v4049
  %4052 = vset.pattern.permute.xlu0 0
  %4053 = vperm.xlu0 %4052, %v3711
  %v4054 = vpop.permute.xlu0 %4053
  %v4057 = vunpack.c.l.s4 839922192
  %v4058 = vunpack.c.0.s8 %v4057
  %v4059 = vlaneseq
  %v4060 = vshrl.u32 %v4059, 7
  %v4061 = vsub.s32 %v4058, %v4060
  %v4062 = vrot.slane %v4054, %v4061
  %4064 = vset.pattern.permute.xlu0 0
  %4065 = vperm.xlu0 %4064, %v3712
  %v4066 = vpop.permute.xlu0 %4065
  %v4069 = vunpack.c.l.s4 839922192
  %v4070 = vunpack.c.0.s8 %v4069
  %v4071 = vlaneseq
  %v4072 = vshrl.u32 %v4071, 7
  %v4073 = vsub.s32 %v4070, %v4072
  %v4074 = vrot.slane %v4066, %v4073
  %4076 = vset.pattern.permute.xlu0 0
  %4077 = vperm.xlu0 %4076, %v3713
  %v4078 = vpop.permute.xlu0 %4077
  %v4081 = vunpack.c.l.s4 839922192
  %v4082 = vunpack.c.0.s8 %v4081
  %v4083 = vlaneseq
  %v4084 = vshrl.u32 %v4083, 7
  %v4085 = vsub.s32 %v4082, %v4084
  %v4086 = vrot.slane %v4078, %v4085
  %4088 = vset.pattern.permute.xlu0 0
  %4089 = vperm.xlu0 %4088, %v3714
  %v4090 = vpop.permute.xlu0 %4089
  %v4093 = vunpack.c.l.s4 839922192
  %v4094 = vunpack.c.0.s8 %v4093
  %v4095 = vlaneseq
  %v4096 = vshrl.u32 %v4095, 7
  %v4097 = vsub.s32 %v4094, %v4096
  %v4098 = vrot.slane %v4090, %v4097
  %v4131 = vunpack.c.l.b16 %v3726
  %v4132 = vunpack.c.l.b16 %v3738
  %v4133 = vunpack.c.l.b16 %v3750
  %v4134 = vunpack.c.l.b16 %v3762
  %v4135 = vunpack.c.l.b16 %v3774
  %v4136 = vunpack.c.l.b16 %v3786
  %v4137 = vunpack.c.l.b16 %v3798
  %v4138 = vunpack.c.l.b16 %v3810
  %v4139 = vunpack.c.l.b16 %v3822
  %v4140 = vunpack.c.l.b16 %v3834
  %v4141 = vunpack.c.l.b16 %v3846
  %v4142 = vunpack.c.l.b16 %v3858
  %v4143 = vunpack.c.l.b16 %v3870
  %v4144 = vunpack.c.l.b16 %v3882
  %v4145 = vunpack.c.l.b16 %v3894
  %v4146 = vunpack.c.l.b16 %v3906
  %v4147 = vunpack.c.l.b16 %v3918
  %v4148 = vunpack.c.l.b16 %v3930
  %v4149 = vunpack.c.l.b16 %v3942
  %v4150 = vunpack.c.l.b16 %v3954
  %v4151 = vunpack.c.l.b16 %v3966
  %v4152 = vunpack.c.l.b16 %v3978
  %v4153 = vunpack.c.l.b16 %v3990
  %v4154 = vunpack.c.l.b16 %v4002
  %v4155 = vunpack.c.l.b16 %v4014
  %v4156 = vunpack.c.l.b16 %v4026
  %v4157 = vunpack.c.l.b16 %v4038
  %v4158 = vunpack.c.l.b16 %v4050
  %v4159 = vunpack.c.l.b16 %v4062
  %v4160 = vunpack.c.l.b16 %v4074
  %v4161 = vunpack.c.l.b16 %v4086
  %v4162 = vunpack.c.l.b16 %v4098
  %v4163 = vpack.c.b16 %v4132, %v4131
  %v4164 = vpack.c.b16 %v4134, %v4133
  %v4165 = vpack.c.b16 %v4136, %v4135
  %v4166 = vpack.c.b16 %v4138, %v4137
  %v4167 = vpack.c.b16 %v4140, %v4139
  %v4168 = vpack.c.b16 %v4142, %v4141
  %v4169 = vpack.c.b16 %v4144, %v4143
  %v4170 = vpack.c.b16 %v4146, %v4145
  %v4171 = vpack.c.b16 %v4148, %v4147
  %v4172 = vpack.c.b16 %v4150, %v4149
  %v4173 = vpack.c.b16 %v4152, %v4151
  %v4174 = vpack.c.b16 %v4154, %v4153
  %v4175 = vpack.c.b16 %v4156, %v4155
  %v4176 = vpack.c.b16 %v4158, %v4157
  %v4177 = vpack.c.b16 %v4160, %v4159
  %v4178 = vpack.c.b16 %v4162, %v4161
  %v4195 = vadd.bf16 %v3651, %v4163
  %v4196 = vadd.bf16 %v3652, %v4163
  %v4197 = vadd.bf16 %v3653, %v4164
  %v4198 = vadd.bf16 %v3654, %v4164
  %v4199 = vadd.bf16 %v3655, %v4165
  %v4200 = vadd.bf16 %v3656, %v4165
  %v4201 = vadd.bf16 %v3657, %v4166
  %v4202 = vadd.bf16 %v3658, %v4166
  %v4203 = vadd.bf16 %v3659, %v4167
  %v4204 = vadd.bf16 %v3660, %v4167
  %v4205 = vadd.bf16 %v3661, %v4168
  %v4206 = vadd.bf16 %v3662, %v4168
  %v4207 = vadd.bf16 %v3663, %v4169
  %v4208 = vadd.bf16 %v3664, %v4169
  %v4209 = vadd.bf16 %v3665, %v4170
  %v4210 = vadd.bf16 %v3666, %v4170
  %v4211 = vadd.bf16 %v3667, %v4171
  %v4212 = vadd.bf16 %v3668, %v4171
  %v4213 = vadd.bf16 %v3669, %v4172
  %v4214 = vadd.bf16 %v3670, %v4172
  %v4215 = vadd.bf16 %v3671, %v4173
  %v4216 = vadd.bf16 %v3672, %v4173
  %v4217 = vadd.bf16 %v3673, %v4174
  %v4218 = vadd.bf16 %v3674, %v4174
  %v4219 = vadd.bf16 %v3675, %v4175
  %v4220 = vadd.bf16 %v3676, %v4175
  %v4221 = vadd.bf16 %v3677, %v4176
  %v4222 = vadd.bf16 %v3678, %v4176
  %v4223 = vadd.bf16 %v3679, %v4177
  %v4224 = vadd.bf16 %v3680, %v4177
  %v4225 = vadd.bf16 %v3681, %v4178
  %v4226 = vadd.bf16 %v3682, %v4178
  %v4227 = vmax.bf16 %v4195, 0
  %v4228 = vmax.bf16 %v4196, 0
  %v4229 = vmax.bf16 %v4197, 0
  %v4230 = vmax.bf16 %v4198, 0
  %v4231 = vmax.bf16 %v4199, 0
  %v4232 = vmax.bf16 %v4200, 0
  %v4233 = vmax.bf16 %v4201, 0
  %v4234 = vmax.bf16 %v4202, 0
  %v4235 = vmax.bf16 %v4203, 0
  %v4236 = vmax.bf16 %v4204, 0
  %v4237 = vmax.bf16 %v4205, 0
  %v4238 = vmax.bf16 %v4206, 0
  %v4239 = vmax.bf16 %v4207, 0
  %v4240 = vmax.bf16 %v4208, 0
  %v4241 = vmax.bf16 %v4209, 0
  %v4242 = vmax.bf16 %v4210, 0
  %v4243 = vmax.bf16 %v4211, 0
  %v4244 = vmax.bf16 %v4212, 0
  %v4245 = vmax.bf16 %v4213, 0
  %v4246 = vmax.bf16 %v4214, 0
  %v4247 = vmax.bf16 %v4215, 0
  %v4248 = vmax.bf16 %v4216, 0
  %v4249 = vmax.bf16 %v4217, 0
  %v4250 = vmax.bf16 %v4218, 0
  %v4251 = vmax.bf16 %v4219, 0
  %v4252 = vmax.bf16 %v4220, 0
  %v4253 = vmax.bf16 %v4221, 0
  %v4254 = vmax.bf16 %v4222, 0
  %v4255 = vmax.bf16 %v4223, 0
  %v4256 = vmax.bf16 %v4224, 0
  %v4257 = vmax.bf16 %v4225, 0
  %v4258 = vmax.bf16 %v4226, 0
  %v4259 = vsub.bf16 0, %v4227
  %v4260 = vsub.bf16 0, %v4228
  %v4261 = vsub.bf16 0, %v4229
  %v4262 = vsub.bf16 0, %v4230
  %v4263 = vsub.bf16 0, %v4231
  %v4264 = vsub.bf16 0, %v4232
  %v4265 = vsub.bf16 0, %v4233
  %v4266 = vsub.bf16 0, %v4234
  %v4267 = vsub.bf16 0, %v4235
  %v4268 = vsub.bf16 0, %v4236
  %v4269 = vsub.bf16 0, %v4237
  %v4270 = vsub.bf16 0, %v4238
  %v4271 = vsub.bf16 0, %v4239
  %v4272 = vsub.bf16 0, %v4240
  %v4273 = vsub.bf16 0, %v4241
  %v4274 = vsub.bf16 0, %v4242
  %v4275 = vsub.bf16 0, %v4243
  %v4276 = vsub.bf16 0, %v4244
  %v4277 = vsub.bf16 0, %v4245
  %v4278 = vsub.bf16 0, %v4246
  %v4279 = vsub.bf16 0, %v4247
  %v4280 = vsub.bf16 0, %v4248
  %v4281 = vsub.bf16 0, %v4249
  %v4282 = vsub.bf16 0, %v4250
  %v4283 = vsub.bf16 0, %v4251
  %v4284 = vsub.bf16 0, %v4252
  %v4285 = vsub.bf16 0, %v4253
  %v4286 = vsub.bf16 0, %v4254
  %v4287 = vsub.bf16 0, %v4255
  %v4288 = vsub.bf16 0, %v4256
  %v4289 = vsub.bf16 0, %v4257
  %v4290 = vsub.bf16 0, %v4258
  %v4292 = vmul.bf16 %v4259, 1069105081
  %v4293 = vpow.bf16.pop %v4292
  %v4295 = vmul.bf16 %v4260, 1069105081
  %v4296 = vpow.bf16.pop %v4295
  %v4298 = vmul.bf16 %v4261, 1069105081
  %v4299 = vpow.bf16.pop %v4298
  %v4301 = vmul.bf16 %v4262, 1069105081
  %v4302 = vpow.bf16.pop %v4301
  %v4304 = vmul.bf16 %v4263, 1069105081
  %v4305 = vpow.bf16.pop %v4304
  %v4307 = vmul.bf16 %v4264, 1069105081
  %v4308 = vpow.bf16.pop %v4307
  %v4310 = vmul.bf16 %v4265, 1069105081
  %v4311 = vpow.bf16.pop %v4310
  %v4313 = vmul.bf16 %v4266, 1069105081
  %v4314 = vpow.bf16.pop %v4313
  %v4316 = vmul.bf16 %v4267, 1069105081
  %v4317 = vpow.bf16.pop %v4316
  %v4319 = vmul.bf16 %v4268, 1069105081
  %v4320 = vpow.bf16.pop %v4319
  %v4322 = vmul.bf16 %v4269, 1069105081
  %v4323 = vpow.bf16.pop %v4322
  %v4325 = vmul.bf16 %v4270, 1069105081
  %v4326 = vpow.bf16.pop %v4325
  %v4328 = vmul.bf16 %v4271, 1069105081
  %v4329 = vpow.bf16.pop %v4328
  %v4331 = vmul.bf16 %v4272, 1069105081
  %v4332 = vpow.bf16.pop %v4331
  %v4334 = vmul.bf16 %v4273, 1069105081
  %v4335 = vpow.bf16.pop %v4334
  %v4337 = vmul.bf16 %v4274, 1069105081
  %v4338 = vpow.bf16.pop %v4337
  %v4340 = vmul.bf16 %v4275, 1069105081
  %v4341 = vpow.bf16.pop %v4340
  %v4343 = vmul.bf16 %v4276, 1069105081
  %v4344 = vpow.bf16.pop %v4343
  %v4346 = vmul.bf16 %v4277, 1069105081
  %v4347 = vpow.bf16.pop %v4346
  %v4349 = vmul.bf16 %v4278, 1069105081
  %v4350 = vpow.bf16.pop %v4349
  %v4352 = vmul.bf16 %v4279, 1069105081
  %v4353 = vpow.bf16.pop %v4352
  %v4355 = vmul.bf16 %v4280, 1069105081
  %v4356 = vpow.bf16.pop %v4355
  %v4358 = vmul.bf16 %v4281, 1069105081
  %v4359 = vpow.bf16.pop %v4358
  %v4361 = vmul.bf16 %v4282, 1069105081
  %v4362 = vpow.bf16.pop %v4361
  %v4364 = vmul.bf16 %v4283, 1069105081
  %v4365 = vpow.bf16.pop %v4364
  %v4367 = vmul.bf16 %v4284, 1069105081
  %v4368 = vpow.bf16.pop %v4367
  %v4370 = vmul.bf16 %v4285, 1069105081
  %v4371 = vpow.bf16.pop %v4370
  %v4373 = vmul.bf16 %v4286, 1069105081
  %v4374 = vpow.bf16.pop %v4373
  %v4376 = vmul.bf16 %v4287, 1069105081
  %v4377 = vpow.bf16.pop %v4376
  %v4379 = vmul.bf16 %v4288, 1069105081
  %v4380 = vpow.bf16.pop %v4379
  %v4382 = vmul.bf16 %v4289, 1069105081
  %v4383 = vpow.bf16.pop %v4382
  %v4385 = vmul.bf16 %v4290, 1069105081
  %v4386 = vpow.bf16.pop %v4385
  %v4387 = vadd.bf16 %v4293, 1065369472
  %v4388 = vadd.bf16 %v4296, 1065369472
  %v4389 = vadd.bf16 %v4299, 1065369472
  %v4390 = vadd.bf16 %v4302, 1065369472
  %v4391 = vadd.bf16 %v4305, 1065369472
  %v4392 = vadd.bf16 %v4308, 1065369472
  %v4393 = vadd.bf16 %v4311, 1065369472
  %v4394 = vadd.bf16 %v4314, 1065369472
  %v4395 = vadd.bf16 %v4317, 1065369472
  %v4396 = vadd.bf16 %v4320, 1065369472
  %v4397 = vadd.bf16 %v4323, 1065369472
  %v4398 = vadd.bf16 %v4326, 1065369472
  %v4399 = vadd.bf16 %v4329, 1065369472
  %v4400 = vadd.bf16 %v4332, 1065369472
  %v4401 = vadd.bf16 %v4335, 1065369472
  %v4402 = vadd.bf16 %v4338, 1065369472
  %v4403 = vadd.bf16 %v4341, 1065369472
  %v4404 = vadd.bf16 %v4344, 1065369472
  %v4405 = vadd.bf16 %v4347, 1065369472
  %v4406 = vadd.bf16 %v4350, 1065369472
  %v4407 = vadd.bf16 %v4353, 1065369472
  %v4408 = vadd.bf16 %v4356, 1065369472
  %v4409 = vadd.bf16 %v4359, 1065369472
  %v4410 = vadd.bf16 %v4362, 1065369472
  %v4411 = vadd.bf16 %v4365, 1065369472
  %v4412 = vadd.bf16 %v4368, 1065369472
  %v4413 = vadd.bf16 %v4371, 1065369472
  %v4414 = vadd.bf16 %v4374, 1065369472
  %v4415 = vadd.bf16 %v4377, 1065369472
  %v4416 = vadd.bf16 %v4380, 1065369472
  %v4417 = vadd.bf16 %v4383, 1065369472
  %v4418 = vadd.bf16 %v4386, 1065369472
  %v4419 = vrcp.bf16.pop %v4387
  %v4420 = vmul.bf16 1065369472, %v4419
  %v4421 = vrcp.bf16.pop %v4388
  %v4422 = vmul.bf16 1065369472, %v4421
  %v4423 = vrcp.bf16.pop %v4389
  %v4424 = vmul.bf16 1065369472, %v4423
  %v4425 = vrcp.bf16.pop %v4390
  %v4426 = vmul.bf16 1065369472, %v4425
  %v4427 = vrcp.bf16.pop %v4391
  %v4428 = vmul.bf16 1065369472, %v4427
  %v4429 = vrcp.bf16.pop %v4392
  %v4430 = vmul.bf16 1065369472, %v4429
  %v4431 = vrcp.bf16.pop %v4393
  %v4432 = vmul.bf16 1065369472, %v4431
  %v4433 = vrcp.bf16.pop %v4394
  %v4434 = vmul.bf16 1065369472, %v4433
  %v4435 = vrcp.bf16.pop %v4395
  %v4436 = vmul.bf16 1065369472, %v4435
  %v4437 = vrcp.bf16.pop %v4396
  %v4438 = vmul.bf16 1065369472, %v4437
  %v4439 = vrcp.bf16.pop %v4397
  %v4440 = vmul.bf16 1065369472, %v4439
  %v4441 = vrcp.bf16.pop %v4398
  %v4442 = vmul.bf16 1065369472, %v4441
  %v4443 = vrcp.bf16.pop %v4399
  %v4444 = vmul.bf16 1065369472, %v4443
  %v4445 = vrcp.bf16.pop %v4400
  %v4446 = vmul.bf16 1065369472, %v4445
  %v4447 = vrcp.bf16.pop %v4401
  %v4448 = vmul.bf16 1065369472, %v4447
  %v4449 = vrcp.bf16.pop %v4402
  %v4450 = vmul.bf16 1065369472, %v4449
  %v4451 = vrcp.bf16.pop %v4403
  %v4452 = vmul.bf16 1065369472, %v4451
  %v4453 = vrcp.bf16.pop %v4404
  %v4454 = vmul.bf16 1065369472, %v4453
  %v4455 = vrcp.bf16.pop %v4405
  %v4456 = vmul.bf16 1065369472, %v4455
  %v4457 = vrcp.bf16.pop %v4406
  %v4458 = vmul.bf16 1065369472, %v4457
  %v4459 = vrcp.bf16.pop %v4407
  %v4460 = vmul.bf16 1065369472, %v4459
  %v4461 = vrcp.bf16.pop %v4408
  %v4462 = vmul.bf16 1065369472, %v4461
  %v4463 = vrcp.bf16.pop %v4409
  %v4464 = vmul.bf16 1065369472, %v4463
  %v4465 = vrcp.bf16.pop %v4410
  %v4466 = vmul.bf16 1065369472, %v4465
  %v4467 = vrcp.bf16.pop %v4411
  %v4468 = vmul.bf16 1065369472, %v4467
  %v4469 = vrcp.bf16.pop %v4412
  %v4470 = vmul.bf16 1065369472, %v4469
  %v4471 = vrcp.bf16.pop %v4413
  %v4472 = vmul.bf16 1065369472, %v4471
  %v4473 = vrcp.bf16.pop %v4414
  %v4474 = vmul.bf16 1065369472, %v4473
  %v4475 = vrcp.bf16.pop %v4415
  %v4476 = vmul.bf16 1065369472, %v4475
  %v4477 = vrcp.bf16.pop %v4416
  %v4478 = vmul.bf16 1065369472, %v4477
  %v4479 = vrcp.bf16.pop %v4417
  %v4480 = vmul.bf16 1065369472, %v4479
  %v4481 = vrcp.bf16.pop %v4418
  %v4482 = vmul.bf16 1065369472, %v4481
  %4483 = vmatprep.subr.bf16.mxu0 %v4450
  %4484 = vmatpush1.bf16.msra.mxu0 %v4448
  %4485 = vmatprep.subr.bf16.mxu0 %v4446
  %4486 = vmatpush1.bf16.msra.mxu0 %v4444
  %4487 = vmatprep.subr.bf16.mxu0 %v4442
  %4488 = vmatpush1.bf16.msra.mxu0 %v4440
  %4489 = vmatprep.subr.bf16.mxu0 %v4438
  %4490 = vmatpush1.bf16.msra.mxu0 %v4436
  %4491 = vmatprep.subr.bf16.mxu0 %v4434
  %4492 = vmatpush1.bf16.msra.mxu0 %v4432
  %4493 = vmatprep.subr.bf16.mxu0 %v4430
  %4494 = vmatpush1.bf16.msra.mxu0 %v4428
  %4495 = vmatprep.subr.bf16.mxu0 %v4426
  %4496 = vmatpush1.bf16.msra.mxu0 %v4424
  %4497 = vmatprep.subr.bf16.mxu0 %v4422
  %4498 = vmatpush1.bf16.msra.mxu0 %v4420
  %4499 = vmatprep.subr.bf16.mxu0 %v4482
  %4500 = vmatpush2.bf16.msra.mxu0 %v4480
  %4501 = vmatprep.subr.bf16.mxu0 %v4478
  %4502 = vmatpush2.bf16.msra.mxu0 %v4476
  %4503 = vmatprep.subr.bf16.mxu0 %v4474
  %4504 = vmatpush2.bf16.msra.mxu0 %v4472
  %4505 = vmatprep.subr.bf16.mxu0 %v4470
  %4506 = vmatpush2.bf16.msra.mxu0 %v4468
  %4507 = vmatprep.subr.bf16.mxu0 %v4466
  %4508 = vmatpush2.bf16.msra.mxu0 %v4464
  %4509 = vmatprep.subr.bf16.mxu0 %v4462
  %4510 = vmatpush2.bf16.msra.mxu0 %v4460
  %4511 = vmatprep.subr.bf16.mxu0 %v4458
  %4512 = vmatpush2.bf16.msra.mxu0 %v4456
  %4513 = vmatprep.subr.bf16.mxu0 %v4454
  %4514 = vmatpush2.bf16.msra.mxu0 %v4452
  %4515 = vmatprep.mubr.bf16.mxu0 %v2405
  %4516 = vmatmul.mubr.bf16.gmra.mxu0 %v2404
  %v4517 = vpop.f32.mrf.mxu0
  %v4518 = vadd.f32 0.0, %v4517
  %v4519 = vpop.f32.mrf.mxu0
  %v4520 = vadd.f32 0.0, %v4519
  %v4521 = vpop.f32.mrf.mxu0
  %v4522 = vpop.f32.mrf.mxu0
  %4523 = vdwg.mxu0
  %v4524 = vld [vmem:[#allocation2] sm:$0x1]
  %4526 = vset.pattern.permute.xlu0 0
  %4527 = vperm.xlu0 %4526, %v4524
  %v4528 = vpop.permute.xlu0 %4527
  %v4530 = vlaneseq
  %v4531 = vshrl.u32 %v4530, 7
  %v4532 = vsub.s32 0, %v4531
  %v4533 = vrot.slane %v4528, %v4532
  %v4534 = vadd.f32 %v4518, %v4533
  %v4535 = vadd.f32 %v4520, %v4533
  %v4536 = vxor.u32 %v4534, 2147483648
  %v4537 = vxor.u32 %v4535, 2147483648
  %v4538 = vmul.f32 %v4536, 1.442695
  %v4539 = vpow.pop %v4538
  %v4540 = vmul.f32 %v4537, 1.442695
  %v4541 = vpow.pop %v4540
  %v4542 = vadd.f32 %v4539, 1.0
  %v4543 = vadd.f32 %v4541, 1.0
  %v4544 = vrcp.pop %v4542
  %v4545 = vmul.f32 1.0, %v4544
  %v4546 = vrcp.pop %v4543
  %v4547 = vmul.f32 1.0, %v4546
  %v4550 = vcombine.low %v4545, %v4547
  %v4552 = vunpack.c.l.s4 1966171168
  %v4553 = vunpack.c.0.s8 %v4552
  %v4554 = vlaneseq
  %v4555 = vshrl.u32 %v4554, 7
  %v4556 = vsub.s32 %v4553, %v4555
  %v4557 = vrot.slane %v4550, %v4556
  %v4559 = vunpack.c.l.s4 1966171168
  %v4560 = vunpack.c.0.s8 %v4559
  %v4561 = vlaneseq
  %v4562 = vshrl.u32 %v4561, 7
  %v4563 = vsub.s32 %v4560, %v4562
  %v4564 = vrot.slane %v4557, %v4563
  %s4566 = scalar_lea.vmem %s7, 2
  %4567 = vst.msk [vmem:[%s4566] sm:$0x3] %vm2494, %v4564
  // Predicated region
  $region30: #{object_finder_forward.1} parent=0 // pred_check
    _
  $region31: #{object_finder_forward.1} parent=0 // pred_check_branch
    %4569 = sbr.rel (0) target = $region33
  $region32: #{object_finder_forward.1} parent=0 // pred_region
    _
  $region33: #{object_finder_forward.1} parent=0 // pred_fallthru
    _
  // Predicated region
  $region34: #{object_finder_forward.1} parent=0 // pred_check
    _
  $region35: #{object_finder_forward.1} parent=0 // pred_check_branch
    %4571 = sbr.rel (0) target = $region37
  $region36: #{object_finder_forward.1} parent=0 // pred_region
    _
  $region37: #{object_finder_forward.1} parent=0 // pred_fallthru
    _

</llo_original>
